<compile_context>
chip_gen: v7x
topology: tpu7x:2x2x1
jax: 0.10.0
libtpu: 0.0.40
codegen_flags: <defaults>
</compile_context>

<pallas_src>
import functools
import math

import jax
import jax.numpy as jnp
from jax.experimental import pallas as pl
from jax.experimental.pallas import tpu as pltpu


# -----------------------------------------------------------------------------
# in-kernel helpers
# -----------------------------------------------------------------------------
def _layer_norm(x, gamma, beta, eps=1e-12):
    mu = jnp.mean(x, axis=-1, keepdims=True)
    var = jnp.mean((x - mu) ** 2, axis=-1, keepdims=True)
    return (x - mu) * jax.lax.rsqrt(var + eps) * gamma + beta


def _gelu(x):
    # TODO(synk): DistilBERT uses erf-GELU; tanh approximation (EUP-friendly)
    # differs by <~1e-3 — acceptable here since weights are synthetic.
    c = math.sqrt(2.0 / math.pi)
    return 0.5 * x * (1.0 + jnp.tanh(c * (x + 0.044715 * x * x * x)))


# vector-slab row layout: all 1-D params packed into one (rows, VEC_W) f32 slab
_ROW_EMB_G, _ROW_EMB_B, _ROW_HEAD_B, _N_GLOBAL_ROWS = 0, 1, 2, 3
_ROWS_PER_LAYER = 8
(_R_BQKV, _R_BO, _R_LN1G, _R_LN1B, _R_B1, _R_B2, _R_LN2G, _R_LN2B) = range(8)


# -----------------------------------------------------------------------------
# single fused kernel: embeddings -> L transformer layers -> CLS -> head
# -----------------------------------------------------------------------------
def backbone_kernel(ids_ref, mask_ref, word_emb_ref, pos_ref, vec_ref,
                    wqkv_ref, wo_ref, w1_ref, w2_ref, headw_ref,
                    o_ref, *, batch, seq, num_layers, num_heads):
    B, S = batch, seq
    V, D = word_emb_ref.shape
    F = w1_ref.shape[-1]
    BS = B * S
    H = num_heads
    hd = D // H
    HB = H * B
    out_dim = o_ref.shape[-1]
    scale = 1.0 / math.sqrt(hd)

    vecs = vec_ref[...]                                     # (rows, 96) — one tiny load

    # ---- embedding: one-hot matmul gather + pre-tiled positional add ----
    ids = ids_ref[...]                                      # (B*S, 1) int32
    iota = jax.lax.broadcasted_iota(jnp.int32, (BS, V), 1)
    onehot = (iota == ids).astype(jnp.float32)              # (B*S, V)
    emb = jnp.dot(onehot, word_emb_ref[...],
                  preferred_element_type=jnp.float32)       # (B*S, D)
    emb = emb + pos_ref[...]                                # pos pre-tiled to (B*S, D)
    x = _layer_norm(emb,
                    vecs[_ROW_EMB_G:_ROW_EMB_G + 1, 0:D],
                    vecs[_ROW_EMB_B:_ROW_EMB_B + 1, 0:D])   # (B*S, D)

    # additive attention mask, computed once in head-major batch layout (H*B, 1, S)
    mask_add = (1.0 - mask_ref[...].astype(jnp.float32)) * jnp.float32(-1e9)  # (B,1,S)
    mask_add = jnp.concatenate([mask_add] * H, axis=0)                        # (H*B,1,S)

    # ---- transformer encoder layers (statically unrolled, weights indexed) ----
    for l in range(num_layers):
        base = _N_GLOBAL_ROWS + l * _ROWS_PER_LAYER
        bqkv = vecs[base + _R_BQKV: base + _R_BQKV + 1, 0:3 * D]
        bo   = vecs[base + _R_BO:   base + _R_BO   + 1, 0:D]
        ln1g = vecs[base + _R_LN1G: base + _R_LN1G + 1, 0:D]
        ln1b = vecs[base + _R_LN1B: base + _R_LN1B + 1, 0:D]
        b1   = vecs[base + _R_B1:   base + _R_B1   + 1, 0:F]
        b2   = vecs[base + _R_B2:   base + _R_B2   + 1, 0:D]
        ln2g = vecs[base + _R_LN2G: base + _R_LN2G + 1, 0:D]
        ln2b = vecs[base + _R_LN2B: base + _R_LN2B + 1, 0:D]

        # fused QKV projection on flattened activations: (B*S, D) @ (D, 3D)
        qkv = jnp.dot(x, wqkv_ref[l],
                      preferred_element_type=jnp.float32) + bqkv        # (BS, 3D)

        # head-major (H*B, S, hd): static lane slices + major-axis concat (no 4-D
        # batched dot_general, no major-axis transpose)
        def to_heads(off):
            cols = [qkv[:, off + h * hd: off + (h + 1) * hd] for h in range(H)]
            return jnp.concatenate(cols, axis=0).reshape(HB, S, hd)

        q = to_heads(0)
        k = to_heads(D)
        v = to_heads(2 * D)

        # one batched attention + single softmax chain per layer
        s = jnp.einsum('bqd,bkd->bqk', q, k,
                       preferred_element_type=jnp.float32) * scale      # (HB,S,S)
        s = s + mask_add
        s = s - jnp.max(s, axis=-1, keepdims=True)   # also guards fully-masked rows
        p = jnp.exp(s)
        p = p * pl.reciprocal(jnp.sum(p, axis=-1, keepdims=True), approx=True)
        ctx_h = jnp.einsum('bqk,bkd->bqd', p, v,
                           preferred_element_type=jnp.float32)           # (HB,S,hd)

        # reassemble (B*S, D): per-head major slice (cheap) + one lane concat
        ctx = jnp.concatenate(
            [ctx_h[h * B:(h + 1) * B].reshape(BS, hd) for h in range(H)], axis=-1)

        attn = jnp.dot(ctx, wo_ref[l],
                       preferred_element_type=jnp.float32) + bo
        x1 = _layer_norm(x + attn, ln1g, ln1b)

        h1 = _gelu(jnp.dot(x1, w1_ref[l],
                           preferred_element_type=jnp.float32) + b1)
        h2 = jnp.dot(h1, w2_ref[l],
                     preferred_element_type=jnp.float32) + b2
        x = _layer_norm(x1 + h2, ln2g, ln2b)

    # ---- head: CLS token -> ReLU -> Dropout(0.5, identity in eval) -> Linear ----
    cls_tok = x.reshape(B, S, D)[:, 0, :]                   # (B, D)
    cls_tok = jnp.maximum(cls_tok, 0.0)
    head_b = vecs[_ROW_HEAD_B:_ROW_HEAD_B + 1, 0:out_dim]
    # TODO(synk): out_dim=3 -> masked vst; pad head_w/out to a 128-lane multiple if it grows.
    o_ref[...] = jnp.dot(cls_tok, headw_ref[...],
                         preferred_element_type=jnp.float32) + head_b


# -----------------------------------------------------------------------------
# wrapper
# -----------------------------------------------------------------------------
def backbone_forward(params, input_ids, attention_mask, *, num_heads, num_layers):
    B, S = input_ids.shape
    out_dim = params['head_w'].shape[1]

    # layout plumbing (not compute hoisting): tile only the S rows of pos we use
    pos_tiled = jnp.tile(params['pos_emb'][:S], (B, 1))          # (B*S, D)

    args = (
        input_ids.astype(jnp.int32).reshape(B * S, 1),           # lane-broadcastable ids
        attention_mask.astype(jnp.int32).reshape(B, 1, S),
        params['word_emb'], pos_tiled, params['vec_slab'],
        params['wqkv'], params['wo'], params['w1'], params['w2'],
        params['head_w'],
    )
    kernel = functools.partial(backbone_kernel, batch=B, seq=S,
                               num_layers=num_layers, num_heads=num_heads)
    vmem = pl.BlockSpec(memory_space=pltpu.MemorySpace.VMEM)
    return pl.pallas_call(
        kernel,
        out_shape=jax.ShapeDtypeStruct((B, out_dim), jnp.float32),
        in_specs=[vmem] * len(args),
        out_specs=vmem,
    )(*args)


# -----------------------------------------------------------------------------
# parameter init (weights pre-packed: fused QKV, stacked per-layer weights,
# all 1-D params in a single (rows, 96) slab)
# -----------------------------------------------------------------------------
def init_params(key, vocab, max_pos, dim, ffn, num_layers, out_dim):
    keys = jax.random.split(key, 3 + num_layers)
    std = 0.02

    vec_w = max(3 * dim, ffn, dim, out_dim)
    n_rows = _N_GLOBAL_ROWS + num_layers * _ROWS_PER_LAYER
    vec_slab = jnp.zeros((n_rows, vec_w), jnp.float32)

    def put(slab, row, vec):
        return slab.at[row, :vec.shape[0]].set(vec)

    vec_slab = put(vec_slab, _ROW_EMB_G, jnp.ones((dim,), jnp.float32))
    vec_slab = put(vec_slab, _ROW_EMB_B, jnp.zeros((dim,), jnp.float32))
    vec_slab = put(vec_slab, _ROW_HEAD_B, jnp.zeros((out_dim,), jnp.float32))

    wqkv, wo, w1, w2 = [], [], [], []
    for l in range(num_layers):
        lk = jax.random.split(keys[3 + l], 6)
        wq = jax.random.normal(lk[0], (dim, dim), jnp.float32) * std
        wk = jax.random.normal(lk[1], (dim, dim), jnp.float32) * std
        wv = jax.random.normal(lk[2], (dim, dim), jnp.float32) * std
        wqkv.append(jnp.concatenate([wq, wk, wv], axis=1))       # (D, 3D) fused
        wo.append(jax.random.normal(lk[3], (dim, dim), jnp.float32) * std)
        w1.append(jax.random.normal(lk[4], (dim, ffn), jnp.float32) * std)
        w2.append(jax.random.normal(lk[5], (ffn, dim), jnp.float32) * std)

        base = _N_GLOBAL_ROWS + l * _ROWS_PER_LAYER
        vec_slab = put(vec_slab, base + _R_BQKV, jnp.zeros((3 * dim,), jnp.float32))
        vec_slab = put(vec_slab, base + _R_BO,   jnp.zeros((dim,), jnp.float32))
        vec_slab = put(vec_slab, base + _R_LN1G, jnp.ones((dim,), jnp.float32))
        vec_slab = put(vec_slab, base + _R_LN1B, jnp.zeros((dim,), jnp.float32))
        vec_slab = put(vec_slab, base + _R_B1,   jnp.zeros((ffn,), jnp.float32))
        vec_slab = put(vec_slab, base + _R_B2,   jnp.zeros((dim,), jnp.float32))
        vec_slab = put(vec_slab, base + _R_LN2G, jnp.ones((dim,), jnp.float32))
        vec_slab = put(vec_slab, base + _R_LN2B, jnp.zeros((dim,), jnp.float32))

    return {
        'word_emb': jax.random.normal(keys[0], (vocab, dim), jnp.float32) * std,
        'pos_emb': jax.random.normal(keys[1], (max_pos, dim), jnp.float32) * std,
        'head_w': jax.random.normal(keys[2], (dim, out_dim), jnp.float32) * std,
        'vec_slab': vec_slab,
        'wqkv': jnp.stack(wqkv), 'wo': jnp.stack(wo),
        'w1': jnp.stack(w1), 'w2': jnp.stack(w2),
    }


if __name__ == "__main__":
    VOCAB, MAX_POS, DIM, FFN = 50, 32, 32, 64
    NUM_LAYERS, NUM_HEADS, OUT_DIM = 2, 4, 3
    B, S = 2, 8

    key = jax.random.PRNGKey(0)
    pkey, ikey = jax.random.split(key)
    params = init_params(pkey, VOCAB, MAX_POS, DIM, FFN, NUM_LAYERS, OUT_DIM)

    input_ids = jax.random.randint(ikey, (B, S), 0, VOCAB, dtype=jnp.int32)
    attention_mask = jnp.array([[1] * S, [1] * (S - 2) + [0, 0]], dtype=jnp.int32)

    out = backbone_forward(params, input_ids, attention_mask,
                           num_heads=NUM_HEADS, num_layers=NUM_LAYERS)
    out = jax.block_until_ready(out)
    assert out.shape == (B, OUT_DIM) and out.dtype == jnp.float32
    print("KERNEL_OK")
</pallas_src>

<mosaic_0001>
module attributes {stable_mosaic.version = 11 : i64} {
  func.func @backbone_kernel(%arg0: memref<16x1xi32, #tpu.memory_space<vmem>>, %arg1: memref<2x1x8xi32, #tpu.memory_space<vmem>>, %arg2: memref<50x32xf32, #tpu.memory_space<vmem>>, %arg3: memref<16x32xf32, #tpu.memory_space<vmem>>, %arg4: memref<19x96xf32, #tpu.memory_space<vmem>>, %arg5: memref<2x32x96xf32, #tpu.memory_space<vmem>>, %arg6: memref<2x32x32xf32, #tpu.memory_space<vmem>>, %arg7: memref<2x32x64xf32, #tpu.memory_space<vmem>>, %arg8: memref<2x64x32xf32, #tpu.memory_space<vmem>>, %arg9: memref<32x3xf32, #tpu.memory_space<vmem>>, %arg10: memref<2x3xf32, #tpu.memory_space<vmem>>) attributes {dimension_semantics = [], scalar_prefetch = 0 : i64, scratch_operands = 0 : i64, tpu.core_type = #tpu.core_type<tc>} {
    %c0 = arith.constant 0 : index
    %c0_0 = arith.constant 0 : index
    %0 = vector.load %arg4[%c0, %c0_0] : memref<19x96xf32, #tpu.memory_space<vmem>>, vector<19x96xf32>
    %c0_1 = arith.constant 0 : index
    %c0_2 = arith.constant 0 : index
    %1 = vector.load %arg0[%c0_1, %c0_2] : memref<16x1xi32, #tpu.memory_space<vmem>>, vector<16x1xi32>
    %2 = tpu.iota {dimensions = array<i32: 1>} : vector<16x50xi32>
    %3 = vector.broadcast %1 : vector<16x1xi32> to vector<16x50xi32>
    %4 = arith.cmpi eq, %2, %3 : vector<16x50xi32>
    %5 = arith.extui %4 : vector<16x50xi1> to vector<16x50xi32>
    %6 = arith.sitofp %5 : vector<16x50xi32> to vector<16x50xf32>
    %c0_3 = arith.constant 0 : index
    %c0_4 = arith.constant 0 : index
    %7 = vector.load %arg2[%c0_3, %c0_4] : memref<50x32xf32, #tpu.memory_space<vmem>>, vector<50x32xf32>
    %cst = arith.constant dense<0.000000e+00> : vector<16x32xf32>
    %8 = tpu.matmul %6, %7, %cst {dimension_numbers = #tpu.dot_dimension_numbers<[1], [0], [0], [1], [0, 0, 1, 1], [], []>} : vector<16x50xf32>, vector<50x32xf32>, vector<16x32xf32> -> vector<16x32xf32>
    %c0_5 = arith.constant 0 : index
    %c0_6 = arith.constant 0 : index
    %9 = vector.load %arg3[%c0_5, %c0_6] : memref<16x32xf32, #tpu.memory_space<vmem>>, vector<16x32xf32>
    %10 = arith.addf %8, %9 : vector<16x32xf32>
    %11 = vector.extract_strided_slice %0 {offsets = [0, 0], sizes = [1, 32], strides = [1, 1]} : vector<19x96xf32> to vector<1x32xf32>
    %12 = vector.extract_strided_slice %0 {offsets = [1, 0], sizes = [1, 32], strides = [1, 1]} : vector<19x96xf32> to vector<1x32xf32>
    %cst_7 = arith.constant dense<0.000000e+00> : vector<16xf32>
    %13 = vector.multi_reduction <add>, %10, %cst_7 [1] : vector<16x32xf32> to vector<16xf32>
    %14 = vector.shape_cast %13 : vector<16xf32> to vector<16x1xf32>
    %cst_8 = arith.constant 3.200000e+01 : f32
    %15 = vector.broadcast %cst_8 : f32 to vector<16x1xf32>
    %16 = arith.divf %14, %15 : vector<16x1xf32>
    %17 = vector.broadcast %16 : vector<16x1xf32> to vector<16x32xf32>
    %18 = arith.subf %10, %17 : vector<16x32xf32>
    %19 = arith.mulf %18, %18 : vector<16x32xf32>
    %cst_9 = arith.constant dense<0.000000e+00> : vector<16xf32>
    %20 = vector.multi_reduction <add>, %19, %cst_9 [1] : vector<16x32xf32> to vector<16xf32>
    %21 = vector.shape_cast %20 : vector<16xf32> to vector<16x1xf32>
    %cst_10 = arith.constant 3.200000e+01 : f32
    %22 = vector.broadcast %cst_10 : f32 to vector<16x1xf32>
    %23 = arith.divf %21, %22 : vector<16x1xf32>
    %24 = vector.broadcast %16 : vector<16x1xf32> to vector<16x32xf32>
    %25 = arith.subf %10, %24 : vector<16x32xf32>
    %cst_11 = arith.constant 9.99999996E-13 : f32
    %26 = vector.broadcast %cst_11 : f32 to vector<16x1xf32>
    %27 = arith.addf %23, %26 : vector<16x1xf32>
    %28 = math.rsqrt %27 : vector<16x1xf32>
    %29 = vector.broadcast %28 : vector<16x1xf32> to vector<16x32xf32>
    %30 = arith.mulf %25, %29 : vector<16x32xf32>
    %31 = vector.broadcast %11 : vector<1x32xf32> to vector<16x32xf32>
    %32 = arith.mulf %30, %31 : vector<16x32xf32>
    %33 = vector.broadcast %12 : vector<1x32xf32> to vector<16x32xf32>
    %34 = arith.addf %32, %33 : vector<16x32xf32>
    %c0_12 = arith.constant 0 : index
    %c0_13 = arith.constant 0 : index
    %c0_14 = arith.constant 0 : index
    %35 = vector.load %arg1[%c0_12, %c0_13, %c0_14] : memref<2x1x8xi32, #tpu.memory_space<vmem>>, vector<2x1x8xi32>
    %36 = arith.sitofp %35 : vector<2x1x8xi32> to vector<2x1x8xf32>
    %cst_15 = arith.constant 1.000000e+00 : f32
    %37 = vector.broadcast %cst_15 : f32 to vector<2x1x8xf32>
    %38 = arith.subf %37, %36 : vector<2x1x8xf32>
    %cst_16 = arith.constant -1.000000e+09 : f32
    %39 = vector.broadcast %cst_16 : f32 to vector<2x1x8xf32>
    %40 = arith.mulf %38, %39 : vector<2x1x8xf32>
    %41 = tpu.concatenate %40, %40, %40, %40 in 0 : vector<2x1x8xf32>, vector<2x1x8xf32>, vector<2x1x8xf32>, vector<2x1x8xf32> -> vector<8x1x8xf32>
    %42 = vector.extract_strided_slice %0 {offsets = [3, 0], sizes = [1, 96], strides = [1, 1]} : vector<19x96xf32> to vector<1x96xf32>
    %43 = vector.extract_strided_slice %0 {offsets = [4, 0], sizes = [1, 32], strides = [1, 1]} : vector<19x96xf32> to vector<1x32xf32>
    %44 = vector.extract_strided_slice %0 {offsets = [5, 0], sizes = [1, 32], strides = [1, 1]} : vector<19x96xf32> to vector<1x32xf32>
    %45 = vector.extract_strided_slice %0 {offsets = [6, 0], sizes = [1, 32], strides = [1, 1]} : vector<19x96xf32> to vector<1x32xf32>
    %46 = vector.extract_strided_slice %0 {offsets = [7, 0], sizes = [1, 64], strides = [1, 1]} : vector<19x96xf32> to vector<1x64xf32>
    %47 = vector.extract_strided_slice %0 {offsets = [8, 0], sizes = [1, 32], strides = [1, 1]} : vector<19x96xf32> to vector<1x32xf32>
    %48 = vector.extract_strided_slice %0 {offsets = [9, 0], sizes = [1, 32], strides = [1, 1]} : vector<19x96xf32> to vector<1x32xf32>
    %49 = vector.extract_strided_slice %0 {offsets = [10, 0], sizes = [1, 32], strides = [1, 1]} : vector<19x96xf32> to vector<1x32xf32>
    %c0_17 = arith.constant 0 : index
    %c0_18 = arith.constant 0 : index
    %c0_19 = arith.constant 0 : index
    %50 = vector.load %arg5[%c0_17, %c0_18, %c0_19] : memref<2x32x96xf32, #tpu.memory_space<vmem>>, vector<1x32x96xf32>
    %51 = vector.shape_cast %50 : vector<1x32x96xf32> to vector<32x96xf32>
    %cst_20 = arith.constant dense<0.000000e+00> : vector<16x96xf32>
    %52 = tpu.matmul %34, %51, %cst_20 {dimension_numbers = #tpu.dot_dimension_numbers<[1], [0], [0], [1], [0, 0, 1, 1], [], []>} : vector<16x32xf32>, vector<32x96xf32>, vector<16x96xf32> -> vector<16x96xf32>
    %53 = vector.broadcast %42 : vector<1x96xf32> to vector<16x96xf32>
    %54 = arith.addf %52, %53 : vector<16x96xf32>
    %55 = vector.extract_strided_slice %54 {offsets = [0, 0], sizes = [16, 8], strides = [1, 1]} : vector<16x96xf32> to vector<16x8xf32>
    %56 = vector.extract_strided_slice %54 {offsets = [0, 8], sizes = [16, 8], strides = [1, 1]} : vector<16x96xf32> to vector<16x8xf32>
    %57 = vector.extract_strided_slice %54 {offsets = [0, 16], sizes = [16, 8], strides = [1, 1]} : vector<16x96xf32> to vector<16x8xf32>
    %58 = vector.extract_strided_slice %54 {offsets = [0, 24], sizes = [16, 8], strides = [1, 1]} : vector<16x96xf32> to vector<16x8xf32>
    %59 = tpu.concatenate %55, %56, %57, %58 in 0 : vector<16x8xf32>, vector<16x8xf32>, vector<16x8xf32>, vector<16x8xf32> -> vector<64x8xf32>
    %60 = vector.shape_cast %59 : vector<64x8xf32> to vector<8x8x8xf32>
    %61 = vector.extract_strided_slice %54 {offsets = [0, 32], sizes = [16, 8], strides = [1, 1]} : vector<16x96xf32> to vector<16x8xf32>
    %62 = vector.extract_strided_slice %54 {offsets = [0, 40], sizes = [16, 8], strides = [1, 1]} : vector<16x96xf32> to vector<16x8xf32>
    %63 = vector.extract_strided_slice %54 {offsets = [0, 48], sizes = [16, 8], strides = [1, 1]} : vector<16x96xf32> to vector<16x8xf32>
    %64 = vector.extract_strided_slice %54 {offsets = [0, 56], sizes = [16, 8], strides = [1, 1]} : vector<16x96xf32> to vector<16x8xf32>
    %65 = tpu.concatenate %61, %62, %63, %64 in 0 : vector<16x8xf32>, vector<16x8xf32>, vector<16x8xf32>, vector<16x8xf32> -> vector<64x8xf32>
    %66 = vector.shape_cast %65 : vector<64x8xf32> to vector<8x8x8xf32>
    %67 = vector.extract_strided_slice %54 {offsets = [0, 64], sizes = [16, 8], strides = [1, 1]} : vector<16x96xf32> to vector<16x8xf32>
    %68 = vector.extract_strided_slice %54 {offsets = [0, 72], sizes = [16, 8], strides = [1, 1]} : vector<16x96xf32> to vector<16x8xf32>
    %69 = vector.extract_strided_slice %54 {offsets = [0, 80], sizes = [16, 8], strides = [1, 1]} : vector<16x96xf32> to vector<16x8xf32>
    %70 = vector.extract_strided_slice %54 {offsets = [0, 88], sizes = [16, 8], strides = [1, 1]} : vector<16x96xf32> to vector<16x8xf32>
    %71 = tpu.concatenate %67, %68, %69, %70 in 0 : vector<16x8xf32>, vector<16x8xf32>, vector<16x8xf32>, vector<16x8xf32> -> vector<64x8xf32>
    %72 = vector.shape_cast %71 : vector<64x8xf32> to vector<8x8x8xf32>
    "tpu.trace_start"() <{level = 10 : i32, message = "bqd,bkd->bqk"}> : () -> ()
    %cst_21 = arith.constant dense<0.000000e+00> : vector<8x8x8xf32>
    %73 = tpu.matmul %60, %66, %cst_21 {dimension_numbers = #tpu.dot_dimension_numbers<[2], [2], [1], [1], [0, 0, 0, 1, 1, 1], [0], [0]>} : vector<8x8x8xf32>, vector<8x8x8xf32>, vector<8x8x8xf32> -> vector<8x8x8xf32>
    "tpu.trace_stop"() : () -> ()
    %cst_22 = arith.constant 0.353553385 : f32
    %74 = vector.broadcast %cst_22 : f32 to vector<8x8x8xf32>
    %75 = arith.mulf %73, %74 : vector<8x8x8xf32>
    %76 = vector.broadcast %41 : vector<8x1x8xf32> to vector<8x8x8xf32>
    %77 = arith.addf %75, %76 : vector<8x8x8xf32>
    %cst_23 = arith.constant dense<0xFF800000> : vector<8x8xf32>
    %78 = vector.multi_reduction <maximumf>, %77, %cst_23 [2] : vector<8x8x8xf32> to vector<8x8xf32>
    %79 = vector.shape_cast %78 : vector<8x8xf32> to vector<8x8x1xf32>
    %80 = vector.broadcast %79 : vector<8x8x1xf32> to vector<8x8x8xf32>
    %81 = arith.subf %77, %80 : vector<8x8x8xf32>
    %82 = math.exp %81 : vector<8x8x8xf32>
    %cst_24 = arith.constant dense<0.000000e+00> : vector<8x8xf32>
    %83 = vector.multi_reduction <add>, %82, %cst_24 [2] : vector<8x8x8xf32> to vector<8x8xf32>
    %84 = vector.shape_cast %83 : vector<8x8xf32> to vector<8x8x1xf32>
    %85 = tpu.reciprocal %84 {approx = true} : vector<8x8x1xf32> -> vector<8x8x1xf32>
    %86 = vector.broadcast %85 : vector<8x8x1xf32> to vector<8x8x8xf32>
    %87 = arith.mulf %82, %86 : vector<8x8x8xf32>
    "tpu.trace_start"() <{level = 10 : i32, message = "bqk,bkd->bqd"}> : () -> ()
    %cst_25 = arith.constant dense<0.000000e+00> : vector<8x8x8xf32>
    %88 = tpu.matmul %87, %72, %cst_25 {dimension_numbers = #tpu.dot_dimension_numbers<[2], [1], [1], [2], [0, 0, 0, 1, 1, 2], [0], [0]>} : vector<8x8x8xf32>, vector<8x8x8xf32>, vector<8x8x8xf32> -> vector<8x8x8xf32>
    "tpu.trace_stop"() : () -> ()
    %89 = vector.extract_strided_slice %88 {offsets = [0, 0, 0], sizes = [2, 8, 8], strides = [1, 1, 1]} : vector<8x8x8xf32> to vector<2x8x8xf32>
    %90 = vector.shape_cast %89 : vector<2x8x8xf32> to vector<16x8xf32>
    %91 = vector.extract_strided_slice %88 {offsets = [2, 0, 0], sizes = [2, 8, 8], strides = [1, 1, 1]} : vector<8x8x8xf32> to vector<2x8x8xf32>
    %92 = vector.shape_cast %91 : vector<2x8x8xf32> to vector<16x8xf32>
    %93 = vector.extract_strided_slice %88 {offsets = [4, 0, 0], sizes = [2, 8, 8], strides = [1, 1, 1]} : vector<8x8x8xf32> to vector<2x8x8xf32>
    %94 = vector.shape_cast %93 : vector<2x8x8xf32> to vector<16x8xf32>
    %95 = vector.extract_strided_slice %88 {offsets = [6, 0, 0], sizes = [2, 8, 8], strides = [1, 1, 1]} : vector<8x8x8xf32> to vector<2x8x8xf32>
    %96 = vector.shape_cast %95 : vector<2x8x8xf32> to vector<16x8xf32>
    %97 = tpu.concatenate %90, %92, %94, %96 in 1 : vector<16x8xf32>, vector<16x8xf32>, vector<16x8xf32>, vector<16x8xf32> -> vector<16x32xf32>
    %c0_26 = arith.constant 0 : index
    %c0_27 = arith.constant 0 : index
    %c0_28 = arith.constant 0 : index
    %98 = vector.load %arg6[%c0_26, %c0_27, %c0_28] : memref<2x32x32xf32, #tpu.memory_space<vmem>>, vector<1x32x32xf32>
    %99 = vector.shape_cast %98 : vector<1x32x32xf32> to vector<32x32xf32>
    %cst_29 = arith.constant dense<0.000000e+00> : vector<16x32xf32>
    %100 = tpu.matmul %97, %99, %cst_29 {dimension_numbers = #tpu.dot_dimension_numbers<[1], [0], [0], [1], [0, 0, 1, 1], [], []>} : vector<16x32xf32>, vector<32x32xf32>, vector<16x32xf32> -> vector<16x32xf32>
    %101 = vector.broadcast %43 : vector<1x32xf32> to vector<16x32xf32>
    %102 = arith.addf %100, %101 : vector<16x32xf32>
    %103 = arith.addf %34, %102 : vector<16x32xf32>
    %cst_30 = arith.constant dense<0.000000e+00> : vector<16xf32>
    %104 = vector.multi_reduction <add>, %103, %cst_30 [1] : vector<16x32xf32> to vector<16xf32>
    %105 = vector.shape_cast %104 : vector<16xf32> to vector<16x1xf32>
    %cst_31 = arith.constant 3.200000e+01 : f32
    %106 = vector.broadcast %cst_31 : f32 to vector<16x1xf32>
    %107 = arith.divf %105, %106 : vector<16x1xf32>
    %108 = vector.broadcast %107 : vector<16x1xf32> to vector<16x32xf32>
    %109 = arith.subf %103, %108 : vector<16x32xf32>
    %110 = arith.mulf %109, %109 : vector<16x32xf32>
    %cst_32 = arith.constant dense<0.000000e+00> : vector<16xf32>
    %111 = vector.multi_reduction <add>, %110, %cst_32 [1] : vector<16x32xf32> to vector<16xf32>
    %112 = vector.shape_cast %111 : vector<16xf32> to vector<16x1xf32>
    %cst_33 = arith.constant 3.200000e+01 : f32
    %113 = vector.broadcast %cst_33 : f32 to vector<16x1xf32>
    %114 = arith.divf %112, %113 : vector<16x1xf32>
    %115 = vector.broadcast %107 : vector<16x1xf32> to vector<16x32xf32>
    %116 = arith.subf %103, %115 : vector<16x32xf32>
    %cst_34 = arith.constant 9.99999996E-13 : f32
    %117 = vector.broadcast %cst_34 : f32 to vector<16x1xf32>
    %118 = arith.addf %114, %117 : vector<16x1xf32>
    %119 = math.rsqrt %118 : vector<16x1xf32>
    %120 = vector.broadcast %119 : vector<16x1xf32> to vector<16x32xf32>
    %121 = arith.mulf %116, %120 : vector<16x32xf32>
    %122 = vector.broadcast %44 : vector<1x32xf32> to vector<16x32xf32>
    %123 = arith.mulf %121, %122 : vector<16x32xf32>
    %124 = vector.broadcast %45 : vector<1x32xf32> to vector<16x32xf32>
    %125 = arith.addf %123, %124 : vector<16x32xf32>
    %c0_35 = arith.constant 0 : index
    %c0_36 = arith.constant 0 : index
    %c0_37 = arith.constant 0 : index
    %126 = vector.load %arg7[%c0_35, %c0_36, %c0_37] : memref<2x32x64xf32, #tpu.memory_space<vmem>>, vector<1x32x64xf32>
    %127 = vector.shape_cast %126 : vector<1x32x64xf32> to vector<32x64xf32>
    %cst_38 = arith.constant dense<0.000000e+00> : vector<16x64xf32>
    %128 = tpu.matmul %125, %127, %cst_38 {dimension_numbers = #tpu.dot_dimension_numbers<[1], [0], [0], [1], [0, 0, 1, 1], [], []>} : vector<16x32xf32>, vector<32x64xf32>, vector<16x64xf32> -> vector<16x64xf32>
    %129 = vector.broadcast %46 : vector<1x64xf32> to vector<16x64xf32>
    %130 = arith.addf %128, %129 : vector<16x64xf32>
    %cst_39 = arith.constant 5.000000e-01 : f32
    %131 = vector.broadcast %cst_39 : f32 to vector<16x64xf32>
    %132 = arith.mulf %131, %130 : vector<16x64xf32>
    %cst_40 = arith.constant 4.471500e-02 : f32
    %133 = vector.broadcast %cst_40 : f32 to vector<16x64xf32>
    %134 = arith.mulf %133, %130 : vector<16x64xf32>
    %135 = arith.mulf %134, %130 : vector<16x64xf32>
    %136 = arith.mulf %135, %130 : vector<16x64xf32>
    %137 = arith.addf %130, %136 : vector<16x64xf32>
    %cst_41 = arith.constant 0.797884583 : f32
    %138 = vector.broadcast %cst_41 : f32 to vector<16x64xf32>
    %139 = arith.mulf %138, %137 : vector<16x64xf32>
    %140 = math.tanh %139 : vector<16x64xf32>
    %cst_42 = arith.constant 1.000000e+00 : f32
    %141 = vector.broadcast %cst_42 : f32 to vector<16x64xf32>
    %142 = arith.addf %141, %140 : vector<16x64xf32>
    %143 = arith.mulf %132, %142 : vector<16x64xf32>
    %c0_43 = arith.constant 0 : index
    %c0_44 = arith.constant 0 : index
    %c0_45 = arith.constant 0 : index
    %144 = vector.load %arg8[%c0_43, %c0_44, %c0_45] : memref<2x64x32xf32, #tpu.memory_space<vmem>>, vector<1x64x32xf32>
    %145 = vector.shape_cast %144 : vector<1x64x32xf32> to vector<64x32xf32>
    %cst_46 = arith.constant dense<0.000000e+00> : vector<16x32xf32>
    %146 = tpu.matmul %143, %145, %cst_46 {dimension_numbers = #tpu.dot_dimension_numbers<[1], [0], [0], [1], [0, 0, 1, 1], [], []>} : vector<16x64xf32>, vector<64x32xf32>, vector<16x32xf32> -> vector<16x32xf32>
    %147 = vector.broadcast %47 : vector<1x32xf32> to vector<16x32xf32>
    %148 = arith.addf %146, %147 : vector<16x32xf32>
    %149 = arith.addf %125, %148 : vector<16x32xf32>
    %cst_47 = arith.constant dense<0.000000e+00> : vector<16xf32>
    %150 = vector.multi_reduction <add>, %149, %cst_47 [1] : vector<16x32xf32> to vector<16xf32>
    %151 = vector.shape_cast %150 : vector<16xf32> to vector<16x1xf32>
    %cst_48 = arith.constant 3.200000e+01 : f32
    %152 = vector.broadcast %cst_48 : f32 to vector<16x1xf32>
    %153 = arith.divf %151, %152 : vector<16x1xf32>
    %154 = vector.broadcast %153 : vector<16x1xf32> to vector<16x32xf32>
    %155 = arith.subf %149, %154 : vector<16x32xf32>
    %156 = arith.mulf %155, %155 : vector<16x32xf32>
    %cst_49 = arith.constant dense<0.000000e+00> : vector<16xf32>
    %157 = vector.multi_reduction <add>, %156, %cst_49 [1] : vector<16x32xf32> to vector<16xf32>
    %158 = vector.shape_cast %157 : vector<16xf32> to vector<16x1xf32>
    %cst_50 = arith.constant 3.200000e+01 : f32
    %159 = vector.broadcast %cst_50 : f32 to vector<16x1xf32>
    %160 = arith.divf %158, %159 : vector<16x1xf32>
    %161 = vector.broadcast %153 : vector<16x1xf32> to vector<16x32xf32>
    %162 = arith.subf %149, %161 : vector<16x32xf32>
    %cst_51 = arith.constant 9.99999996E-13 : f32
    %163 = vector.broadcast %cst_51 : f32 to vector<16x1xf32>
    %164 = arith.addf %160, %163 : vector<16x1xf32>
    %165 = math.rsqrt %164 : vector<16x1xf32>
    %166 = vector.broadcast %165 : vector<16x1xf32> to vector<16x32xf32>
    %167 = arith.mulf %162, %166 : vector<16x32xf32>
    %168 = vector.broadcast %48 : vector<1x32xf32> to vector<16x32xf32>
    %169 = arith.mulf %167, %168 : vector<16x32xf32>
    %170 = vector.broadcast %49 : vector<1x32xf32> to vector<16x32xf32>
    %171 = arith.addf %169, %170 : vector<16x32xf32>
    %172 = vector.extract_strided_slice %0 {offsets = [11, 0], sizes = [1, 96], strides = [1, 1]} : vector<19x96xf32> to vector<1x96xf32>
    %173 = vector.extract_strided_slice %0 {offsets = [12, 0], sizes = [1, 32], strides = [1, 1]} : vector<19x96xf32> to vector<1x32xf32>
    %174 = vector.extract_strided_slice %0 {offsets = [13, 0], sizes = [1, 32], strides = [1, 1]} : vector<19x96xf32> to vector<1x32xf32>
    %175 = vector.extract_strided_slice %0 {offsets = [14, 0], sizes = [1, 32], strides = [1, 1]} : vector<19x96xf32> to vector<1x32xf32>
    %176 = vector.extract_strided_slice %0 {offsets = [15, 0], sizes = [1, 64], strides = [1, 1]} : vector<19x96xf32> to vector<1x64xf32>
    %177 = vector.extract_strided_slice %0 {offsets = [16, 0], sizes = [1, 32], strides = [1, 1]} : vector<19x96xf32> to vector<1x32xf32>
    %178 = vector.extract_strided_slice %0 {offsets = [17, 0], sizes = [1, 32], strides = [1, 1]} : vector<19x96xf32> to vector<1x32xf32>
    %179 = vector.extract_strided_slice %0 {offsets = [18, 0], sizes = [1, 32], strides = [1, 1]} : vector<19x96xf32> to vector<1x32xf32>
    %c1 = arith.constant 1 : index
    %c0_52 = arith.constant 0 : index
    %c0_53 = arith.constant 0 : index
    %180 = vector.load %arg5[%c1, %c0_52, %c0_53] : memref<2x32x96xf32, #tpu.memory_space<vmem>>, vector<1x32x96xf32>
    %181 = vector.shape_cast %180 : vector<1x32x96xf32> to vector<32x96xf32>
    %cst_54 = arith.constant dense<0.000000e+00> : vector<16x96xf32>
    %182 = tpu.matmul %171, %181, %cst_54 {dimension_numbers = #tpu.dot_dimension_numbers<[1], [0], [0], [1], [0, 0, 1, 1], [], []>} : vector<16x32xf32>, vector<32x96xf32>, vector<16x96xf32> -> vector<16x96xf32>
    %183 = vector.broadcast %172 : vector<1x96xf32> to vector<16x96xf32>
    %184 = arith.addf %182, %183 : vector<16x96xf32>
    %185 = vector.extract_strided_slice %184 {offsets = [0, 0], sizes = [16, 8], strides = [1, 1]} : vector<16x96xf32> to vector<16x8xf32>
    %186 = vector.extract_strided_slice %184 {offsets = [0, 8], sizes = [16, 8], strides = [1, 1]} : vector<16x96xf32> to vector<16x8xf32>
    %187 = vector.extract_strided_slice %184 {offsets = [0, 16], sizes = [16, 8], strides = [1, 1]} : vector<16x96xf32> to vector<16x8xf32>
    %188 = vector.extract_strided_slice %184 {offsets = [0, 24], sizes = [16, 8], strides = [1, 1]} : vector<16x96xf32> to vector<16x8xf32>
    %189 = tpu.concatenate %185, %186, %187, %188 in 0 : vector<16x8xf32>, vector<16x8xf32>, vector<16x8xf32>, vector<16x8xf32> -> vector<64x8xf32>
    %190 = vector.shape_cast %189 : vector<64x8xf32> to vector<8x8x8xf32>
    %191 = vector.extract_strided_slice %184 {offsets = [0, 32], sizes = [16, 8], strides = [1, 1]} : vector<16x96xf32> to vector<16x8xf32>
    %192 = vector.extract_strided_slice %184 {offsets = [0, 40], sizes = [16, 8], strides = [1, 1]} : vector<16x96xf32> to vector<16x8xf32>
    %193 = vector.extract_strided_slice %184 {offsets = [0, 48], sizes = [16, 8], strides = [1, 1]} : vector<16x96xf32> to vector<16x8xf32>
    %194 = vector.extract_strided_slice %184 {offsets = [0, 56], sizes = [16, 8], strides = [1, 1]} : vector<16x96xf32> to vector<16x8xf32>
    %195 = tpu.concatenate %191, %192, %193, %194 in 0 : vector<16x8xf32>, vector<16x8xf32>, vector<16x8xf32>, vector<16x8xf32> -> vector<64x8xf32>
    %196 = vector.shape_cast %195 : vector<64x8xf32> to vector<8x8x8xf32>
    %197 = vector.extract_strided_slice %184 {offsets = [0, 64], sizes = [16, 8], strides = [1, 1]} : vector<16x96xf32> to vector<16x8xf32>
    %198 = vector.extract_strided_slice %184 {offsets = [0, 72], sizes = [16, 8], strides = [1, 1]} : vector<16x96xf32> to vector<16x8xf32>
    %199 = vector.extract_strided_slice %184 {offsets = [0, 80], sizes = [16, 8], strides = [1, 1]} : vector<16x96xf32> to vector<16x8xf32>
    %200 = vector.extract_strided_slice %184 {offsets = [0, 88], sizes = [16, 8], strides = [1, 1]} : vector<16x96xf32> to vector<16x8xf32>
    %201 = tpu.concatenate %197, %198, %199, %200 in 0 : vector<16x8xf32>, vector<16x8xf32>, vector<16x8xf32>, vector<16x8xf32> -> vector<64x8xf32>
    %202 = vector.shape_cast %201 : vector<64x8xf32> to vector<8x8x8xf32>
    "tpu.trace_start"() <{level = 10 : i32, message = "bqd,bkd->bqk"}> : () -> ()
    %cst_55 = arith.constant dense<0.000000e+00> : vector<8x8x8xf32>
    %203 = tpu.matmul %190, %196, %cst_55 {dimension_numbers = #tpu.dot_dimension_numbers<[2], [2], [1], [1], [0, 0, 0, 1, 1, 1], [0], [0]>} : vector<8x8x8xf32>, vector<8x8x8xf32>, vector<8x8x8xf32> -> vector<8x8x8xf32>
    "tpu.trace_stop"() : () -> ()
    %cst_56 = arith.constant 0.353553385 : f32
    %204 = vector.broadcast %cst_56 : f32 to vector<8x8x8xf32>
    %205 = arith.mulf %203, %204 : vector<8x8x8xf32>
    %206 = vector.broadcast %41 : vector<8x1x8xf32> to vector<8x8x8xf32>
    %207 = arith.addf %205, %206 : vector<8x8x8xf32>
    %cst_57 = arith.constant dense<0xFF800000> : vector<8x8xf32>
    %208 = vector.multi_reduction <maximumf>, %207, %cst_57 [2] : vector<8x8x8xf32> to vector<8x8xf32>
    %209 = vector.shape_cast %208 : vector<8x8xf32> to vector<8x8x1xf32>
    %210 = vector.broadcast %209 : vector<8x8x1xf32> to vector<8x8x8xf32>
    %211 = arith.subf %207, %210 : vector<8x8x8xf32>
    %212 = math.exp %211 : vector<8x8x8xf32>
    %cst_58 = arith.constant dense<0.000000e+00> : vector<8x8xf32>
    %213 = vector.multi_reduction <add>, %212, %cst_58 [2] : vector<8x8x8xf32> to vector<8x8xf32>
    %214 = vector.shape_cast %213 : vector<8x8xf32> to vector<8x8x1xf32>
    %215 = tpu.reciprocal %214 {approx = true} : vector<8x8x1xf32> -> vector<8x8x1xf32>
    %216 = vector.broadcast %215 : vector<8x8x1xf32> to vector<8x8x8xf32>
    %217 = arith.mulf %212, %216 : vector<8x8x8xf32>
    "tpu.trace_start"() <{level = 10 : i32, message = "bqk,bkd->bqd"}> : () -> ()
    %cst_59 = arith.constant dense<0.000000e+00> : vector<8x8x8xf32>
    %218 = tpu.matmul %217, %202, %cst_59 {dimension_numbers = #tpu.dot_dimension_numbers<[2], [1], [1], [2], [0, 0, 0, 1, 1, 2], [0], [0]>} : vector<8x8x8xf32>, vector<8x8x8xf32>, vector<8x8x8xf32> -> vector<8x8x8xf32>
    "tpu.trace_stop"() : () -> ()
    %219 = vector.extract_strided_slice %218 {offsets = [0, 0, 0], sizes = [2, 8, 8], strides = [1, 1, 1]} : vector<8x8x8xf32> to vector<2x8x8xf32>
    %220 = vector.shape_cast %219 : vector<2x8x8xf32> to vector<16x8xf32>
    %221 = vector.extract_strided_slice %218 {offsets = [2, 0, 0], sizes = [2, 8, 8], strides = [1, 1, 1]} : vector<8x8x8xf32> to vector<2x8x8xf32>
    %222 = vector.shape_cast %221 : vector<2x8x8xf32> to vector<16x8xf32>
    %223 = vector.extract_strided_slice %218 {offsets = [4, 0, 0], sizes = [2, 8, 8], strides = [1, 1, 1]} : vector<8x8x8xf32> to vector<2x8x8xf32>
    %224 = vector.shape_cast %223 : vector<2x8x8xf32> to vector<16x8xf32>
    %225 = vector.extract_strided_slice %218 {offsets = [6, 0, 0], sizes = [2, 8, 8], strides = [1, 1, 1]} : vector<8x8x8xf32> to vector<2x8x8xf32>
    %226 = vector.shape_cast %225 : vector<2x8x8xf32> to vector<16x8xf32>
    %227 = tpu.concatenate %220, %222, %224, %226 in 1 : vector<16x8xf32>, vector<16x8xf32>, vector<16x8xf32>, vector<16x8xf32> -> vector<16x32xf32>
    %c1_60 = arith.constant 1 : index
    %c0_61 = arith.constant 0 : index
    %c0_62 = arith.constant 0 : index
    %228 = vector.load %arg6[%c1_60, %c0_61, %c0_62] : memref<2x32x32xf32, #tpu.memory_space<vmem>>, vector<1x32x32xf32>
    %229 = vector.shape_cast %228 : vector<1x32x32xf32> to vector<32x32xf32>
    %cst_63 = arith.constant dense<0.000000e+00> : vector<16x32xf32>
    %230 = tpu.matmul %227, %229, %cst_63 {dimension_numbers = #tpu.dot_dimension_numbers<[1], [0], [0], [1], [0, 0, 1, 1], [], []>} : vector<16x32xf32>, vector<32x32xf32>, vector<16x32xf32> -> vector<16x32xf32>
    %231 = vector.broadcast %173 : vector<1x32xf32> to vector<16x32xf32>
    %232 = arith.addf %230, %231 : vector<16x32xf32>
    %233 = arith.addf %171, %232 : vector<16x32xf32>
    %cst_64 = arith.constant dense<0.000000e+00> : vector<16xf32>
    %234 = vector.multi_reduction <add>, %233, %cst_64 [1] : vector<16x32xf32> to vector<16xf32>
    %235 = vector.shape_cast %234 : vector<16xf32> to vector<16x1xf32>
    %cst_65 = arith.constant 3.200000e+01 : f32
    %236 = vector.broadcast %cst_65 : f32 to vector<16x1xf32>
    %237 = arith.divf %235, %236 : vector<16x1xf32>
    %238 = vector.broadcast %237 : vector<16x1xf32> to vector<16x32xf32>
    %239 = arith.subf %233, %238 : vector<16x32xf32>
    %240 = arith.mulf %239, %239 : vector<16x32xf32>
    %cst_66 = arith.constant dense<0.000000e+00> : vector<16xf32>
    %241 = vector.multi_reduction <add>, %240, %cst_66 [1] : vector<16x32xf32> to vector<16xf32>
    %242 = vector.shape_cast %241 : vector<16xf32> to vector<16x1xf32>
    %cst_67 = arith.constant 3.200000e+01 : f32
    %243 = vector.broadcast %cst_67 : f32 to vector<16x1xf32>
    %244 = arith.divf %242, %243 : vector<16x1xf32>
    %245 = vector.broadcast %237 : vector<16x1xf32> to vector<16x32xf32>
    %246 = arith.subf %233, %245 : vector<16x32xf32>
    %cst_68 = arith.constant 9.99999996E-13 : f32
    %247 = vector.broadcast %cst_68 : f32 to vector<16x1xf32>
    %248 = arith.addf %244, %247 : vector<16x1xf32>
    %249 = math.rsqrt %248 : vector<16x1xf32>
    %250 = vector.broadcast %249 : vector<16x1xf32> to vector<16x32xf32>
    %251 = arith.mulf %246, %250 : vector<16x32xf32>
    %252 = vector.broadcast %174 : vector<1x32xf32> to vector<16x32xf32>
    %253 = arith.mulf %251, %252 : vector<16x32xf32>
    %254 = vector.broadcast %175 : vector<1x32xf32> to vector<16x32xf32>
    %255 = arith.addf %253, %254 : vector<16x32xf32>
    %c1_69 = arith.constant 1 : index
    %c0_70 = arith.constant 0 : index
    %c0_71 = arith.constant 0 : index
    %256 = vector.load %arg7[%c1_69, %c0_70, %c0_71] : memref<2x32x64xf32, #tpu.memory_space<vmem>>, vector<1x32x64xf32>
    %257 = vector.shape_cast %256 : vector<1x32x64xf32> to vector<32x64xf32>
    %cst_72 = arith.constant dense<0.000000e+00> : vector<16x64xf32>
    %258 = tpu.matmul %255, %257, %cst_72 {dimension_numbers = #tpu.dot_dimension_numbers<[1], [0], [0], [1], [0, 0, 1, 1], [], []>} : vector<16x32xf32>, vector<32x64xf32>, vector<16x64xf32> -> vector<16x64xf32>
    %259 = vector.broadcast %176 : vector<1x64xf32> to vector<16x64xf32>
    %260 = arith.addf %258, %259 : vector<16x64xf32>
    %cst_73 = arith.constant 5.000000e-01 : f32
    %261 = vector.broadcast %cst_73 : f32 to vector<16x64xf32>
    %262 = arith.mulf %261, %260 : vector<16x64xf32>
    %cst_74 = arith.constant 4.471500e-02 : f32
    %263 = vector.broadcast %cst_74 : f32 to vector<16x64xf32>
    %264 = arith.mulf %263, %260 : vector<16x64xf32>
    %265 = arith.mulf %264, %260 : vector<16x64xf32>
    %266 = arith.mulf %265, %260 : vector<16x64xf32>
    %267 = arith.addf %260, %266 : vector<16x64xf32>
    %cst_75 = arith.constant 0.797884583 : f32
    %268 = vector.broadcast %cst_75 : f32 to vector<16x64xf32>
    %269 = arith.mulf %268, %267 : vector<16x64xf32>
    %270 = math.tanh %269 : vector<16x64xf32>
    %cst_76 = arith.constant 1.000000e+00 : f32
    %271 = vector.broadcast %cst_76 : f32 to vector<16x64xf32>
    %272 = arith.addf %271, %270 : vector<16x64xf32>
    %273 = arith.mulf %262, %272 : vector<16x64xf32>
    %c1_77 = arith.constant 1 : index
    %c0_78 = arith.constant 0 : index
    %c0_79 = arith.constant 0 : index
    %274 = vector.load %arg8[%c1_77, %c0_78, %c0_79] : memref<2x64x32xf32, #tpu.memory_space<vmem>>, vector<1x64x32xf32>
    %275 = vector.shape_cast %274 : vector<1x64x32xf32> to vector<64x32xf32>
    %cst_80 = arith.constant dense<0.000000e+00> : vector<16x32xf32>
    %276 = tpu.matmul %273, %275, %cst_80 {dimension_numbers = #tpu.dot_dimension_numbers<[1], [0], [0], [1], [0, 0, 1, 1], [], []>} : vector<16x64xf32>, vector<64x32xf32>, vector<16x32xf32> -> vector<16x32xf32>
    %277 = vector.broadcast %177 : vector<1x32xf32> to vector<16x32xf32>
    %278 = arith.addf %276, %277 : vector<16x32xf32>
    %279 = arith.addf %255, %278 : vector<16x32xf32>
    %cst_81 = arith.constant dense<0.000000e+00> : vector<16xf32>
    %280 = vector.multi_reduction <add>, %279, %cst_81 [1] : vector<16x32xf32> to vector<16xf32>
    %281 = vector.shape_cast %280 : vector<16xf32> to vector<16x1xf32>
    %cst_82 = arith.constant 3.200000e+01 : f32
    %282 = vector.broadcast %cst_82 : f32 to vector<16x1xf32>
    %283 = arith.divf %281, %282 : vector<16x1xf32>
    %284 = vector.broadcast %283 : vector<16x1xf32> to vector<16x32xf32>
    %285 = arith.subf %279, %284 : vector<16x32xf32>
    %286 = arith.mulf %285, %285 : vector<16x32xf32>
    %cst_83 = arith.constant dense<0.000000e+00> : vector<16xf32>
    %287 = vector.multi_reduction <add>, %286, %cst_83 [1] : vector<16x32xf32> to vector<16xf32>
    %288 = vector.shape_cast %287 : vector<16xf32> to vector<16x1xf32>
    %cst_84 = arith.constant 3.200000e+01 : f32
    %289 = vector.broadcast %cst_84 : f32 to vector<16x1xf32>
    %290 = arith.divf %288, %289 : vector<16x1xf32>
    %291 = vector.broadcast %283 : vector<16x1xf32> to vector<16x32xf32>
    %292 = arith.subf %279, %291 : vector<16x32xf32>
    %cst_85 = arith.constant 9.99999996E-13 : f32
    %293 = vector.broadcast %cst_85 : f32 to vector<16x1xf32>
    %294 = arith.addf %290, %293 : vector<16x1xf32>
    %295 = math.rsqrt %294 : vector<16x1xf32>
    %296 = vector.broadcast %295 : vector<16x1xf32> to vector<16x32xf32>
    %297 = arith.mulf %292, %296 : vector<16x32xf32>
    %298 = vector.broadcast %178 : vector<1x32xf32> to vector<16x32xf32>
    %299 = arith.mulf %297, %298 : vector<16x32xf32>
    %300 = vector.broadcast %179 : vector<1x32xf32> to vector<16x32xf32>
    %301 = arith.addf %299, %300 : vector<16x32xf32>
    %302 = vector.shape_cast %301 : vector<16x32xf32> to vector<2x8x32xf32>
    %303 = vector.extract_strided_slice %302 {offsets = [0, 0, 0], sizes = [2, 1, 32], strides = [1, 1, 1]} : vector<2x8x32xf32> to vector<2x1x32xf32>
    %304 = vector.shape_cast %303 : vector<2x1x32xf32> to vector<2x32xf32>
    %cst_86 = arith.constant 0.000000e+00 : f32
    %305 = vector.broadcast %cst_86 : f32 to vector<2x32xf32>
    %306 = arith.maximumf %304, %305 : vector<2x32xf32>
    %307 = vector.extract_strided_slice %0 {offsets = [2, 0], sizes = [1, 3], strides = [1, 1]} : vector<19x96xf32> to vector<1x3xf32>
    %c0_87 = arith.constant 0 : index
    %c0_88 = arith.constant 0 : index
    %308 = vector.load %arg9[%c0_87, %c0_88] : memref<32x3xf32, #tpu.memory_space<vmem>>, vector<32x3xf32>
    %cst_89 = arith.constant dense<0.000000e+00> : vector<2x3xf32>
    %309 = tpu.matmul %306, %308, %cst_89 {dimension_numbers = #tpu.dot_dimension_numbers<[1], [0], [0], [1], [0, 0, 1, 1], [], []>} : vector<2x32xf32>, vector<32x3xf32>, vector<2x3xf32> -> vector<2x3xf32>
    %310 = vector.broadcast %307 : vector<1x3xf32> to vector<2x3xf32>
    %311 = arith.addf %309, %310 : vector<2x3xf32>
    %c0_90 = arith.constant 0 : index
    %c0_91 = arith.constant 0 : index
    %312 = vector.load %arg10[%c0_90, %c0_91] : memref<2x3xf32, #tpu.memory_space<vmem>>, vector<2x3xf32>
    tpu.vector_store %arg10[%c0_90, %c0_91], %311 {strides = array<i32>} : memref<2x3xf32, #tpu.memory_space<vmem>>, vector<2x3xf32>,
    return
  }
}

</mosaic_0001>

<llo_original>
// kernel: tpu_custom_call.1
$region0: #{tpu_custom_call.1}
  #allocation0 [shape = 'u32[]', space=smem, size = 0x4, offset = 0x4, fixed_abs, tag = 'smem constant byte address 0x4 - core index']
  #allocation1 [shape = 'u32[144,128]{1,0:T(1,128)}', space=vmem, size = 0x12000, scoped, tag = 'internal scratch']
  %s0 = inlined_call_operand.vmem [shape: s32[16,1], index: 0, kind: input, shape index: {}]
  %s1 = inlined_call_operand.vmem [shape: s32[2,1,8], index: 1, kind: input, shape index: {}]
  %s2 = inlined_call_operand.vmem [shape: f32[50,32], index: 2, kind: input, shape index: {}]
  %s3 = inlined_call_operand.vmem [shape: f32[16,32], index: 3, kind: input, shape index: {}]
  %s4 = inlined_call_operand.vmem [shape: f32[19,96], index: 4, kind: input, shape index: {}]
  %s5 = inlined_call_operand.vmem [shape: f32[2,32,96], index: 5, kind: input, shape index: {}]
  %s6 = inlined_call_operand.vmem [shape: f32[2,32,32], index: 6, kind: input, shape index: {}]
  %s7 = inlined_call_operand.vmem [shape: f32[2,32,64], index: 7, kind: input, shape index: {}]
  %s8 = inlined_call_operand.vmem [shape: f32[2,64,32], index: 8, kind: input, shape index: {}]
  %s9 = inlined_call_operand.vmem [shape: f32[32,3], index: 9, kind: input, shape index: {}]
  %s10 = inlined_call_operand.hbm [shape: f32[2,3], index: 10, kind: output, shape index: {}]
  %s11 = sld [smem:[#allocation0]]
  $region50: #{tpu_custom_call.1} parent=0
    _
  %s13 = ssub.s32 1, %s11
  %s14 = scalar_select 0, %s13, %s11
  $region1: #{tpu_custom_call.1} parent=0
    #allocation2 [shape = 'u8[1024]{0}', space=vmem, size = 0x400, scoped, tag = 'output window, operand 0, single buffered']
    #allocation3 [shape = 's32[1]{0}', space=sflag, size = 0x4, scoped, tag = 'scoped memory for tpu_custom_call.1']
    %15 = vsyncpa [#allocation3], 0
    // Predicated region
    $region2: #{tpu_custom_call.1} parent=1 // pred_check
      _
    $region3: #{tpu_custom_call.1} parent=1 // pred_check_branch
      %17 = sbr.rel (0) target = $region5
    $region4: #{tpu_custom_call.1} parent=1 // pred_region
      _
    $region5: #{tpu_custom_call.1} parent=1 // pred_fallthru
      _
    // Predicated region
    $region6: #{tpu_custom_call.1} parent=1 // pred_check
      _
    $region7: #{tpu_custom_call.1} parent=1 // pred_check_branch
      %19 = sbr.rel (0) target = $region9
    $region8: #{tpu_custom_call.1} parent=1 // pred_region
      _
    $region9: #{tpu_custom_call.1} parent=1 // pred_fallthru
      _
    // Predicated region
    $region10: #{tpu_custom_call.1} parent=1 // pred_check
      _
    $region11: #{tpu_custom_call.1} parent=1 // pred_check_branch
      %21 = sbr.rel (0) target = $region13
    $region12: #{tpu_custom_call.1} parent=1 // pred_region
      _
    $region13: #{tpu_custom_call.1} parent=1 // pred_fallthru
      _
    // Predicated region
    $region14: #{tpu_custom_call.1} parent=1 // pred_check
      _
    $region15: #{tpu_custom_call.1} parent=1 // pred_check_branch
      %23 = sbr.rel (0) target = $region17
    $region16: #{tpu_custom_call.1} parent=1 // pred_region
      _
    $region17: #{tpu_custom_call.1} parent=1 // pred_fallthru
      _
    // Predicated region
    $region18: #{tpu_custom_call.1} parent=1 // pred_check
      _
    $region19: #{tpu_custom_call.1} parent=1 // pred_check_branch
      %25 = sbr.rel (0) target = $region21
    $region20: #{tpu_custom_call.1} parent=1 // pred_region
      _
    $region21: #{tpu_custom_call.1} parent=1 // pred_fallthru
      _
    // Predicated region
    $region22: #{tpu_custom_call.1} parent=1 // pred_check
      _
    $region23: #{tpu_custom_call.1} parent=1 // pred_check_branch
      %27 = sbr.rel (0) target = $region25
    $region24: #{tpu_custom_call.1} parent=1 // pred_region
      _
    $region25: #{tpu_custom_call.1} parent=1 // pred_fallthru
      _
    // Predicated region
    $region26: #{tpu_custom_call.1} parent=1 // pred_check
      _
    $region27: #{tpu_custom_call.1} parent=1 // pred_check_branch
      %29 = sbr.rel (0) target = $region29
    $region28: #{tpu_custom_call.1} parent=1 // pred_region
      _
    $region29: #{tpu_custom_call.1} parent=1 // pred_fallthru
      _
    // Predicated region
    $region30: #{tpu_custom_call.1} parent=1 // pred_check
      _
    $region31: #{tpu_custom_call.1} parent=1 // pred_check_branch
      %31 = sbr.rel (0) target = $region33
    $region32: #{tpu_custom_call.1} parent=1 // pred_region
      _
    $region33: #{tpu_custom_call.1} parent=1 // pred_fallthru
      _
    // Predicated region
    $region34: #{tpu_custom_call.1} parent=1 // pred_check
      _
    $region35: #{tpu_custom_call.1} parent=1 // pred_check_branch
      %33 = sbr.rel (0) target = $region37
    $region36: #{tpu_custom_call.1} parent=1 // pred_region
      _
    $region37: #{tpu_custom_call.1} parent=1 // pred_fallthru
      _
    // Predicated region
    $region38: #{tpu_custom_call.1} parent=1 // pred_check
      _
    $region39: #{tpu_custom_call.1} parent=1 // pred_check_branch
      %35 = sbr.rel (0) target = $region41
    $region40: #{tpu_custom_call.1} parent=1 // pred_region
      _
    $region41: #{tpu_custom_call.1} parent=1 // pred_fallthru
      _
    %v36 = vld [vmem:[%s4] sm:$0xff]
    %v37 = vld [vmem:[%s4 + $0x8] sm:$0xff]
    %v38 = vld [vmem:[%s4 + $0x10] sm:$0x7]
    %v39 = vld [vmem:[%s0] sm:$0xff]
    %v40 = vld [vmem:[%s0 + $0x8] sm:$0xff]
    %v41 = vlaneseq
    %v42 = vand.u32 %v41, 127
    %43 = vset.pattern.permute.xlu0 0
    %44 = vperm.xlu0 %43, %v39
    %v45 = vpop.permute.xlu0 %44
    %46 = vset.pattern.permute.xlu0 0
    %47 = vperm.xlu0 %46, %v40
    %v48 = vpop.permute.xlu0 %47
    %vm49 = vcmp.eq.s32.totalorder %v42, %v45
    %vm50 = vcmp.eq.s32.totalorder %v42, %v48
    %v51 = vsel %vm49, 1, 0
    %v52 = vsel %vm50, 1, 0
    %v53 = vcvt.s32.f32 %v51
    %v54 = vcvt.s32.f32 %v52
    %v55 = vld [vmem:[%s2] sm:$0xff]
    %v56 = vld [vmem:[%s2 + $0x8] sm:$0xff]
    %v57 = vld [vmem:[%s2 + $0x10] sm:$0xff]
    %v58 = vld [vmem:[%s2 + $0x18] sm:$0xff]
    %v59 = vld [vmem:[%s2 + $0x20] sm:$0xff]
    %v60 = vld [vmem:[%s2 + $0x28] sm:$0xff]
    %v61 = vld [vmem:[%s2 + $0x30] sm:$0x3]
    %v62 = vld [vmem:[%s3] sm:$0xff]
    %v63 = vld [vmem:[%s3 + $0x8] sm:$0xff]
    %vm64 = vcmask 408576
    %v66 = vsel %vm64, %v53, 0
    %v69 = vsel %vm64, %v54, 0
    %vm71 = vcmask 1041408
    %v73 = vsel %vm71, %v61, 0
    %75 = vmatprep.subr.mxu0 0.0
    %76 = vmatpush1.msra.mxu0 %v55
    %77 = vmatprep.subr.mxu0 0.0
    %78 = vmatpush1.msra.mxu0 %v56
    %79 = vmatprep.subr.mxu0 0.0
    %80 = vmatpush1.msra.mxu0 %v57
    %81 = vmatprep.subr.mxu0 0.0
    %82 = vmatpush1.msra.mxu0 %v58
    %83 = vmatprep.subr.mxu0 0.0
    %84 = vmatpush1.msra.mxu0 %v59
    %85 = vmatprep.subr.mxu0 0.0
    %86 = vmatpush1.msra.mxu0 %v60
    %87 = vmatprep.subr.mxu0 0.0
    %88 = vmatpush1.msra.mxu0 %v73
    %89 = vmatprep.subr.mxu0 0.0
    %90 = vmatpush1.msra.mxu0 0.0
    %91 = vmatprep.subr.mxu0 0.0
    %92 = vmatpush1.msra.mxu0 0.0
    %93 = vmatprep.subr.mxu0 0.0
    %94 = vmatpush1.msra.mxu0 0.0
    %95 = vmatprep.subr.mxu0 0.0
    %96 = vmatpush1.msra.mxu0 0.0
    %97 = vmatprep.subr.mxu0 0.0
    %98 = vmatpush1.msra.mxu0 0.0
    %99 = vmatprep.subr.mxu0 0.0
    %100 = vmatpush1.msra.mxu0 0.0
    %101 = vmatprep.subr.mxu0 0.0
    %102 = vmatpush1.msra.mxu0 0.0
    %103 = vmatprep.subr.mxu0 0.0
    %104 = vmatpush1.msra.mxu0 0.0
    %105 = vmatprep.subr.mxu0 0.0
    %106 = vmatpush1.msra.mxu0 0.0
    %107 = vmatprep.subr.mxu0 0.0
    %108 = vmatpush1.msra.mxu0 0.0
    %109 = vmatprep.subr.mxu0 0.0
    %110 = vmatpush1.msra.mxu0 0.0
    %111 = vmatprep.subr.mxu0 0.0
    %112 = vmatpush1.msra.mxu0 0.0
    %113 = vmatprep.subr.mxu0 0.0
    %114 = vmatpush1.msra.mxu0 0.0
    %115 = vmatprep.subr.mxu0 0.0
    %116 = vmatpush1.msra.mxu0 0.0
    %117 = vmatprep.subr.mxu0 0.0
    %118 = vmatpush1.msra.mxu0 0.0
    %119 = vmatprep.subr.mxu0 0.0
    %120 = vmatpush1.msra.mxu0 0.0
    %121 = vmatprep.subr.mxu0 0.0
    %122 = vmatpush1.msra.mxu0 0.0
    %123 = vmatprep.subr.mxu0 0.0
    %124 = vmatpush1.msra.mxu0 0.0
    %125 = vmatprep.subr.mxu0 0.0
    %126 = vmatpush1.msra.mxu0 0.0
    %127 = vmatprep.subr.mxu0 0.0
    %128 = vmatpush1.msra.mxu0 0.0
    %129 = vmatprep.subr.mxu0 0.0
    %130 = vmatpush1.msra.mxu0 0.0
    %131 = vmatprep.subr.mxu0 0.0
    %132 = vmatpush1.msra.mxu0 0.0
    %133 = vmatprep.subr.mxu0 0.0
    %134 = vmatpush1.msra.mxu0 0.0
    %135 = vmatprep.subr.mxu0 0.0
    %136 = vmatpush1.msra.mxu0 0.0
    %137 = vmatprep.subr.mxu0 0.0
    %138 = vmatpush1.msra.mxu0 0.0
    %139 = vmatprep.mubr.f32.mxu0 0.0
    %140 = vmatmul.mubr.f32.gmra.mrb[0].mxu0 %v66
    %v141 = vpop.f32.mrb[0].mxu0
    %v142 = vadd.f32 %v62, %v141
    %v143 = vpop.f32.mrb[0].mxu0
    %144 = vmatprep.mubr.f32.mxu0 0.0
    %145 = vmatmul.mubr.f32.gmra.mrb[0].mxu0 %v69
    %v146 = vpop.f32.mrb[0].mxu0
    %v147 = vadd.f32 %v63, %v146
    %v148 = vpop.f32.mrb[0].mxu0
    %149 = vdwg.mxu0
    %vm150 = vcmask 261120
    %v151 = vsel %vm150, %v142, 0.0
    %152 = vadd.xlane.f32.xlu0 %v151
    %v153 = vpop.xlane.xlu0 %152
    %v154 = vsel %vm150, %v147, 0.0
    %155 = vadd.xlane.f32.xlu0 %v154
    %v156 = vpop.xlane.xlu0 %155
    %v157 = vrcp.pop 32.0
    %v158 = vmul.f32 %v153, %v157
    %v159 = vmul.f32 %v156, %v157
    %v160 = vsub.f32 %v142, %v158
    %v161 = vsub.f32 %v147, %v159
    %v162 = vmul.f32 %v160, %v160
    %v163 = vmul.f32 %v161, %v161
    %v164 = vsel %vm150, %v162, 0.0
    %165 = vadd.xlane.f32.xlu0 %v164
    %v166 = vpop.xlane.xlu0 %165
    %v167 = vsel %vm150, %v163, 0.0
    %168 = vadd.xlane.f32.xlu0 %v167
    %v169 = vpop.xlane.xlu0 %168
    %v170 = vmul.f32 %v166, %v157
    %v171 = vmul.f32 %v169, %v157
    %v172 = vadd.f32 %v170, 1e-12
    %v173 = vadd.f32 %v171, 1e-12
    %v174 = vrsqrt.pop %v172
    %v175 = vrsqrt.pop %v173
    %v176 = vmul.f32 %v160, %v174
    %v177 = vmul.f32 %v161, %v175
    %v178 = vlaneseq
    %v179 = vshrl.u32 %v178, 7
    %v180 = vsub.s32 0, %v179
    %v181 = vrot.slane %v36, %v180
    %v182 = vmul.f32 %v176, %v181
    %v183 = vmul.f32 %v177, %v181
    %v184 = vlaneseq
    %v185 = vshrl.u32 %v184, 7
    %v186 = vsub.s32 1, %v185
    %v187 = vrot.slane %v36, %v186
    %v188 = vadd.f32 %v182, %v187
    %v189 = vadd.f32 %v183, %v187
    %v190 = vld [vmem:[%s1] sm:$0x1]
    %v191 = vld [vmem:[%s1 + $0x1] sm:$0x1]
    %v192 = vcvt.s32.f32 %v190
    %v193 = vcvt.s32.f32 %v191
    %v194 = vsub.f32 1.0, %v192
    %v195 = vsub.f32 1.0, %v193
    %v196 = vmul.f32 %v194, -1e+09
    %v197 = vmul.f32 %v195, -1e+09
    %v198 = vld [vmem:[%s5] sm:$0xff]
    %v199 = vld [vmem:[%s5 + $0x8] sm:$0xff]
    %v200 = vld [vmem:[%s5 + $0x10] sm:$0xff]
    %v201 = vld [vmem:[%s5 + $0x18] sm:$0xff]
    %v202 = vlaneseq
    %v203 = vshrl.u32 %v202, 7
    %v204 = vsub.s32 3, %v203
    %v205 = vrot.slane %v36, %v204
    %v207 = vsel %vm150, %v188, 0
    %v210 = vsel %vm150, %v189, 0
    %212 = vmatprep.subr.mxu0 0.0
    %213 = vmatpush1.msra.mxu0 %v198
    %214 = vmatprep.subr.mxu0 0.0
    %215 = vmatpush1.msra.mxu0 %v199
    %216 = vmatprep.subr.mxu0 0.0
    %217 = vmatpush1.msra.mxu0 %v200
    %218 = vmatprep.subr.mxu0 0.0
    %219 = vmatpush1.msra.mxu0 %v201
    %220 = vmatprep.subr.mxu0 0.0
    %221 = vmatpush1.msra.mxu0 0.0
    %222 = vmatprep.subr.mxu0 0.0
    %223 = vmatpush1.msra.mxu0 0.0
    %224 = vmatprep.subr.mxu0 0.0
    %225 = vmatpush1.msra.mxu0 0.0
    %226 = vmatprep.subr.mxu0 0.0
    %227 = vmatpush1.msra.mxu0 0.0
    %228 = vmatprep.subr.mxu0 0.0
    %229 = vmatpush1.msra.mxu0 0.0
    %230 = vmatprep.subr.mxu0 0.0
    %231 = vmatpush1.msra.mxu0 0.0
    %232 = vmatprep.subr.mxu0 0.0
    %233 = vmatpush1.msra.mxu0 0.0
    %234 = vmatprep.subr.mxu0 0.0
    %235 = vmatpush1.msra.mxu0 0.0
    %236 = vmatprep.subr.mxu0 0.0
    %237 = vmatpush1.msra.mxu0 0.0
    %238 = vmatprep.subr.mxu0 0.0
    %239 = vmatpush1.msra.mxu0 0.0
    %240 = vmatprep.subr.mxu0 0.0
    %241 = vmatpush1.msra.mxu0 0.0
    %242 = vmatprep.subr.mxu0 0.0
    %243 = vmatpush1.msra.mxu0 0.0
    %244 = vmatprep.subr.mxu0 0.0
    %245 = vmatpush1.msra.mxu0 0.0
    %246 = vmatprep.subr.mxu0 0.0
    %247 = vmatpush1.msra.mxu0 0.0
    %248 = vmatprep.subr.mxu0 0.0
    %249 = vmatpush1.msra.mxu0 0.0
    %250 = vmatprep.subr.mxu0 0.0
    %251 = vmatpush1.msra.mxu0 0.0
    %252 = vmatprep.subr.mxu0 0.0
    %253 = vmatpush1.msra.mxu0 0.0
    %254 = vmatprep.subr.mxu0 0.0
    %255 = vmatpush1.msra.mxu0 0.0
    %256 = vmatprep.subr.mxu0 0.0
    %257 = vmatpush1.msra.mxu0 0.0
    %258 = vmatprep.subr.mxu0 0.0
    %259 = vmatpush1.msra.mxu0 0.0
    %260 = vmatprep.subr.mxu0 0.0
    %261 = vmatpush1.msra.mxu0 0.0
    %262 = vmatprep.subr.mxu0 0.0
    %263 = vmatpush1.msra.mxu0 0.0
    %264 = vmatprep.subr.mxu0 0.0
    %265 = vmatpush1.msra.mxu0 0.0
    %266 = vmatprep.subr.mxu0 0.0
    %267 = vmatpush1.msra.mxu0 0.0
    %268 = vmatprep.subr.mxu0 0.0
    %269 = vmatpush1.msra.mxu0 0.0
    %270 = vmatprep.subr.mxu0 0.0
    %271 = vmatpush1.msra.mxu0 0.0
    %272 = vmatprep.subr.mxu0 0.0
    %273 = vmatpush1.msra.mxu0 0.0
    %274 = vmatprep.subr.mxu0 0.0
    %275 = vmatpush1.msra.mxu0 0.0
    %276 = vmatprep.mubr.f32.mxu0 0.0
    %277 = vmatmul.mubr.f32.gmra.mrb[0].mxu0 %v207
    %v278 = vpop.f32.mrb[0].mxu0
    %v279 = vadd.f32 %v205, %v278
    %v280 = vpop.f32.mrb[0].mxu0
    %281 = vmatprep.mubr.f32.mxu0 0.0
    %282 = vmatmul.mubr.f32.gmra.mrb[0].mxu0 %v210
    %v283 = vpop.f32.mrb[0].mxu0
    %v284 = vadd.f32 %v205, %v283
    %v285 = vpop.f32.mrb[0].mxu0
    %286 = vdwg.mxu0
    %289 = vrot.lane.b32.xlu0 %v279, 120
    %v290 = vpop.permute.xlu0 %289
    %291 = vrot.lane.b32.xlu0 %v284, 120
    %v292 = vpop.permute.xlu0 %291
    %293 = vrot.lane.b32.xlu0 %v279, 112
    %v294 = vpop.permute.xlu0 %293
    %295 = vrot.lane.b32.xlu0 %v284, 112
    %v296 = vpop.permute.xlu0 %295
    %297 = vrot.lane.b32.xlu0 %v279, 104
    %v298 = vpop.permute.xlu0 %297
    %299 = vrot.lane.b32.xlu0 %v284, 104
    %v300 = vpop.permute.xlu0 %299
    %301 = vrot.lane.b32.xlu0 %v279, 96
    %v302 = vpop.permute.xlu0 %301
    %vm303 = vcmask 64512
    %v304 = vsel %vm303, %v279, 0
    %v306 = vsel %vm303, %v302, 0
    %308 = vmatprep.subr.mxu0 0.0
    %309 = vmatpush1.xpose.msra.mxu0 %v306
    %310 = vmatprep.subr.mxu0 0.0
    %311 = vmatpush1.xpose.msra.mxu0 0.0
    %312 = vmatprep.subr.mxu0 0.0
    %313 = vmatpush1.xpose.msra.mxu0 0.0
    %314 = vmatprep.subr.mxu0 0.0
    %315 = vmatpush1.xpose.msra.mxu0 0.0
    %316 = vmatprep.subr.mxu0 0.0
    %317 = vmatpush1.xpose.msra.mxu0 0.0
    %318 = vmatprep.subr.mxu0 0.0
    %319 = vmatpush1.xpose.msra.mxu0 0.0
    %320 = vmatprep.subr.mxu0 0.0
    %321 = vmatpush1.xpose.msra.mxu0 0.0
    %322 = vmatprep.subr.mxu0 0.0
    %323 = vmatpush1.xpose.msra.mxu0 0.0
    %324 = vmatprep.subr.mxu0 0.0
    %325 = vmatpush1.xpose.msra.mxu0 0.0
    %326 = vmatprep.subr.mxu0 0.0
    %327 = vmatpush1.xpose.msra.mxu0 0.0
    %328 = vmatprep.subr.mxu0 0.0
    %329 = vmatpush1.xpose.msra.mxu0 0.0
    %330 = vmatprep.subr.mxu0 0.0
    %331 = vmatpush1.xpose.msra.mxu0 0.0
    %332 = vmatprep.subr.mxu0 0.0
    %333 = vmatpush1.xpose.msra.mxu0 0.0
    %334 = vmatprep.subr.mxu0 0.0
    %335 = vmatpush1.xpose.msra.mxu0 0.0
    %336 = vmatprep.subr.mxu0 0.0
    %337 = vmatpush1.xpose.msra.mxu0 0.0
    %338 = vmatprep.subr.mxu0 0.0
    %339 = vmatpush1.xpose.msra.mxu0 0.0
    %340 = vmatprep.subr.mxu0 0.0
    %341 = vmatpush1.xpose.msra.mxu0 0.0
    %342 = vmatprep.subr.mxu0 0.0
    %343 = vmatpush1.xpose.msra.mxu0 0.0
    %344 = vmatprep.subr.mxu0 0.0
    %345 = vmatpush1.xpose.msra.mxu0 0.0
    %346 = vmatprep.subr.mxu0 0.0
    %347 = vmatpush1.xpose.msra.mxu0 0.0
    %348 = vmatprep.subr.mxu0 0.0
    %349 = vmatpush1.xpose.msra.mxu0 0.0
    %350 = vmatprep.subr.mxu0 0.0
    %351 = vmatpush1.xpose.msra.mxu0 0.0
    %352 = vmatprep.subr.mxu0 0.0
    %353 = vmatpush1.xpose.msra.mxu0 0.0
    %354 = vmatprep.subr.mxu0 0.0
    %355 = vmatpush1.xpose.msra.mxu0 0.0
    %356 = vmatprep.subr.mxu0 0.0
    %357 = vmatpush1.xpose.msra.mxu0 0.0
    %358 = vmatprep.subr.mxu0 0.0
    %359 = vmatpush1.xpose.msra.mxu0 0.0
    %360 = vmatprep.subr.mxu0 0.0
    %361 = vmatpush1.xpose.msra.mxu0 0.0
    %362 = vmatprep.subr.mxu0 0.0
    %363 = vmatpush1.xpose.msra.mxu0 0.0
    %364 = vmatprep.subr.mxu0 0.0
    %365 = vmatpush1.xpose.msra.mxu0 0.0
    %366 = vmatprep.subr.mxu0 0.0
    %367 = vmatpush1.xpose.msra.mxu0 0.0
    %368 = vmatprep.subr.mxu0 0.0
    %369 = vmatpush1.xpose.msra.mxu0 0.0
    %370 = vmatprep.subr.mxu0 0.0
    %371 = vmatpush1.xpose.msra.mxu0 0.0
    %372 = vmatprep.mubr.f32.mxu0 0.0
    %373 = vmatmul.mubr.f32.gmra.mrb[0].mxu0 %v304
    %v374 = vpop.f32.mrb[0].mxu0
    %v375 = vadd.f32 0.0, %v374
    %v376 = vpop.f32.mrb[0].mxu0
    %377 = vdwg.mxu0
    %378 = vrot.lane.b32.xlu0 %v284, 96
    %v379 = vpop.permute.xlu0 %378
    %v380 = vsel %vm303, %v284, 0
    %v382 = vsel %vm303, %v379, 0
    %384 = vmatprep.subr.mxu0 0.0
    %385 = vmatpush1.xpose.msra.mxu0 %v382
    %386 = vmatprep.subr.mxu0 0.0
    %387 = vmatpush1.xpose.msra.mxu0 0.0
    %388 = vmatprep.subr.mxu0 0.0
    %389 = vmatpush1.xpose.msra.mxu0 0.0
    %390 = vmatprep.subr.mxu0 0.0
    %391 = vmatpush1.xpose.msra.mxu0 0.0
    %392 = vmatprep.subr.mxu0 0.0
    %393 = vmatpush1.xpose.msra.mxu0 0.0
    %394 = vmatprep.subr.mxu0 0.0
    %395 = vmatpush1.xpose.msra.mxu0 0.0
    %396 = vmatprep.subr.mxu0 0.0
    %397 = vmatpush1.xpose.msra.mxu0 0.0
    %398 = vmatprep.subr.mxu0 0.0
    %399 = vmatpush1.xpose.msra.mxu0 0.0
    %400 = vmatprep.subr.mxu0 0.0
    %401 = vmatpush1.xpose.msra.mxu0 0.0
    %402 = vmatprep.subr.mxu0 0.0
    %403 = vmatpush1.xpose.msra.mxu0 0.0
    %404 = vmatprep.subr.mxu0 0.0
    %405 = vmatpush1.xpose.msra.mxu0 0.0
    %406 = vmatprep.subr.mxu0 0.0
    %407 = vmatpush1.xpose.msra.mxu0 0.0
    %408 = vmatprep.subr.mxu0 0.0
    %409 = vmatpush1.xpose.msra.mxu0 0.0
    %410 = vmatprep.subr.mxu0 0.0
    %411 = vmatpush1.xpose.msra.mxu0 0.0
    %412 = vmatprep.subr.mxu0 0.0
    %413 = vmatpush1.xpose.msra.mxu0 0.0
    %414 = vmatprep.subr.mxu0 0.0
    %415 = vmatpush1.xpose.msra.mxu0 0.0
    %416 = vmatprep.subr.mxu0 0.0
    %417 = vmatpush1.xpose.msra.mxu0 0.0
    %418 = vmatprep.subr.mxu0 0.0
    %419 = vmatpush1.xpose.msra.mxu0 0.0
    %420 = vmatprep.subr.mxu0 0.0
    %421 = vmatpush1.xpose.msra.mxu0 0.0
    %422 = vmatprep.subr.mxu0 0.0
    %423 = vmatpush1.xpose.msra.mxu0 0.0
    %424 = vmatprep.subr.mxu0 0.0
    %425 = vmatpush1.xpose.msra.mxu0 0.0
    %426 = vmatprep.subr.mxu0 0.0
    %427 = vmatpush1.xpose.msra.mxu0 0.0
    %428 = vmatprep.subr.mxu0 0.0
    %429 = vmatpush1.xpose.msra.mxu0 0.0
    %430 = vmatprep.subr.mxu0 0.0
    %431 = vmatpush1.xpose.msra.mxu0 0.0
    %432 = vmatprep.subr.mxu0 0.0
    %433 = vmatpush1.xpose.msra.mxu0 0.0
    %434 = vmatprep.subr.mxu0 0.0
    %435 = vmatpush1.xpose.msra.mxu0 0.0
    %436 = vmatprep.subr.mxu0 0.0
    %437 = vmatpush1.xpose.msra.mxu0 0.0
    %438 = vmatprep.subr.mxu0 0.0
    %439 = vmatpush1.xpose.msra.mxu0 0.0
    %440 = vmatprep.subr.mxu0 0.0
    %441 = vmatpush1.xpose.msra.mxu0 0.0
    %442 = vmatprep.subr.mxu0 0.0
    %443 = vmatpush1.xpose.msra.mxu0 0.0
    %444 = vmatprep.subr.mxu0 0.0
    %445 = vmatpush1.xpose.msra.mxu0 0.0
    %446 = vmatprep.subr.mxu0 0.0
    %447 = vmatpush1.xpose.msra.mxu0 0.0
    %448 = vmatprep.mubr.f32.mxu0 0.0
    %449 = vmatmul.mubr.f32.gmra.mrb[0].mxu0 %v380
    %v450 = vpop.f32.mrb[0].mxu0
    %v451 = vadd.f32 0.0, %v450
    %v452 = vpop.f32.mrb[0].mxu0
    %453 = vdwg.mxu0
    %454 = vrot.lane.b32.xlu0 %v290, 96
    %v455 = vpop.permute.xlu0 %454
    %v456 = vsel %vm303, %v290, 0
    %v458 = vsel %vm303, %v455, 0
    %460 = vmatprep.subr.mxu0 0.0
    %461 = vmatpush1.xpose.msra.mxu0 %v458
    %462 = vmatprep.subr.mxu0 0.0
    %463 = vmatpush1.xpose.msra.mxu0 0.0
    %464 = vmatprep.subr.mxu0 0.0
    %465 = vmatpush1.xpose.msra.mxu0 0.0
    %466 = vmatprep.subr.mxu0 0.0
    %467 = vmatpush1.xpose.msra.mxu0 0.0
    %468 = vmatprep.subr.mxu0 0.0
    %469 = vmatpush1.xpose.msra.mxu0 0.0
    %470 = vmatprep.subr.mxu0 0.0
    %471 = vmatpush1.xpose.msra.mxu0 0.0
    %472 = vmatprep.subr.mxu0 0.0
    %473 = vmatpush1.xpose.msra.mxu0 0.0
    %474 = vmatprep.subr.mxu0 0.0
    %475 = vmatpush1.xpose.msra.mxu0 0.0
    %476 = vmatprep.subr.mxu0 0.0
    %477 = vmatpush1.xpose.msra.mxu0 0.0
    %478 = vmatprep.subr.mxu0 0.0
    %479 = vmatpush1.xpose.msra.mxu0 0.0
    %480 = vmatprep.subr.mxu0 0.0
    %481 = vmatpush1.xpose.msra.mxu0 0.0
    %482 = vmatprep.subr.mxu0 0.0
    %483 = vmatpush1.xpose.msra.mxu0 0.0
    %484 = vmatprep.subr.mxu0 0.0
    %485 = vmatpush1.xpose.msra.mxu0 0.0
    %486 = vmatprep.subr.mxu0 0.0
    %487 = vmatpush1.xpose.msra.mxu0 0.0
    %488 = vmatprep.subr.mxu0 0.0
    %489 = vmatpush1.xpose.msra.mxu0 0.0
    %490 = vmatprep.subr.mxu0 0.0
    %491 = vmatpush1.xpose.msra.mxu0 0.0
    %492 = vmatprep.subr.mxu0 0.0
    %493 = vmatpush1.xpose.msra.mxu0 0.0
    %494 = vmatprep.subr.mxu0 0.0
    %495 = vmatpush1.xpose.msra.mxu0 0.0
    %496 = vmatprep.subr.mxu0 0.0
    %497 = vmatpush1.xpose.msra.mxu0 0.0
    %498 = vmatprep.subr.mxu0 0.0
    %499 = vmatpush1.xpose.msra.mxu0 0.0
    %500 = vmatprep.subr.mxu0 0.0
    %501 = vmatpush1.xpose.msra.mxu0 0.0
    %502 = vmatprep.subr.mxu0 0.0
    %503 = vmatpush1.xpose.msra.mxu0 0.0
    %504 = vmatprep.subr.mxu0 0.0
    %505 = vmatpush1.xpose.msra.mxu0 0.0
    %506 = vmatprep.subr.mxu0 0.0
    %507 = vmatpush1.xpose.msra.mxu0 0.0
    %508 = vmatprep.subr.mxu0 0.0
    %509 = vmatpush1.xpose.msra.mxu0 0.0
    %510 = vmatprep.subr.mxu0 0.0
    %511 = vmatpush1.xpose.msra.mxu0 0.0
    %512 = vmatprep.subr.mxu0 0.0
    %513 = vmatpush1.xpose.msra.mxu0 0.0
    %514 = vmatprep.subr.mxu0 0.0
    %515 = vmatpush1.xpose.msra.mxu0 0.0
    %516 = vmatprep.subr.mxu0 0.0
    %517 = vmatpush1.xpose.msra.mxu0 0.0
    %518 = vmatprep.subr.mxu0 0.0
    %519 = vmatpush1.xpose.msra.mxu0 0.0
    %520 = vmatprep.subr.mxu0 0.0
    %521 = vmatpush1.xpose.msra.mxu0 0.0
    %522 = vmatprep.subr.mxu0 0.0
    %523 = vmatpush1.xpose.msra.mxu0 0.0
    %524 = vmatprep.mubr.f32.mxu0 0.0
    %525 = vmatmul.mubr.f32.gmra.mrb[0].mxu0 %v456
    %v526 = vpop.f32.mrb[0].mxu0
    %v527 = vadd.f32 0.0, %v526
    %v528 = vpop.f32.mrb[0].mxu0
    %529 = vdwg.mxu0
    %530 = vrot.lane.b32.xlu0 %v292, 96
    %v531 = vpop.permute.xlu0 %530
    %v532 = vsel %vm303, %v292, 0
    %v534 = vsel %vm303, %v531, 0
    %536 = vmatprep.subr.mxu0 0.0
    %537 = vmatpush1.xpose.msra.mxu0 %v534
    %538 = vmatprep.subr.mxu0 0.0
    %539 = vmatpush1.xpose.msra.mxu0 0.0
    %540 = vmatprep.subr.mxu0 0.0
    %541 = vmatpush1.xpose.msra.mxu0 0.0
    %542 = vmatprep.subr.mxu0 0.0
    %543 = vmatpush1.xpose.msra.mxu0 0.0
    %544 = vmatprep.subr.mxu0 0.0
    %545 = vmatpush1.xpose.msra.mxu0 0.0
    %546 = vmatprep.subr.mxu0 0.0
    %547 = vmatpush1.xpose.msra.mxu0 0.0
    %548 = vmatprep.subr.mxu0 0.0
    %549 = vmatpush1.xpose.msra.mxu0 0.0
    %550 = vmatprep.subr.mxu0 0.0
    %551 = vmatpush1.xpose.msra.mxu0 0.0
    %552 = vmatprep.subr.mxu0 0.0
    %553 = vmatpush1.xpose.msra.mxu0 0.0
    %554 = vmatprep.subr.mxu0 0.0
    %555 = vmatpush1.xpose.msra.mxu0 0.0
    %556 = vmatprep.subr.mxu0 0.0
    %557 = vmatpush1.xpose.msra.mxu0 0.0
    %558 = vmatprep.subr.mxu0 0.0
    %559 = vmatpush1.xpose.msra.mxu0 0.0
    %560 = vmatprep.subr.mxu0 0.0
    %561 = vmatpush1.xpose.msra.mxu0 0.0
    %562 = vmatprep.subr.mxu0 0.0
    %563 = vmatpush1.xpose.msra.mxu0 0.0
    %564 = vmatprep.subr.mxu0 0.0
    %565 = vmatpush1.xpose.msra.mxu0 0.0
    %566 = vmatprep.subr.mxu0 0.0
    %567 = vmatpush1.xpose.msra.mxu0 0.0
    %568 = vmatprep.subr.mxu0 0.0
    %569 = vmatpush1.xpose.msra.mxu0 0.0
    %570 = vmatprep.subr.mxu0 0.0
    %571 = vmatpush1.xpose.msra.mxu0 0.0
    %572 = vmatprep.subr.mxu0 0.0
    %573 = vmatpush1.xpose.msra.mxu0 0.0
    %574 = vmatprep.subr.mxu0 0.0
    %575 = vmatpush1.xpose.msra.mxu0 0.0
    %576 = vmatprep.subr.mxu0 0.0
    %577 = vmatpush1.xpose.msra.mxu0 0.0
    %578 = vmatprep.subr.mxu0 0.0
    %579 = vmatpush1.xpose.msra.mxu0 0.0
    %580 = vmatprep.subr.mxu0 0.0
    %581 = vmatpush1.xpose.msra.mxu0 0.0
    %582 = vmatprep.subr.mxu0 0.0
    %583 = vmatpush1.xpose.msra.mxu0 0.0
    %584 = vmatprep.subr.mxu0 0.0
    %585 = vmatpush1.xpose.msra.mxu0 0.0
    %586 = vmatprep.subr.mxu0 0.0
    %587 = vmatpush1.xpose.msra.mxu0 0.0
    %588 = vmatprep.subr.mxu0 0.0
    %589 = vmatpush1.xpose.msra.mxu0 0.0
    %590 = vmatprep.subr.mxu0 0.0
    %591 = vmatpush1.xpose.msra.mxu0 0.0
    %592 = vmatprep.subr.mxu0 0.0
    %593 = vmatpush1.xpose.msra.mxu0 0.0
    %594 = vmatprep.subr.mxu0 0.0
    %595 = vmatpush1.xpose.msra.mxu0 0.0
    %596 = vmatprep.subr.mxu0 0.0
    %597 = vmatpush1.xpose.msra.mxu0 0.0
    %598 = vmatprep.subr.mxu0 0.0
    %599 = vmatpush1.xpose.msra.mxu0 0.0
    %600 = vmatprep.mubr.f32.mxu0 0.0
    %601 = vmatmul.mubr.f32.gmra.mrb[0].mxu0 %v532
    %v602 = vpop.f32.mrb[0].mxu0
    %v603 = vadd.f32 0.0, %v602
    %v604 = vpop.f32.mrb[0].mxu0
    %605 = vdwg.mxu0
    %606 = vrot.lane.b32.xlu0 %v294, 96
    %v607 = vpop.permute.xlu0 %606
    %v608 = vsel %vm303, %v294, 0
    %v610 = vsel %vm303, %v607, 0
    %612 = vmatprep.subr.mxu0 0.0
    %613 = vmatpush1.xpose.msra.mxu0 %v610
    %614 = vmatprep.subr.mxu0 0.0
    %615 = vmatpush1.xpose.msra.mxu0 0.0
    %616 = vmatprep.subr.mxu0 0.0
    %617 = vmatpush1.xpose.msra.mxu0 0.0
    %618 = vmatprep.subr.mxu0 0.0
    %619 = vmatpush1.xpose.msra.mxu0 0.0
    %620 = vmatprep.subr.mxu0 0.0
    %621 = vmatpush1.xpose.msra.mxu0 0.0
    %622 = vmatprep.subr.mxu0 0.0
    %623 = vmatpush1.xpose.msra.mxu0 0.0
    %624 = vmatprep.subr.mxu0 0.0
    %625 = vmatpush1.xpose.msra.mxu0 0.0
    %626 = vmatprep.subr.mxu0 0.0
    %627 = vmatpush1.xpose.msra.mxu0 0.0
    %628 = vmatprep.subr.mxu0 0.0
    %629 = vmatpush1.xpose.msra.mxu0 0.0
    %630 = vmatprep.subr.mxu0 0.0
    %631 = vmatpush1.xpose.msra.mxu0 0.0
    %632 = vmatprep.subr.mxu0 0.0
    %633 = vmatpush1.xpose.msra.mxu0 0.0
    %634 = vmatprep.subr.mxu0 0.0
    %635 = vmatpush1.xpose.msra.mxu0 0.0
    %636 = vmatprep.subr.mxu0 0.0
    %637 = vmatpush1.xpose.msra.mxu0 0.0
    %638 = vmatprep.subr.mxu0 0.0
    %639 = vmatpush1.xpose.msra.mxu0 0.0
    %640 = vmatprep.subr.mxu0 0.0
    %641 = vmatpush1.xpose.msra.mxu0 0.0
    %642 = vmatprep.subr.mxu0 0.0
    %643 = vmatpush1.xpose.msra.mxu0 0.0
    %644 = vmatprep.subr.mxu0 0.0
    %645 = vmatpush1.xpose.msra.mxu0 0.0
    %646 = vmatprep.subr.mxu0 0.0
    %647 = vmatpush1.xpose.msra.mxu0 0.0
    %648 = vmatprep.subr.mxu0 0.0
    %649 = vmatpush1.xpose.msra.mxu0 0.0
    %650 = vmatprep.subr.mxu0 0.0
    %651 = vmatpush1.xpose.msra.mxu0 0.0
    %652 = vmatprep.subr.mxu0 0.0
    %653 = vmatpush1.xpose.msra.mxu0 0.0
    %654 = vmatprep.subr.mxu0 0.0
    %655 = vmatpush1.xpose.msra.mxu0 0.0
    %656 = vmatprep.subr.mxu0 0.0
    %657 = vmatpush1.xpose.msra.mxu0 0.0
    %658 = vmatprep.subr.mxu0 0.0
    %659 = vmatpush1.xpose.msra.mxu0 0.0
    %660 = vmatprep.subr.mxu0 0.0
    %661 = vmatpush1.xpose.msra.mxu0 0.0
    %662 = vmatprep.subr.mxu0 0.0
    %663 = vmatpush1.xpose.msra.mxu0 0.0
    %664 = vmatprep.subr.mxu0 0.0
    %665 = vmatpush1.xpose.msra.mxu0 0.0
    %666 = vmatprep.subr.mxu0 0.0
    %667 = vmatpush1.xpose.msra.mxu0 0.0
    %668 = vmatprep.subr.mxu0 0.0
    %669 = vmatpush1.xpose.msra.mxu0 0.0
    %670 = vmatprep.subr.mxu0 0.0
    %671 = vmatpush1.xpose.msra.mxu0 0.0
    %672 = vmatprep.subr.mxu0 0.0
    %673 = vmatpush1.xpose.msra.mxu0 0.0
    %674 = vmatprep.subr.mxu0 0.0
    %675 = vmatpush1.xpose.msra.mxu0 0.0
    %676 = vmatprep.mubr.f32.mxu0 0.0
    %677 = vmatmul.mubr.f32.gmra.mrb[0].mxu0 %v608
    %v678 = vpop.f32.mrb[0].mxu0
    %v679 = vadd.f32 0.0, %v678
    %v680 = vpop.f32.mrb[0].mxu0
    %681 = vdwg.mxu0
    %682 = vrot.lane.b32.xlu0 %v296, 96
    %v683 = vpop.permute.xlu0 %682
    %v684 = vsel %vm303, %v296, 0
    %v686 = vsel %vm303, %v683, 0
    %688 = vmatprep.subr.mxu0 0.0
    %689 = vmatpush1.xpose.msra.mxu0 %v686
    %690 = vmatprep.subr.mxu0 0.0
    %691 = vmatpush1.xpose.msra.mxu0 0.0
    %692 = vmatprep.subr.mxu0 0.0
    %693 = vmatpush1.xpose.msra.mxu0 0.0
    %694 = vmatprep.subr.mxu0 0.0
    %695 = vmatpush1.xpose.msra.mxu0 0.0
    %696 = vmatprep.subr.mxu0 0.0
    %697 = vmatpush1.xpose.msra.mxu0 0.0
    %698 = vmatprep.subr.mxu0 0.0
    %699 = vmatpush1.xpose.msra.mxu0 0.0
    %700 = vmatprep.subr.mxu0 0.0
    %701 = vmatpush1.xpose.msra.mxu0 0.0
    %702 = vmatprep.subr.mxu0 0.0
    %703 = vmatpush1.xpose.msra.mxu0 0.0
    %704 = vmatprep.subr.mxu0 0.0
    %705 = vmatpush1.xpose.msra.mxu0 0.0
    %706 = vmatprep.subr.mxu0 0.0
    %707 = vmatpush1.xpose.msra.mxu0 0.0
    %708 = vmatprep.subr.mxu0 0.0
    %709 = vmatpush1.xpose.msra.mxu0 0.0
    %710 = vmatprep.subr.mxu0 0.0
    %711 = vmatpush1.xpose.msra.mxu0 0.0
    %712 = vmatprep.subr.mxu0 0.0
    %713 = vmatpush1.xpose.msra.mxu0 0.0
    %714 = vmatprep.subr.mxu0 0.0
    %715 = vmatpush1.xpose.msra.mxu0 0.0
    %716 = vmatprep.subr.mxu0 0.0
    %717 = vmatpush1.xpose.msra.mxu0 0.0
    %718 = vmatprep.subr.mxu0 0.0
    %719 = vmatpush1.xpose.msra.mxu0 0.0
    %720 = vmatprep.subr.mxu0 0.0
    %721 = vmatpush1.xpose.msra.mxu0 0.0
    %722 = vmatprep.subr.mxu0 0.0
    %723 = vmatpush1.xpose.msra.mxu0 0.0
    %724 = vmatprep.subr.mxu0 0.0
    %725 = vmatpush1.xpose.msra.mxu0 0.0
    %726 = vmatprep.subr.mxu0 0.0
    %727 = vmatpush1.xpose.msra.mxu0 0.0
    %728 = vmatprep.subr.mxu0 0.0
    %729 = vmatpush1.xpose.msra.mxu0 0.0
    %730 = vmatprep.subr.mxu0 0.0
    %731 = vmatpush1.xpose.msra.mxu0 0.0
    %732 = vmatprep.subr.mxu0 0.0
    %733 = vmatpush1.xpose.msra.mxu0 0.0
    %734 = vmatprep.subr.mxu0 0.0
    %735 = vmatpush1.xpose.msra.mxu0 0.0
    %736 = vmatprep.subr.mxu0 0.0
    %737 = vmatpush1.xpose.msra.mxu0 0.0
    %738 = vmatprep.subr.mxu0 0.0
    %739 = vmatpush1.xpose.msra.mxu0 0.0
    %740 = vmatprep.subr.mxu0 0.0
    %741 = vmatpush1.xpose.msra.mxu0 0.0
    %742 = vmatprep.subr.mxu0 0.0
    %743 = vmatpush1.xpose.msra.mxu0 0.0
    %744 = vmatprep.subr.mxu0 0.0
    %745 = vmatpush1.xpose.msra.mxu0 0.0
    %746 = vmatprep.subr.mxu0 0.0
    %747 = vmatpush1.xpose.msra.mxu0 0.0
    %748 = vmatprep.subr.mxu0 0.0
    %749 = vmatpush1.xpose.msra.mxu0 0.0
    %750 = vmatprep.subr.mxu0 0.0
    %751 = vmatpush1.xpose.msra.mxu0 0.0
    %752 = vmatprep.mubr.f32.mxu0 0.0
    %753 = vmatmul.mubr.f32.gmra.mrb[0].mxu0 %v684
    %v754 = vpop.f32.mrb[0].mxu0
    %v755 = vadd.f32 0.0, %v754
    %v756 = vpop.f32.mrb[0].mxu0
    %757 = vdwg.mxu0
    %758 = vrot.lane.b32.xlu0 %v298, 96
    %v759 = vpop.permute.xlu0 %758
    %v760 = vsel %vm303, %v298, 0
    %v762 = vsel %vm303, %v759, 0
    %764 = vmatprep.subr.mxu0 0.0
    %765 = vmatpush1.xpose.msra.mxu0 %v762
    %766 = vmatprep.subr.mxu0 0.0
    %767 = vmatpush1.xpose.msra.mxu0 0.0
    %768 = vmatprep.subr.mxu0 0.0
    %769 = vmatpush1.xpose.msra.mxu0 0.0
    %770 = vmatprep.subr.mxu0 0.0
    %771 = vmatpush1.xpose.msra.mxu0 0.0
    %772 = vmatprep.subr.mxu0 0.0
    %773 = vmatpush1.xpose.msra.mxu0 0.0
    %774 = vmatprep.subr.mxu0 0.0
    %775 = vmatpush1.xpose.msra.mxu0 0.0
    %776 = vmatprep.subr.mxu0 0.0
    %777 = vmatpush1.xpose.msra.mxu0 0.0
    %778 = vmatprep.subr.mxu0 0.0
    %779 = vmatpush1.xpose.msra.mxu0 0.0
    %780 = vmatprep.subr.mxu0 0.0
    %781 = vmatpush1.xpose.msra.mxu0 0.0
    %782 = vmatprep.subr.mxu0 0.0
    %783 = vmatpush1.xpose.msra.mxu0 0.0
    %784 = vmatprep.subr.mxu0 0.0
    %785 = vmatpush1.xpose.msra.mxu0 0.0
    %786 = vmatprep.subr.mxu0 0.0
    %787 = vmatpush1.xpose.msra.mxu0 0.0
    %788 = vmatprep.subr.mxu0 0.0
    %789 = vmatpush1.xpose.msra.mxu0 0.0
    %790 = vmatprep.subr.mxu0 0.0
    %791 = vmatpush1.xpose.msra.mxu0 0.0
    %792 = vmatprep.subr.mxu0 0.0
    %793 = vmatpush1.xpose.msra.mxu0 0.0
    %794 = vmatprep.subr.mxu0 0.0
    %795 = vmatpush1.xpose.msra.mxu0 0.0
    %796 = vmatprep.subr.mxu0 0.0
    %797 = vmatpush1.xpose.msra.mxu0 0.0
    %798 = vmatprep.subr.mxu0 0.0
    %799 = vmatpush1.xpose.msra.mxu0 0.0
    %800 = vmatprep.subr.mxu0 0.0
    %801 = vmatpush1.xpose.msra.mxu0 0.0
    %802 = vmatprep.subr.mxu0 0.0
    %803 = vmatpush1.xpose.msra.mxu0 0.0
    %804 = vmatprep.subr.mxu0 0.0
    %805 = vmatpush1.xpose.msra.mxu0 0.0
    %806 = vmatprep.subr.mxu0 0.0
    %807 = vmatpush1.xpose.msra.mxu0 0.0
    %808 = vmatprep.subr.mxu0 0.0
    %809 = vmatpush1.xpose.msra.mxu0 0.0
    %810 = vmatprep.subr.mxu0 0.0
    %811 = vmatpush1.xpose.msra.mxu0 0.0
    %812 = vmatprep.subr.mxu0 0.0
    %813 = vmatpush1.xpose.msra.mxu0 0.0
    %814 = vmatprep.subr.mxu0 0.0
    %815 = vmatpush1.xpose.msra.mxu0 0.0
    %816 = vmatprep.subr.mxu0 0.0
    %817 = vmatpush1.xpose.msra.mxu0 0.0
    %818 = vmatprep.subr.mxu0 0.0
    %819 = vmatpush1.xpose.msra.mxu0 0.0
    %820 = vmatprep.subr.mxu0 0.0
    %821 = vmatpush1.xpose.msra.mxu0 0.0
    %822 = vmatprep.subr.mxu0 0.0
    %823 = vmatpush1.xpose.msra.mxu0 0.0
    %824 = vmatprep.subr.mxu0 0.0
    %825 = vmatpush1.xpose.msra.mxu0 0.0
    %826 = vmatprep.subr.mxu0 0.0
    %827 = vmatpush1.xpose.msra.mxu0 0.0
    %828 = vmatprep.mubr.f32.mxu0 0.0
    %829 = vmatmul.mubr.f32.gmra.mrb[0].mxu0 %v760
    %v830 = vpop.f32.mrb[0].mxu0
    %v831 = vadd.f32 0.0, %v830
    %v832 = vpop.f32.mrb[0].mxu0
    %833 = vdwg.mxu0
    %834 = vrot.lane.b32.xlu0 %v300, 96
    %v835 = vpop.permute.xlu0 %834
    %v836 = vsel %vm303, %v300, 0
    %v838 = vsel %vm303, %v835, 0
    %840 = vmatprep.subr.mxu0 0.0
    %841 = vmatpush1.xpose.msra.mxu0 %v838
    %842 = vmatprep.subr.mxu0 0.0
    %843 = vmatpush1.xpose.msra.mxu0 0.0
    %844 = vmatprep.subr.mxu0 0.0
    %845 = vmatpush1.xpose.msra.mxu0 0.0
    %846 = vmatprep.subr.mxu0 0.0
    %847 = vmatpush1.xpose.msra.mxu0 0.0
    %848 = vmatprep.subr.mxu0 0.0
    %849 = vmatpush1.xpose.msra.mxu0 0.0
    %850 = vmatprep.subr.mxu0 0.0
    %851 = vmatpush1.xpose.msra.mxu0 0.0
    %852 = vmatprep.subr.mxu0 0.0
    %853 = vmatpush1.xpose.msra.mxu0 0.0
    %854 = vmatprep.subr.mxu0 0.0
    %855 = vmatpush1.xpose.msra.mxu0 0.0
    %856 = vmatprep.subr.mxu0 0.0
    %857 = vmatpush1.xpose.msra.mxu0 0.0
    %858 = vmatprep.subr.mxu0 0.0
    %859 = vmatpush1.xpose.msra.mxu0 0.0
    %860 = vmatprep.subr.mxu0 0.0
    %861 = vmatpush1.xpose.msra.mxu0 0.0
    %862 = vmatprep.subr.mxu0 0.0
    %863 = vmatpush1.xpose.msra.mxu0 0.0
    %864 = vmatprep.subr.mxu0 0.0
    %865 = vmatpush1.xpose.msra.mxu0 0.0
    %866 = vmatprep.subr.mxu0 0.0
    %867 = vmatpush1.xpose.msra.mxu0 0.0
    %868 = vmatprep.subr.mxu0 0.0
    %869 = vmatpush1.xpose.msra.mxu0 0.0
    %870 = vmatprep.subr.mxu0 0.0
    %871 = vmatpush1.xpose.msra.mxu0 0.0
    %872 = vmatprep.subr.mxu0 0.0
    %873 = vmatpush1.xpose.msra.mxu0 0.0
    %874 = vmatprep.subr.mxu0 0.0
    %875 = vmatpush1.xpose.msra.mxu0 0.0
    %876 = vmatprep.subr.mxu0 0.0
    %877 = vmatpush1.xpose.msra.mxu0 0.0
    %878 = vmatprep.subr.mxu0 0.0
    %879 = vmatpush1.xpose.msra.mxu0 0.0
    %880 = vmatprep.subr.mxu0 0.0
    %881 = vmatpush1.xpose.msra.mxu0 0.0
    %882 = vmatprep.subr.mxu0 0.0
    %883 = vmatpush1.xpose.msra.mxu0 0.0
    %884 = vmatprep.subr.mxu0 0.0
    %885 = vmatpush1.xpose.msra.mxu0 0.0
    %886 = vmatprep.subr.mxu0 0.0
    %887 = vmatpush1.xpose.msra.mxu0 0.0
    %888 = vmatprep.subr.mxu0 0.0
    %889 = vmatpush1.xpose.msra.mxu0 0.0
    %890 = vmatprep.subr.mxu0 0.0
    %891 = vmatpush1.xpose.msra.mxu0 0.0
    %892 = vmatprep.subr.mxu0 0.0
    %893 = vmatpush1.xpose.msra.mxu0 0.0
    %894 = vmatprep.subr.mxu0 0.0
    %895 = vmatpush1.xpose.msra.mxu0 0.0
    %896 = vmatprep.subr.mxu0 0.0
    %897 = vmatpush1.xpose.msra.mxu0 0.0
    %898 = vmatprep.subr.mxu0 0.0
    %899 = vmatpush1.xpose.msra.mxu0 0.0
    %900 = vmatprep.subr.mxu0 0.0
    %901 = vmatpush1.xpose.msra.mxu0 0.0
    %902 = vmatprep.subr.mxu0 0.0
    %903 = vmatpush1.xpose.msra.mxu0 0.0
    %904 = vmatprep.mubr.f32.mxu0 0.0
    %905 = vmatmul.mubr.f32.gmra.mrb[0].mxu0 %v836
    %v906 = vpop.f32.mrb[0].mxu0
    %v907 = vadd.f32 0.0, %v906
    %v908 = vpop.f32.mrb[0].mxu0
    %909 = vdwg.mxu0
    %v910 = vmul.f32 %v375, 0.35355338
    %v911 = vmul.f32 %v451, 0.35355338
    %v912 = vmul.f32 %v527, 0.35355338
    %v913 = vmul.f32 %v603, 0.35355338
    %v914 = vmul.f32 %v679, 0.35355338
    %v915 = vmul.f32 %v755, 0.35355338
    %v916 = vmul.f32 %v831, 0.35355338
    %v917 = vmul.f32 %v907, 0.35355338
    %v920 = vlaneseq
    %v921 = vshrl.u32 %v920, 7
    %v922 = vsub.s32 0, %v921
    %v923 = vrot.slane %v196, %v922
    %v924 = vlaneseq
    %v925 = vshrl.u32 %v924, 7
    %v926 = vsub.s32 0, %v925
    %v927 = vrot.slane %v197, %v926
    %v930 = vadd.f32 %v910, %v923
    %v931 = vadd.f32 %v911, %v927
    %v932 = vadd.f32 %v912, %v923
    %v933 = vadd.f32 %v913, %v927
    %v934 = vadd.f32 %v914, %v923
    %v935 = vadd.f32 %v915, %v927
    %v936 = vadd.f32 %v916, %v923
    %v937 = vadd.f32 %v917, %v927
    %v938 = vsel %vm303, %v930, -inf
    %939 = vmax.xlane.f32.xlu0 %v938
    %v940 = vpop.xlane.xlu0 %939
    %v941 = vsel %vm303, %v931, -inf
    %942 = vmax.xlane.f32.xlu0 %v941
    %v943 = vpop.xlane.xlu0 %942
    %v944 = vsel %vm303, %v932, -inf
    %945 = vmax.xlane.f32.xlu0 %v944
    %v946 = vpop.xlane.xlu0 %945
    %v947 = vsel %vm303, %v933, -inf
    %948 = vmax.xlane.f32.xlu0 %v947
    %v949 = vpop.xlane.xlu0 %948
    %v950 = vsel %vm303, %v934, -inf
    %951 = vmax.xlane.f32.xlu0 %v950
    %v952 = vpop.xlane.xlu0 %951
    %v953 = vsel %vm303, %v935, -inf
    %954 = vmax.xlane.f32.xlu0 %v953
    %v955 = vpop.xlane.xlu0 %954
    %v956 = vsel %vm303, %v936, -inf
    %957 = vmax.xlane.f32.xlu0 %v956
    %v958 = vpop.xlane.xlu0 %957
    %v959 = vsel %vm303, %v937, -inf
    %960 = vmax.xlane.f32.xlu0 %v959
    %v961 = vpop.xlane.xlu0 %960
    %v962 = vsub.f32 %v930, %v940
    %v963 = vsub.f32 %v931, %v943
    %v964 = vsub.f32 %v932, %v946
    %v965 = vsub.f32 %v933, %v949
    %v966 = vsub.f32 %v934, %v952
    %v967 = vsub.f32 %v935, %v955
    %v968 = vsub.f32 %v936, %v958
    %v969 = vsub.f32 %v937, %v961
    %v970 = vmul.f32 %v962, 1.442695
    %v971 = vpow.pop %v970
    %v972 = vmul.f32 %v963, 1.442695
    %v973 = vpow.pop %v972
    %v974 = vmul.f32 %v964, 1.442695
    %v975 = vpow.pop %v974
    %v976 = vmul.f32 %v965, 1.442695
    %v977 = vpow.pop %v976
    %v978 = vmul.f32 %v966, 1.442695
    %v979 = vpow.pop %v978
    %v980 = vmul.f32 %v967, 1.442695
    %v981 = vpow.pop %v980
    %v982 = vmul.f32 %v968, 1.442695
    %v983 = vpow.pop %v982
    %v984 = vmul.f32 %v969, 1.442695
    %v985 = vpow.pop %v984
    %v986 = vsel %vm303, %v971, 0.0
    %987 = vadd.xlane.f32.xlu0 %v986
    %v988 = vpop.xlane.xlu0 %987
    %v989 = vsel %vm303, %v973, 0.0
    %990 = vadd.xlane.f32.xlu0 %v989
    %v991 = vpop.xlane.xlu0 %990
    %v992 = vsel %vm303, %v975, 0.0
    %993 = vadd.xlane.f32.xlu0 %v992
    %v994 = vpop.xlane.xlu0 %993
    %v995 = vsel %vm303, %v977, 0.0
    %996 = vadd.xlane.f32.xlu0 %v995
    %v997 = vpop.xlane.xlu0 %996
    %v998 = vsel %vm303, %v979, 0.0
    %999 = vadd.xlane.f32.xlu0 %v998
    %v1000 = vpop.xlane.xlu0 %999
    %v1001 = vsel %vm303, %v981, 0.0
    %1002 = vadd.xlane.f32.xlu0 %v1001
    %v1003 = vpop.xlane.xlu0 %1002
    %v1004 = vsel %vm303, %v983, 0.0
    %1005 = vadd.xlane.f32.xlu0 %v1004
    %v1006 = vpop.xlane.xlu0 %1005
    %v1007 = vsel %vm303, %v985, 0.0
    %1008 = vadd.xlane.f32.xlu0 %v1007
    %v1009 = vpop.xlane.xlu0 %1008
    %v1010 = vrcp.pop %v988
    %v1011 = vrcp.pop %v991
    %v1012 = vrcp.pop %v994
    %v1013 = vrcp.pop %v997
    %v1014 = vrcp.pop %v1000
    %v1015 = vrcp.pop %v1003
    %v1016 = vrcp.pop %v1006
    %v1017 = vrcp.pop %v1009
    %v1018 = vmul.f32 %v971, %v1010
    %v1019 = vmul.f32 %v973, %v1011
    %v1020 = vmul.f32 %v975, %v1012
    %v1021 = vmul.f32 %v977, %v1013
    %v1022 = vmul.f32 %v979, %v1014
    %v1023 = vmul.f32 %v981, %v1015
    %v1024 = vmul.f32 %v983, %v1016
    %v1025 = vmul.f32 %v985, %v1017
    %1026 = vrot.lane.b32.xlu0 %v279, 64
    %v1027 = vpop.permute.xlu0 %1026
    %v1030 = vsel %vm303, %v1018, 0
    %1032 = vmatprep.subr.mxu0 0.0
    %1033 = vmatpush1.msra.mxu0 %v1027
    %1034 = vmatprep.subr.mxu0 0.0
    %1035 = vmatpush1.msra.mxu0 0.0
    %1036 = vmatprep.subr.mxu0 0.0
    %1037 = vmatpush1.msra.mxu0 0.0
    %1038 = vmatprep.subr.mxu0 0.0
    %1039 = vmatpush1.msra.mxu0 0.0
    %1040 = vmatprep.subr.mxu0 0.0
    %1041 = vmatpush1.msra.mxu0 0.0
    %1042 = vmatprep.subr.mxu0 0.0
    %1043 = vmatpush1.msra.mxu0 0.0
    %1044 = vmatprep.subr.mxu0 0.0
    %1045 = vmatpush1.msra.mxu0 0.0
    %1046 = vmatprep.subr.mxu0 0.0
    %1047 = vmatpush1.msra.mxu0 0.0
    %1048 = vmatprep.subr.mxu0 0.0
    %1049 = vmatpush1.msra.mxu0 0.0
    %1050 = vmatprep.subr.mxu0 0.0
    %1051 = vmatpush1.msra.mxu0 0.0
    %1052 = vmatprep.subr.mxu0 0.0
    %1053 = vmatpush1.msra.mxu0 0.0
    %1054 = vmatprep.subr.mxu0 0.0
    %1055 = vmatpush1.msra.mxu0 0.0
    %1056 = vmatprep.subr.mxu0 0.0
    %1057 = vmatpush1.msra.mxu0 0.0
    %1058 = vmatprep.subr.mxu0 0.0
    %1059 = vmatpush1.msra.mxu0 0.0
    %1060 = vmatprep.subr.mxu0 0.0
    %1061 = vmatpush1.msra.mxu0 0.0
    %1062 = vmatprep.subr.mxu0 0.0
    %1063 = vmatpush1.msra.mxu0 0.0
    %1064 = vmatprep.subr.mxu0 0.0
    %1065 = vmatpush1.msra.mxu0 0.0
    %1066 = vmatprep.subr.mxu0 0.0
    %1067 = vmatpush1.msra.mxu0 0.0
    %1068 = vmatprep.subr.mxu0 0.0
    %1069 = vmatpush1.msra.mxu0 0.0
    %1070 = vmatprep.subr.mxu0 0.0
    %1071 = vmatpush1.msra.mxu0 0.0
    %1072 = vmatprep.subr.mxu0 0.0
    %1073 = vmatpush1.msra.mxu0 0.0
    %1074 = vmatprep.subr.mxu0 0.0
    %1075 = vmatpush1.msra.mxu0 0.0
    %1076 = vmatprep.subr.mxu0 0.0
    %1077 = vmatpush1.msra.mxu0 0.0
    %1078 = vmatprep.subr.mxu0 0.0
    %1079 = vmatpush1.msra.mxu0 0.0
    %1080 = vmatprep.subr.mxu0 0.0
    %1081 = vmatpush1.msra.mxu0 0.0
    %1082 = vmatprep.subr.mxu0 0.0
    %1083 = vmatpush1.msra.mxu0 0.0
    %1084 = vmatprep.subr.mxu0 0.0
    %1085 = vmatpush1.msra.mxu0 0.0
    %1086 = vmatprep.subr.mxu0 0.0
    %1087 = vmatpush1.msra.mxu0 0.0
    %1088 = vmatprep.subr.mxu0 0.0
    %1089 = vmatpush1.msra.mxu0 0.0
    %1090 = vmatprep.subr.mxu0 0.0
    %1091 = vmatpush1.msra.mxu0 0.0
    %1092 = vmatprep.subr.mxu0 0.0
    %1093 = vmatpush1.msra.mxu0 0.0
    %1094 = vmatprep.subr.mxu0 0.0
    %1095 = vmatpush1.msra.mxu0 0.0
    %1096 = vmatprep.mubr.f32.mxu0 0.0
    %1097 = vmatmul.mubr.f32.gmra.mrb[0].mxu0 %v1030
    %v1098 = vpop.f32.mrb[0].mxu0
    %v1099 = vadd.f32 0.0, %v1098
    %v1100 = vpop.f32.mrb[0].mxu0
    %1101 = vdwg.mxu0
    %1102 = vrot.lane.b32.xlu0 %v284, 64
    %v1103 = vpop.permute.xlu0 %1102
    %v1106 = vsel %vm303, %v1019, 0
    %1108 = vmatprep.subr.mxu0 0.0
    %1109 = vmatpush1.msra.mxu0 %v1103
    %1110 = vmatprep.subr.mxu0 0.0
    %1111 = vmatpush1.msra.mxu0 0.0
    %1112 = vmatprep.subr.mxu0 0.0
    %1113 = vmatpush1.msra.mxu0 0.0
    %1114 = vmatprep.subr.mxu0 0.0
    %1115 = vmatpush1.msra.mxu0 0.0
    %1116 = vmatprep.subr.mxu0 0.0
    %1117 = vmatpush1.msra.mxu0 0.0
    %1118 = vmatprep.subr.mxu0 0.0
    %1119 = vmatpush1.msra.mxu0 0.0
    %1120 = vmatprep.subr.mxu0 0.0
    %1121 = vmatpush1.msra.mxu0 0.0
    %1122 = vmatprep.subr.mxu0 0.0
    %1123 = vmatpush1.msra.mxu0 0.0
    %1124 = vmatprep.subr.mxu0 0.0
    %1125 = vmatpush1.msra.mxu0 0.0
    %1126 = vmatprep.subr.mxu0 0.0
    %1127 = vmatpush1.msra.mxu0 0.0
    %1128 = vmatprep.subr.mxu0 0.0
    %1129 = vmatpush1.msra.mxu0 0.0
    %1130 = vmatprep.subr.mxu0 0.0
    %1131 = vmatpush1.msra.mxu0 0.0
    %1132 = vmatprep.subr.mxu0 0.0
    %1133 = vmatpush1.msra.mxu0 0.0
    %1134 = vmatprep.subr.mxu0 0.0
    %1135 = vmatpush1.msra.mxu0 0.0
    %1136 = vmatprep.subr.mxu0 0.0
    %1137 = vmatpush1.msra.mxu0 0.0
    %1138 = vmatprep.subr.mxu0 0.0
    %1139 = vmatpush1.msra.mxu0 0.0
    %1140 = vmatprep.subr.mxu0 0.0
    %1141 = vmatpush1.msra.mxu0 0.0
    %1142 = vmatprep.subr.mxu0 0.0
    %1143 = vmatpush1.msra.mxu0 0.0
    %1144 = vmatprep.subr.mxu0 0.0
    %1145 = vmatpush1.msra.mxu0 0.0
    %1146 = vmatprep.subr.mxu0 0.0
    %1147 = vmatpush1.msra.mxu0 0.0
    %1148 = vmatprep.subr.mxu0 0.0
    %1149 = vmatpush1.msra.mxu0 0.0
    %1150 = vmatprep.subr.mxu0 0.0
    %1151 = vmatpush1.msra.mxu0 0.0
    %1152 = vmatprep.subr.mxu0 0.0
    %1153 = vmatpush1.msra.mxu0 0.0
    %1154 = vmatprep.subr.mxu0 0.0
    %1155 = vmatpush1.msra.mxu0 0.0
    %1156 = vmatprep.subr.mxu0 0.0
    %1157 = vmatpush1.msra.mxu0 0.0
    %1158 = vmatprep.subr.mxu0 0.0
    %1159 = vmatpush1.msra.mxu0 0.0
    %1160 = vmatprep.subr.mxu0 0.0
    %1161 = vmatpush1.msra.mxu0 0.0
    %1162 = vmatprep.subr.mxu0 0.0
    %1163 = vmatpush1.msra.mxu0 0.0
    %1164 = vmatprep.subr.mxu0 0.0
    %1165 = vmatpush1.msra.mxu0 0.0
    %1166 = vmatprep.subr.mxu0 0.0
    %1167 = vmatpush1.msra.mxu0 0.0
    %1168 = vmatprep.subr.mxu0 0.0
    %1169 = vmatpush1.msra.mxu0 0.0
    %1170 = vmatprep.subr.mxu0 0.0
    %1171 = vmatpush1.msra.mxu0 0.0
    %1172 = vmatprep.mubr.f32.mxu0 0.0
    %1173 = vmatmul.mubr.f32.gmra.mrb[0].mxu0 %v1106
    %v1174 = vpop.f32.mrb[0].mxu0
    %v1175 = vadd.f32 0.0, %v1174
    %v1176 = vpop.f32.mrb[0].mxu0
    %1177 = vdwg.mxu0
    %1178 = vrot.lane.b32.xlu0 %v290, 64
    %v1179 = vpop.permute.xlu0 %1178
    %v1182 = vsel %vm303, %v1020, 0
    %1184 = vmatprep.subr.mxu0 0.0
    %1185 = vmatpush1.msra.mxu0 %v1179
    %1186 = vmatprep.subr.mxu0 0.0
    %1187 = vmatpush1.msra.mxu0 0.0
    %1188 = vmatprep.subr.mxu0 0.0
    %1189 = vmatpush1.msra.mxu0 0.0
    %1190 = vmatprep.subr.mxu0 0.0
    %1191 = vmatpush1.msra.mxu0 0.0
    %1192 = vmatprep.subr.mxu0 0.0
    %1193 = vmatpush1.msra.mxu0 0.0
    %1194 = vmatprep.subr.mxu0 0.0
    %1195 = vmatpush1.msra.mxu0 0.0
    %1196 = vmatprep.subr.mxu0 0.0
    %1197 = vmatpush1.msra.mxu0 0.0
    %1198 = vmatprep.subr.mxu0 0.0
    %1199 = vmatpush1.msra.mxu0 0.0
    %1200 = vmatprep.subr.mxu0 0.0
    %1201 = vmatpush1.msra.mxu0 0.0
    %1202 = vmatprep.subr.mxu0 0.0
    %1203 = vmatpush1.msra.mxu0 0.0
    %1204 = vmatprep.subr.mxu0 0.0
    %1205 = vmatpush1.msra.mxu0 0.0
    %1206 = vmatprep.subr.mxu0 0.0
    %1207 = vmatpush1.msra.mxu0 0.0
    %1208 = vmatprep.subr.mxu0 0.0
    %1209 = vmatpush1.msra.mxu0 0.0
    %1210 = vmatprep.subr.mxu0 0.0
    %1211 = vmatpush1.msra.mxu0 0.0
    %1212 = vmatprep.subr.mxu0 0.0
    %1213 = vmatpush1.msra.mxu0 0.0
    %1214 = vmatprep.subr.mxu0 0.0
    %1215 = vmatpush1.msra.mxu0 0.0
    %1216 = vmatprep.subr.mxu0 0.0
    %1217 = vmatpush1.msra.mxu0 0.0
    %1218 = vmatprep.subr.mxu0 0.0
    %1219 = vmatpush1.msra.mxu0 0.0
    %1220 = vmatprep.subr.mxu0 0.0
    %1221 = vmatpush1.msra.mxu0 0.0
    %1222 = vmatprep.subr.mxu0 0.0
    %1223 = vmatpush1.msra.mxu0 0.0
    %1224 = vmatprep.subr.mxu0 0.0
    %1225 = vmatpush1.msra.mxu0 0.0
    %1226 = vmatprep.subr.mxu0 0.0
    %1227 = vmatpush1.msra.mxu0 0.0
    %1228 = vmatprep.subr.mxu0 0.0
    %1229 = vmatpush1.msra.mxu0 0.0
    %1230 = vmatprep.subr.mxu0 0.0
    %1231 = vmatpush1.msra.mxu0 0.0
    %1232 = vmatprep.subr.mxu0 0.0
    %1233 = vmatpush1.msra.mxu0 0.0
    %1234 = vmatprep.subr.mxu0 0.0
    %1235 = vmatpush1.msra.mxu0 0.0
    %1236 = vmatprep.subr.mxu0 0.0
    %1237 = vmatpush1.msra.mxu0 0.0
    %1238 = vmatprep.subr.mxu0 0.0
    %1239 = vmatpush1.msra.mxu0 0.0
    %1240 = vmatprep.subr.mxu0 0.0
    %1241 = vmatpush1.msra.mxu0 0.0
    %1242 = vmatprep.subr.mxu0 0.0
    %1243 = vmatpush1.msra.mxu0 0.0
    %1244 = vmatprep.subr.mxu0 0.0
    %1245 = vmatpush1.msra.mxu0 0.0
    %1246 = vmatprep.subr.mxu0 0.0
    %1247 = vmatpush1.msra.mxu0 0.0
    %1248 = vmatprep.mubr.f32.mxu0 0.0
    %1249 = vmatmul.mubr.f32.gmra.mrb[0].mxu0 %v1182
    %v1250 = vpop.f32.mrb[0].mxu0
    %v1251 = vadd.f32 0.0, %v1250
    %v1252 = vpop.f32.mrb[0].mxu0
    %1253 = vdwg.mxu0
    %1254 = vrot.lane.b32.xlu0 %v292, 64
    %v1255 = vpop.permute.xlu0 %1254
    %v1258 = vsel %vm303, %v1021, 0
    %1260 = vmatprep.subr.mxu0 0.0
    %1261 = vmatpush1.msra.mxu0 %v1255
    %1262 = vmatprep.subr.mxu0 0.0
    %1263 = vmatpush1.msra.mxu0 0.0
    %1264 = vmatprep.subr.mxu0 0.0
    %1265 = vmatpush1.msra.mxu0 0.0
    %1266 = vmatprep.subr.mxu0 0.0
    %1267 = vmatpush1.msra.mxu0 0.0
    %1268 = vmatprep.subr.mxu0 0.0
    %1269 = vmatpush1.msra.mxu0 0.0
    %1270 = vmatprep.subr.mxu0 0.0
    %1271 = vmatpush1.msra.mxu0 0.0
    %1272 = vmatprep.subr.mxu0 0.0
    %1273 = vmatpush1.msra.mxu0 0.0
    %1274 = vmatprep.subr.mxu0 0.0
    %1275 = vmatpush1.msra.mxu0 0.0
    %1276 = vmatprep.subr.mxu0 0.0
    %1277 = vmatpush1.msra.mxu0 0.0
    %1278 = vmatprep.subr.mxu0 0.0
    %1279 = vmatpush1.msra.mxu0 0.0
    %1280 = vmatprep.subr.mxu0 0.0
    %1281 = vmatpush1.msra.mxu0 0.0
    %1282 = vmatprep.subr.mxu0 0.0
    %1283 = vmatpush1.msra.mxu0 0.0
    %1284 = vmatprep.subr.mxu0 0.0
    %1285 = vmatpush1.msra.mxu0 0.0
    %1286 = vmatprep.subr.mxu0 0.0
    %1287 = vmatpush1.msra.mxu0 0.0
    %1288 = vmatprep.subr.mxu0 0.0
    %1289 = vmatpush1.msra.mxu0 0.0
    %1290 = vmatprep.subr.mxu0 0.0
    %1291 = vmatpush1.msra.mxu0 0.0
    %1292 = vmatprep.subr.mxu0 0.0
    %1293 = vmatpush1.msra.mxu0 0.0
    %1294 = vmatprep.subr.mxu0 0.0
    %1295 = vmatpush1.msra.mxu0 0.0
    %1296 = vmatprep.subr.mxu0 0.0
    %1297 = vmatpush1.msra.mxu0 0.0
    %1298 = vmatprep.subr.mxu0 0.0
    %1299 = vmatpush1.msra.mxu0 0.0
    %1300 = vmatprep.subr.mxu0 0.0
    %1301 = vmatpush1.msra.mxu0 0.0
    %1302 = vmatprep.subr.mxu0 0.0
    %1303 = vmatpush1.msra.mxu0 0.0
    %1304 = vmatprep.subr.mxu0 0.0
    %1305 = vmatpush1.msra.mxu0 0.0
    %1306 = vmatprep.subr.mxu0 0.0
    %1307 = vmatpush1.msra.mxu0 0.0
    %1308 = vmatprep.subr.mxu0 0.0
    %1309 = vmatpush1.msra.mxu0 0.0
    %1310 = vmatprep.subr.mxu0 0.0
    %1311 = vmatpush1.msra.mxu0 0.0
    %1312 = vmatprep.subr.mxu0 0.0
    %1313 = vmatpush1.msra.mxu0 0.0
    %1314 = vmatprep.subr.mxu0 0.0
    %1315 = vmatpush1.msra.mxu0 0.0
    %1316 = vmatprep.subr.mxu0 0.0
    %1317 = vmatpush1.msra.mxu0 0.0
    %1318 = vmatprep.subr.mxu0 0.0
    %1319 = vmatpush1.msra.mxu0 0.0
    %1320 = vmatprep.subr.mxu0 0.0
    %1321 = vmatpush1.msra.mxu0 0.0
    %1322 = vmatprep.subr.mxu0 0.0
    %1323 = vmatpush1.msra.mxu0 0.0
    %1324 = vmatprep.mubr.f32.mxu0 0.0
    %1325 = vmatmul.mubr.f32.gmra.mrb[0].mxu0 %v1258
    %v1326 = vpop.f32.mrb[0].mxu0
    %v1327 = vadd.f32 0.0, %v1326
    %v1328 = vpop.f32.mrb[0].mxu0
    %1329 = vdwg.mxu0
    %1330 = vrot.lane.b32.xlu0 %v294, 64
    %v1331 = vpop.permute.xlu0 %1330
    %v1334 = vsel %vm303, %v1022, 0
    %1336 = vmatprep.subr.mxu0 0.0
    %1337 = vmatpush1.msra.mxu0 %v1331
    %1338 = vmatprep.subr.mxu0 0.0
    %1339 = vmatpush1.msra.mxu0 0.0
    %1340 = vmatprep.subr.mxu0 0.0
    %1341 = vmatpush1.msra.mxu0 0.0
    %1342 = vmatprep.subr.mxu0 0.0
    %1343 = vmatpush1.msra.mxu0 0.0
    %1344 = vmatprep.subr.mxu0 0.0
    %1345 = vmatpush1.msra.mxu0 0.0
    %1346 = vmatprep.subr.mxu0 0.0
    %1347 = vmatpush1.msra.mxu0 0.0
    %1348 = vmatprep.subr.mxu0 0.0
    %1349 = vmatpush1.msra.mxu0 0.0
    %1350 = vmatprep.subr.mxu0 0.0
    %1351 = vmatpush1.msra.mxu0 0.0
    %1352 = vmatprep.subr.mxu0 0.0
    %1353 = vmatpush1.msra.mxu0 0.0
    %1354 = vmatprep.subr.mxu0 0.0
    %1355 = vmatpush1.msra.mxu0 0.0
    %1356 = vmatprep.subr.mxu0 0.0
    %1357 = vmatpush1.msra.mxu0 0.0
    %1358 = vmatprep.subr.mxu0 0.0
    %1359 = vmatpush1.msra.mxu0 0.0
    %1360 = vmatprep.subr.mxu0 0.0
    %1361 = vmatpush1.msra.mxu0 0.0
    %1362 = vmatprep.subr.mxu0 0.0
    %1363 = vmatpush1.msra.mxu0 0.0
    %1364 = vmatprep.subr.mxu0 0.0
    %1365 = vmatpush1.msra.mxu0 0.0
    %1366 = vmatprep.subr.mxu0 0.0
    %1367 = vmatpush1.msra.mxu0 0.0
    %1368 = vmatprep.subr.mxu0 0.0
    %1369 = vmatpush1.msra.mxu0 0.0
    %1370 = vmatprep.subr.mxu0 0.0
    %1371 = vmatpush1.msra.mxu0 0.0
    %1372 = vmatprep.subr.mxu0 0.0
    %1373 = vmatpush1.msra.mxu0 0.0
    %1374 = vmatprep.subr.mxu0 0.0
    %1375 = vmatpush1.msra.mxu0 0.0
    %1376 = vmatprep.subr.mxu0 0.0
    %1377 = vmatpush1.msra.mxu0 0.0
    %1378 = vmatprep.subr.mxu0 0.0
    %1379 = vmatpush1.msra.mxu0 0.0
    %1380 = vmatprep.subr.mxu0 0.0
    %1381 = vmatpush1.msra.mxu0 0.0
    %1382 = vmatprep.subr.mxu0 0.0
    %1383 = vmatpush1.msra.mxu0 0.0
    %1384 = vmatprep.subr.mxu0 0.0
    %1385 = vmatpush1.msra.mxu0 0.0
    %1386 = vmatprep.subr.mxu0 0.0
    %1387 = vmatpush1.msra.mxu0 0.0
    %1388 = vmatprep.subr.mxu0 0.0
    %1389 = vmatpush1.msra.mxu0 0.0
    %1390 = vmatprep.subr.mxu0 0.0
    %1391 = vmatpush1.msra.mxu0 0.0
    %1392 = vmatprep.subr.mxu0 0.0
    %1393 = vmatpush1.msra.mxu0 0.0
    %1394 = vmatprep.subr.mxu0 0.0
    %1395 = vmatpush1.msra.mxu0 0.0
    %1396 = vmatprep.subr.mxu0 0.0
    %1397 = vmatpush1.msra.mxu0 0.0
    %1398 = vmatprep.subr.mxu0 0.0
    %1399 = vmatpush1.msra.mxu0 0.0
    %1400 = vmatprep.mubr.f32.mxu0 0.0
    %1401 = vmatmul.mubr.f32.gmra.mrb[0].mxu0 %v1334
    %v1402 = vpop.f32.mrb[0].mxu0
    %v1403 = vadd.f32 0.0, %v1402
    %v1404 = vpop.f32.mrb[0].mxu0
    %1405 = vdwg.mxu0
    %1406 = vrot.lane.b32.xlu0 %v296, 64
    %v1407 = vpop.permute.xlu0 %1406
    %v1410 = vsel %vm303, %v1023, 0
    %1412 = vmatprep.subr.mxu0 0.0
    %1413 = vmatpush1.msra.mxu0 %v1407
    %1414 = vmatprep.subr.mxu0 0.0
    %1415 = vmatpush1.msra.mxu0 0.0
    %1416 = vmatprep.subr.mxu0 0.0
    %1417 = vmatpush1.msra.mxu0 0.0
    %1418 = vmatprep.subr.mxu0 0.0
    %1419 = vmatpush1.msra.mxu0 0.0
    %1420 = vmatprep.subr.mxu0 0.0
    %1421 = vmatpush1.msra.mxu0 0.0
    %1422 = vmatprep.subr.mxu0 0.0
    %1423 = vmatpush1.msra.mxu0 0.0
    %1424 = vmatprep.subr.mxu0 0.0
    %1425 = vmatpush1.msra.mxu0 0.0
    %1426 = vmatprep.subr.mxu0 0.0
    %1427 = vmatpush1.msra.mxu0 0.0
    %1428 = vmatprep.subr.mxu0 0.0
    %1429 = vmatpush1.msra.mxu0 0.0
    %1430 = vmatprep.subr.mxu0 0.0
    %1431 = vmatpush1.msra.mxu0 0.0
    %1432 = vmatprep.subr.mxu0 0.0
    %1433 = vmatpush1.msra.mxu0 0.0
    %1434 = vmatprep.subr.mxu0 0.0
    %1435 = vmatpush1.msra.mxu0 0.0
    %1436 = vmatprep.subr.mxu0 0.0
    %1437 = vmatpush1.msra.mxu0 0.0
    %1438 = vmatprep.subr.mxu0 0.0
    %1439 = vmatpush1.msra.mxu0 0.0
    %1440 = vmatprep.subr.mxu0 0.0
    %1441 = vmatpush1.msra.mxu0 0.0
    %1442 = vmatprep.subr.mxu0 0.0
    %1443 = vmatpush1.msra.mxu0 0.0
    %1444 = vmatprep.subr.mxu0 0.0
    %1445 = vmatpush1.msra.mxu0 0.0
    %1446 = vmatprep.subr.mxu0 0.0
    %1447 = vmatpush1.msra.mxu0 0.0
    %1448 = vmatprep.subr.mxu0 0.0
    %1449 = vmatpush1.msra.mxu0 0.0
    %1450 = vmatprep.subr.mxu0 0.0
    %1451 = vmatpush1.msra.mxu0 0.0
    %1452 = vmatprep.subr.mxu0 0.0
    %1453 = vmatpush1.msra.mxu0 0.0
    %1454 = vmatprep.subr.mxu0 0.0
    %1455 = vmatpush1.msra.mxu0 0.0
    %1456 = vmatprep.subr.mxu0 0.0
    %1457 = vmatpush1.msra.mxu0 0.0
    %1458 = vmatprep.subr.mxu0 0.0
    %1459 = vmatpush1.msra.mxu0 0.0
    %1460 = vmatprep.subr.mxu0 0.0
    %1461 = vmatpush1.msra.mxu0 0.0
    %1462 = vmatprep.subr.mxu0 0.0
    %1463 = vmatpush1.msra.mxu0 0.0
    %1464 = vmatprep.subr.mxu0 0.0
    %1465 = vmatpush1.msra.mxu0 0.0
    %1466 = vmatprep.subr.mxu0 0.0
    %1467 = vmatpush1.msra.mxu0 0.0
    %1468 = vmatprep.subr.mxu0 0.0
    %1469 = vmatpush1.msra.mxu0 0.0
    %1470 = vmatprep.subr.mxu0 0.0
    %1471 = vmatpush1.msra.mxu0 0.0
    %1472 = vmatprep.subr.mxu0 0.0
    %1473 = vmatpush1.msra.mxu0 0.0
    %1474 = vmatprep.subr.mxu0 0.0
    %1475 = vmatpush1.msra.mxu0 0.0
    %1476 = vmatprep.mubr.f32.mxu0 0.0
    %1477 = vmatmul.mubr.f32.gmra.mrb[0].mxu0 %v1410
    %v1478 = vpop.f32.mrb[0].mxu0
    %v1479 = vadd.f32 0.0, %v1478
    %v1480 = vpop.f32.mrb[0].mxu0
    %1481 = vdwg.mxu0
    %1482 = vrot.lane.b32.xlu0 %v298, 64
    %v1483 = vpop.permute.xlu0 %1482
    %v1486 = vsel %vm303, %v1024, 0
    %1488 = vmatprep.subr.mxu0 0.0
    %1489 = vmatpush1.msra.mxu0 %v1483
    %1490 = vmatprep.subr.mxu0 0.0
    %1491 = vmatpush1.msra.mxu0 0.0
    %1492 = vmatprep.subr.mxu0 0.0
    %1493 = vmatpush1.msra.mxu0 0.0
    %1494 = vmatprep.subr.mxu0 0.0
    %1495 = vmatpush1.msra.mxu0 0.0
    %1496 = vmatprep.subr.mxu0 0.0
    %1497 = vmatpush1.msra.mxu0 0.0
    %1498 = vmatprep.subr.mxu0 0.0
    %1499 = vmatpush1.msra.mxu0 0.0
    %1500 = vmatprep.subr.mxu0 0.0
    %1501 = vmatpush1.msra.mxu0 0.0
    %1502 = vmatprep.subr.mxu0 0.0
    %1503 = vmatpush1.msra.mxu0 0.0
    %1504 = vmatprep.subr.mxu0 0.0
    %1505 = vmatpush1.msra.mxu0 0.0
    %1506 = vmatprep.subr.mxu0 0.0
    %1507 = vmatpush1.msra.mxu0 0.0
    %1508 = vmatprep.subr.mxu0 0.0
    %1509 = vmatpush1.msra.mxu0 0.0
    %1510 = vmatprep.subr.mxu0 0.0
    %1511 = vmatpush1.msra.mxu0 0.0
    %1512 = vmatprep.subr.mxu0 0.0
    %1513 = vmatpush1.msra.mxu0 0.0
    %1514 = vmatprep.subr.mxu0 0.0
    %1515 = vmatpush1.msra.mxu0 0.0
    %1516 = vmatprep.subr.mxu0 0.0
    %1517 = vmatpush1.msra.mxu0 0.0
    %1518 = vmatprep.subr.mxu0 0.0
    %1519 = vmatpush1.msra.mxu0 0.0
    %1520 = vmatprep.subr.mxu0 0.0
    %1521 = vmatpush1.msra.mxu0 0.0
    %1522 = vmatprep.subr.mxu0 0.0
    %1523 = vmatpush1.msra.mxu0 0.0
    %1524 = vmatprep.subr.mxu0 0.0
    %1525 = vmatpush1.msra.mxu0 0.0
    %1526 = vmatprep.subr.mxu0 0.0
    %1527 = vmatpush1.msra.mxu0 0.0
    %1528 = vmatprep.subr.mxu0 0.0
    %1529 = vmatpush1.msra.mxu0 0.0
    %1530 = vmatprep.subr.mxu0 0.0
    %1531 = vmatpush1.msra.mxu0 0.0
    %1532 = vmatprep.subr.mxu0 0.0
    %1533 = vmatpush1.msra.mxu0 0.0
    %1534 = vmatprep.subr.mxu0 0.0
    %1535 = vmatpush1.msra.mxu0 0.0
    %1536 = vmatprep.subr.mxu0 0.0
    %1537 = vmatpush1.msra.mxu0 0.0
    %1538 = vmatprep.subr.mxu0 0.0
    %1539 = vmatpush1.msra.mxu0 0.0
    %1540 = vmatprep.subr.mxu0 0.0
    %1541 = vmatpush1.msra.mxu0 0.0
    %1542 = vmatprep.subr.mxu0 0.0
    %1543 = vmatpush1.msra.mxu0 0.0
    %1544 = vmatprep.subr.mxu0 0.0
    %1545 = vmatpush1.msra.mxu0 0.0
    %1546 = vmatprep.subr.mxu0 0.0
    %1547 = vmatpush1.msra.mxu0 0.0
    %1548 = vmatprep.subr.mxu0 0.0
    %1549 = vmatpush1.msra.mxu0 0.0
    %1550 = vmatprep.subr.mxu0 0.0
    %1551 = vmatpush1.msra.mxu0 0.0
    %1552 = vmatprep.mubr.f32.mxu0 0.0
    %1553 = vmatmul.mubr.f32.gmra.mrb[0].mxu0 %v1486
    %v1554 = vpop.f32.mrb[0].mxu0
    %v1555 = vadd.f32 0.0, %v1554
    %v1556 = vpop.f32.mrb[0].mxu0
    %1557 = vdwg.mxu0
    %1558 = vrot.lane.b32.xlu0 %v300, 64
    %v1559 = vpop.permute.xlu0 %1558
    %v1562 = vsel %vm303, %v1025, 0
    %1564 = vmatprep.subr.mxu0 0.0
    %1565 = vmatpush1.msra.mxu0 %v1559
    %1566 = vmatprep.subr.mxu0 0.0
    %1567 = vmatpush1.msra.mxu0 0.0
    %1568 = vmatprep.subr.mxu0 0.0
    %1569 = vmatpush1.msra.mxu0 0.0
    %1570 = vmatprep.subr.mxu0 0.0
    %1571 = vmatpush1.msra.mxu0 0.0
    %1572 = vmatprep.subr.mxu0 0.0
    %1573 = vmatpush1.msra.mxu0 0.0
    %1574 = vmatprep.subr.mxu0 0.0
    %1575 = vmatpush1.msra.mxu0 0.0
    %1576 = vmatprep.subr.mxu0 0.0
    %1577 = vmatpush1.msra.mxu0 0.0
    %1578 = vmatprep.subr.mxu0 0.0
    %1579 = vmatpush1.msra.mxu0 0.0
    %1580 = vmatprep.subr.mxu0 0.0
    %1581 = vmatpush1.msra.mxu0 0.0
    %1582 = vmatprep.subr.mxu0 0.0
    %1583 = vmatpush1.msra.mxu0 0.0
    %1584 = vmatprep.subr.mxu0 0.0
    %1585 = vmatpush1.msra.mxu0 0.0
    %1586 = vmatprep.subr.mxu0 0.0
    %1587 = vmatpush1.msra.mxu0 0.0
    %1588 = vmatprep.subr.mxu0 0.0
    %1589 = vmatpush1.msra.mxu0 0.0
    %1590 = vmatprep.subr.mxu0 0.0
    %1591 = vmatpush1.msra.mxu0 0.0
    %1592 = vmatprep.subr.mxu0 0.0
    %1593 = vmatpush1.msra.mxu0 0.0
    %1594 = vmatprep.subr.mxu0 0.0
    %1595 = vmatpush1.msra.mxu0 0.0
    %1596 = vmatprep.subr.mxu0 0.0
    %1597 = vmatpush1.msra.mxu0 0.0
    %1598 = vmatprep.subr.mxu0 0.0
    %1599 = vmatpush1.msra.mxu0 0.0
    %1600 = vmatprep.subr.mxu0 0.0
    %1601 = vmatpush1.msra.mxu0 0.0
    %1602 = vmatprep.subr.mxu0 0.0
    %1603 = vmatpush1.msra.mxu0 0.0
    %1604 = vmatprep.subr.mxu0 0.0
    %1605 = vmatpush1.msra.mxu0 0.0
    %1606 = vmatprep.subr.mxu0 0.0
    %1607 = vmatpush1.msra.mxu0 0.0
    %1608 = vmatprep.subr.mxu0 0.0
    %1609 = vmatpush1.msra.mxu0 0.0
    %1610 = vmatprep.subr.mxu0 0.0
    %1611 = vmatpush1.msra.mxu0 0.0
    %1612 = vmatprep.subr.mxu0 0.0
    %1613 = vmatpush1.msra.mxu0 0.0
    %1614 = vmatprep.subr.mxu0 0.0
    %1615 = vmatpush1.msra.mxu0 0.0
    %1616 = vmatprep.subr.mxu0 0.0
    %1617 = vmatpush1.msra.mxu0 0.0
    %1618 = vmatprep.subr.mxu0 0.0
    %1619 = vmatpush1.msra.mxu0 0.0
    %1620 = vmatprep.subr.mxu0 0.0
    %1621 = vmatpush1.msra.mxu0 0.0
    %1622 = vmatprep.subr.mxu0 0.0
    %1623 = vmatpush1.msra.mxu0 0.0
    %1624 = vmatprep.subr.mxu0 0.0
    %1625 = vmatpush1.msra.mxu0 0.0
    %1626 = vmatprep.subr.mxu0 0.0
    %1627 = vmatpush1.msra.mxu0 0.0
    %1628 = vmatprep.mubr.f32.mxu0 0.0
    %1629 = vmatmul.mubr.f32.gmra.mrb[0].mxu0 %v1562
    %v1630 = vpop.f32.mrb[0].mxu0
    %v1631 = vadd.f32 0.0, %v1630
    %v1632 = vpop.f32.mrb[0].mxu0
    %1633 = vdwg.mxu0
    %1636 = vrot.lane.b32.xlu0 %v1251, 8
    %v1637 = vpop.permute.xlu0 %1636
    %1638 = vrot.lane.b32.xlu0 %v1327, 8
    %v1639 = vpop.permute.xlu0 %1638
    %1644 = vrot.lane.b32.xlu0 %v1403, 16
    %v1645 = vpop.permute.xlu0 %1644
    %1646 = vrot.lane.b32.xlu0 %v1479, 16
    %v1647 = vpop.permute.xlu0 %1646
    %1652 = vrot.lane.b32.xlu0 %v1555, 24
    %v1653 = vpop.permute.xlu0 %1652
    %1654 = vrot.lane.b32.xlu0 %v1631, 24
    %v1655 = vpop.permute.xlu0 %1654
    %v1658 = vsel %vm303, %v1099, %v1637
    %v1659 = vsel %vm303, %v1175, %v1639
    %vm1660 = vcmask 130048
    %v1661 = vsel %vm1660, %v1658, %v1645
    %v1662 = vsel %vm1660, %v1659, %v1647
    %vm1663 = vcmask 195584
    %v1664 = vsel %vm1663, %v1661, %v1653
    %v1665 = vsel %vm1663, %v1662, %v1655
    %v1666 = vld [vmem:[%s6] sm:$0xff]
    %v1667 = vld [vmem:[%s6 + $0x8] sm:$0xff]
    %v1668 = vld [vmem:[%s6 + $0x10] sm:$0xff]
    %v1669 = vld [vmem:[%s6 + $0x18] sm:$0xff]
    %v1670 = vlaneseq
    %v1671 = vshrl.u32 %v1670, 7
    %v1672 = vsub.s32 4, %v1671
    %v1673 = vrot.slane %v36, %v1672
    %v1675 = vsel %vm150, %v1664, 0
    %v1678 = vsel %vm150, %v1665, 0
    %1680 = vmatprep.subr.mxu0 0.0
    %1681 = vmatpush1.msra.mxu0 %v1666
    %1682 = vmatprep.subr.mxu0 0.0
    %1683 = vmatpush1.msra.mxu0 %v1667
    %1684 = vmatprep.subr.mxu0 0.0
    %1685 = vmatpush1.msra.mxu0 %v1668
    %1686 = vmatprep.subr.mxu0 0.0
    %1687 = vmatpush1.msra.mxu0 %v1669
    %1688 = vmatprep.subr.mxu0 0.0
    %1689 = vmatpush1.msra.mxu0 0.0
    %1690 = vmatprep.subr.mxu0 0.0
    %1691 = vmatpush1.msra.mxu0 0.0
    %1692 = vmatprep.subr.mxu0 0.0
    %1693 = vmatpush1.msra.mxu0 0.0
    %1694 = vmatprep.subr.mxu0 0.0
    %1695 = vmatpush1.msra.mxu0 0.0
    %1696 = vmatprep.subr.mxu0 0.0
    %1697 = vmatpush1.msra.mxu0 0.0
    %1698 = vmatprep.subr.mxu0 0.0
    %1699 = vmatpush1.msra.mxu0 0.0
    %1700 = vmatprep.subr.mxu0 0.0
    %1701 = vmatpush1.msra.mxu0 0.0
    %1702 = vmatprep.subr.mxu0 0.0
    %1703 = vmatpush1.msra.mxu0 0.0
    %1704 = vmatprep.subr.mxu0 0.0
    %1705 = vmatpush1.msra.mxu0 0.0
    %1706 = vmatprep.subr.mxu0 0.0
    %1707 = vmatpush1.msra.mxu0 0.0
    %1708 = vmatprep.subr.mxu0 0.0
    %1709 = vmatpush1.msra.mxu0 0.0
    %1710 = vmatprep.subr.mxu0 0.0
    %1711 = vmatpush1.msra.mxu0 0.0
    %1712 = vmatprep.subr.mxu0 0.0
    %1713 = vmatpush1.msra.mxu0 0.0
    %1714 = vmatprep.subr.mxu0 0.0
    %1715 = vmatpush1.msra.mxu0 0.0
    %1716 = vmatprep.subr.mxu0 0.0
    %1717 = vmatpush1.msra.mxu0 0.0
    %1718 = vmatprep.subr.mxu0 0.0
    %1719 = vmatpush1.msra.mxu0 0.0
    %1720 = vmatprep.subr.mxu0 0.0
    %1721 = vmatpush1.msra.mxu0 0.0
    %1722 = vmatprep.subr.mxu0 0.0
    %1723 = vmatpush1.msra.mxu0 0.0
    %1724 = vmatprep.subr.mxu0 0.0
    %1725 = vmatpush1.msra.mxu0 0.0
    %1726 = vmatprep.subr.mxu0 0.0
    %1727 = vmatpush1.msra.mxu0 0.0
    %1728 = vmatprep.subr.mxu0 0.0
    %1729 = vmatpush1.msra.mxu0 0.0
    %1730 = vmatprep.subr.mxu0 0.0
    %1731 = vmatpush1.msra.mxu0 0.0
    %1732 = vmatprep.subr.mxu0 0.0
    %1733 = vmatpush1.msra.mxu0 0.0
    %1734 = vmatprep.subr.mxu0 0.0
    %1735 = vmatpush1.msra.mxu0 0.0
    %1736 = vmatprep.subr.mxu0 0.0
    %1737 = vmatpush1.msra.mxu0 0.0
    %1738 = vmatprep.subr.mxu0 0.0
    %1739 = vmatpush1.msra.mxu0 0.0
    %1740 = vmatprep.subr.mxu0 0.0
    %1741 = vmatpush1.msra.mxu0 0.0
    %1742 = vmatprep.subr.mxu0 0.0
    %1743 = vmatpush1.msra.mxu0 0.0
    %1744 = vmatprep.mubr.f32.mxu0 0.0
    %1745 = vmatmul.mubr.f32.gmra.mrb[0].mxu0 %v1675
    %v1746 = vpop.f32.mrb[0].mxu0
    %v1747 = vadd.f32 %v1673, %v1746
    %v1748 = vpop.f32.mrb[0].mxu0
    %1749 = vmatprep.mubr.f32.mxu0 0.0
    %1750 = vmatmul.mubr.f32.gmra.mrb[0].mxu0 %v1678
    %v1751 = vpop.f32.mrb[0].mxu0
    %v1752 = vadd.f32 %v1673, %v1751
    %v1753 = vpop.f32.mrb[0].mxu0
    %1754 = vdwg.mxu0
    %v1755 = vadd.f32 %v188, %v1747
    %v1756 = vadd.f32 %v189, %v1752
    %v1757 = vsel %vm150, %v1755, 0.0
    %1758 = vadd.xlane.f32.xlu0 %v1757
    %v1759 = vpop.xlane.xlu0 %1758
    %v1760 = vsel %vm150, %v1756, 0.0
    %1761 = vadd.xlane.f32.xlu0 %v1760
    %v1762 = vpop.xlane.xlu0 %1761
    %v1763 = vmul.f32 %v1759, %v157
    %v1764 = vmul.f32 %v1762, %v157
    %v1765 = vsub.f32 %v1755, %v1763
    %v1766 = vsub.f32 %v1756, %v1764
    %v1767 = vmul.f32 %v1765, %v1765
    %v1768 = vmul.f32 %v1766, %v1766
    %v1769 = vsel %vm150, %v1767, 0.0
    %1770 = vadd.xlane.f32.xlu0 %v1769
    %v1771 = vpop.xlane.xlu0 %1770
    %v1772 = vsel %vm150, %v1768, 0.0
    %1773 = vadd.xlane.f32.xlu0 %v1772
    %v1774 = vpop.xlane.xlu0 %1773
    %v1775 = vmul.f32 %v1771, %v157
    %v1776 = vmul.f32 %v1774, %v157
    %v1777 = vadd.f32 %v1775, 1e-12
    %v1778 = vadd.f32 %v1776, 1e-12
    %v1779 = vrsqrt.pop %v1777
    %v1780 = vrsqrt.pop %v1778
    %v1781 = vmul.f32 %v1765, %v1779
    %v1782 = vmul.f32 %v1766, %v1780
    %v1783 = vlaneseq
    %v1784 = vshrl.u32 %v1783, 7
    %v1785 = vsub.s32 5, %v1784
    %v1786 = vrot.slane %v36, %v1785
    %v1787 = vmul.f32 %v1781, %v1786
    %v1788 = vmul.f32 %v1782, %v1786
    %v1789 = vlaneseq
    %v1790 = vshrl.u32 %v1789, 7
    %v1791 = vsub.s32 6, %v1790
    %v1792 = vrot.slane %v36, %v1791
    %v1793 = vadd.f32 %v1787, %v1792
    %v1794 = vadd.f32 %v1788, %v1792
    %v1795 = vld [vmem:[%s7] sm:$0xff]
    %v1796 = vld [vmem:[%s7 + $0x8] sm:$0xff]
    %v1797 = vld [vmem:[%s7 + $0x10] sm:$0xff]
    %v1798 = vld [vmem:[%s7 + $0x18] sm:$0xff]
    %v1799 = vlaneseq
    %v1800 = vshrl.u32 %v1799, 7
    %v1801 = vsub.s32 7, %v1800
    %v1802 = vrot.slane %v36, %v1801
    %v1804 = vsel %vm150, %v1793, 0
    %v1807 = vsel %vm150, %v1794, 0
    %1809 = vmatprep.subr.mxu0 0.0
    %1810 = vmatpush1.msra.mxu0 %v1795
    %1811 = vmatprep.subr.mxu0 0.0
    %1812 = vmatpush1.msra.mxu0 %v1796
    %1813 = vmatprep.subr.mxu0 0.0
    %1814 = vmatpush1.msra.mxu0 %v1797
    %1815 = vmatprep.subr.mxu0 0.0
    %1816 = vmatpush1.msra.mxu0 %v1798
    %1817 = vmatprep.subr.mxu0 0.0
    %1818 = vmatpush1.msra.mxu0 0.0
    %1819 = vmatprep.subr.mxu0 0.0
    %1820 = vmatpush1.msra.mxu0 0.0
    %1821 = vmatprep.subr.mxu0 0.0
    %1822 = vmatpush1.msra.mxu0 0.0
    %1823 = vmatprep.subr.mxu0 0.0
    %1824 = vmatpush1.msra.mxu0 0.0
    %1825 = vmatprep.subr.mxu0 0.0
    %1826 = vmatpush1.msra.mxu0 0.0
    %1827 = vmatprep.subr.mxu0 0.0
    %1828 = vmatpush1.msra.mxu0 0.0
    %1829 = vmatprep.subr.mxu0 0.0
    %1830 = vmatpush1.msra.mxu0 0.0
    %1831 = vmatprep.subr.mxu0 0.0
    %1832 = vmatpush1.msra.mxu0 0.0
    %1833 = vmatprep.subr.mxu0 0.0
    %1834 = vmatpush1.msra.mxu0 0.0
    %1835 = vmatprep.subr.mxu0 0.0
    %1836 = vmatpush1.msra.mxu0 0.0
    %1837 = vmatprep.subr.mxu0 0.0
    %1838 = vmatpush1.msra.mxu0 0.0
    %1839 = vmatprep.subr.mxu0 0.0
    %1840 = vmatpush1.msra.mxu0 0.0
    %1841 = vmatprep.subr.mxu0 0.0
    %1842 = vmatpush1.msra.mxu0 0.0
    %1843 = vmatprep.subr.mxu0 0.0
    %1844 = vmatpush1.msra.mxu0 0.0
    %1845 = vmatprep.subr.mxu0 0.0
    %1846 = vmatpush1.msra.mxu0 0.0
    %1847 = vmatprep.subr.mxu0 0.0
    %1848 = vmatpush1.msra.mxu0 0.0
    %1849 = vmatprep.subr.mxu0 0.0
    %1850 = vmatpush1.msra.mxu0 0.0
    %1851 = vmatprep.subr.mxu0 0.0
    %1852 = vmatpush1.msra.mxu0 0.0
    %1853 = vmatprep.subr.mxu0 0.0
    %1854 = vmatpush1.msra.mxu0 0.0
    %1855 = vmatprep.subr.mxu0 0.0
    %1856 = vmatpush1.msra.mxu0 0.0
    %1857 = vmatprep.subr.mxu0 0.0
    %1858 = vmatpush1.msra.mxu0 0.0
    %1859 = vmatprep.subr.mxu0 0.0
    %1860 = vmatpush1.msra.mxu0 0.0
    %1861 = vmatprep.subr.mxu0 0.0
    %1862 = vmatpush1.msra.mxu0 0.0
    %1863 = vmatprep.subr.mxu0 0.0
    %1864 = vmatpush1.msra.mxu0 0.0
    %1865 = vmatprep.subr.mxu0 0.0
    %1866 = vmatpush1.msra.mxu0 0.0
    %1867 = vmatprep.subr.mxu0 0.0
    %1868 = vmatpush1.msra.mxu0 0.0
    %1869 = vmatprep.subr.mxu0 0.0
    %1870 = vmatpush1.msra.mxu0 0.0
    %1871 = vmatprep.subr.mxu0 0.0
    %1872 = vmatpush1.msra.mxu0 0.0
    %1873 = vmatprep.mubr.f32.mxu0 0.0
    %1874 = vmatmul.mubr.f32.gmra.mrb[0].mxu0 %v1804
    %v1875 = vpop.f32.mrb[0].mxu0
    %v1876 = vadd.f32 %v1802, %v1875
    %v1877 = vpop.f32.mrb[0].mxu0
    %1878 = vmatprep.mubr.f32.mxu0 0.0
    %1879 = vmatmul.mubr.f32.gmra.mrb[0].mxu0 %v1807
    %v1880 = vpop.f32.mrb[0].mxu0
    %v1881 = vadd.f32 %v1802, %v1880
    %v1882 = vpop.f32.mrb[0].mxu0
    %1883 = vdwg.mxu0
    %v1884 = vmul.f32 %v1876, 0.5
    %v1885 = vmul.f32 %v1881, 0.5
    %v1886 = vmul.f32 %v1876, 0.044715
    %v1887 = vmul.f32 %v1881, 0.044715
    %v1888 = vmul.f32 %v1886, %v1876
    %v1889 = vmul.f32 %v1887, %v1881
    %v1890 = vmul.f32 %v1888, %v1876
    %v1891 = vmul.f32 %v1889, %v1881
    %v1892 = vadd.f32 %v1876, %v1890
    %v1893 = vadd.f32 %v1881, %v1891
    %v1894 = vmul.f32 %v1892, 0.7978846
    %v1895 = vmul.f32 %v1893, 0.7978846
    %v1896 = vtanh.pop %v1894
    %v1897 = vtanh.pop %v1895
    %v1898 = vadd.f32 %v1896, 1.0
    %v1899 = vadd.f32 %v1897, 1.0
    %v1900 = vmul.f32 %v1884, %v1898
    %v1901 = vmul.f32 %v1885, %v1899
    %v1902 = vld [vmem:[%s8] sm:$0xff]
    %v1903 = vld [vmem:[%s8 + $0x8] sm:$0xff]
    %v1904 = vld [vmem:[%s8 + $0x10] sm:$0xff]
    %v1905 = vld [vmem:[%s8 + $0x18] sm:$0xff]
    %v1906 = vld [vmem:[%s8 + $0x20] sm:$0xff]
    %v1907 = vld [vmem:[%s8 + $0x28] sm:$0xff]
    %v1908 = vld [vmem:[%s8 + $0x30] sm:$0xff]
    %v1909 = vld [vmem:[%s8 + $0x38] sm:$0xff]
    %v1910 = vlaneseq
    %v1911 = vshrl.u32 %v1910, 7
    %v1912 = vsub.s32 0, %v1911
    %v1913 = vrot.slane %v37, %v1912
    %vm1914 = vcmask 523264
    %v1916 = vsel %vm1914, %v1900, 0
    %v1919 = vsel %vm1914, %v1901, 0
    %1921 = vmatprep.subr.mxu0 0.0
    %1922 = vmatpush1.msra.mxu0 %v1902
    %1923 = vmatprep.subr.mxu0 0.0
    %1924 = vmatpush1.msra.mxu0 %v1903
    %1925 = vmatprep.subr.mxu0 0.0
    %1926 = vmatpush1.msra.mxu0 %v1904
    %1927 = vmatprep.subr.mxu0 0.0
    %1928 = vmatpush1.msra.mxu0 %v1905
    %1929 = vmatprep.subr.mxu0 0.0
    %1930 = vmatpush1.msra.mxu0 %v1906
    %1931 = vmatprep.subr.mxu0 0.0
    %1932 = vmatpush1.msra.mxu0 %v1907
    %1933 = vmatprep.subr.mxu0 0.0
    %1934 = vmatpush1.msra.mxu0 %v1908
    %1935 = vmatprep.subr.mxu0 0.0
    %1936 = vmatpush1.msra.mxu0 %v1909
    %1937 = vmatprep.subr.mxu0 0.0
    %1938 = vmatpush1.msra.mxu0 0.0
    %1939 = vmatprep.subr.mxu0 0.0
    %1940 = vmatpush1.msra.mxu0 0.0
    %1941 = vmatprep.subr.mxu0 0.0
    %1942 = vmatpush1.msra.mxu0 0.0
    %1943 = vmatprep.subr.mxu0 0.0
    %1944 = vmatpush1.msra.mxu0 0.0
    %1945 = vmatprep.subr.mxu0 0.0
    %1946 = vmatpush1.msra.mxu0 0.0
    %1947 = vmatprep.subr.mxu0 0.0
    %1948 = vmatpush1.msra.mxu0 0.0
    %1949 = vmatprep.subr.mxu0 0.0
    %1950 = vmatpush1.msra.mxu0 0.0
    %1951 = vmatprep.subr.mxu0 0.0
    %1952 = vmatpush1.msra.mxu0 0.0
    %1953 = vmatprep.subr.mxu0 0.0
    %1954 = vmatpush1.msra.mxu0 0.0
    %1955 = vmatprep.subr.mxu0 0.0
    %1956 = vmatpush1.msra.mxu0 0.0
    %1957 = vmatprep.subr.mxu0 0.0
    %1958 = vmatpush1.msra.mxu0 0.0
    %1959 = vmatprep.subr.mxu0 0.0
    %1960 = vmatpush1.msra.mxu0 0.0
    %1961 = vmatprep.subr.mxu0 0.0
    %1962 = vmatpush1.msra.mxu0 0.0
    %1963 = vmatprep.subr.mxu0 0.0
    %1964 = vmatpush1.msra.mxu0 0.0
    %1965 = vmatprep.subr.mxu0 0.0
    %1966 = vmatpush1.msra.mxu0 0.0
    %1967 = vmatprep.subr.mxu0 0.0
    %1968 = vmatpush1.msra.mxu0 0.0
    %1969 = vmatprep.subr.mxu0 0.0
    %1970 = vmatpush1.msra.mxu0 0.0
    %1971 = vmatprep.subr.mxu0 0.0
    %1972 = vmatpush1.msra.mxu0 0.0
    %1973 = vmatprep.subr.mxu0 0.0
    %1974 = vmatpush1.msra.mxu0 0.0
    %1975 = vmatprep.subr.mxu0 0.0
    %1976 = vmatpush1.msra.mxu0 0.0
    %1977 = vmatprep.subr.mxu0 0.0
    %1978 = vmatpush1.msra.mxu0 0.0
    %1979 = vmatprep.subr.mxu0 0.0
    %1980 = vmatpush1.msra.mxu0 0.0
    %1981 = vmatprep.subr.mxu0 0.0
    %1982 = vmatpush1.msra.mxu0 0.0
    %1983 = vmatprep.subr.mxu0 0.0
    %1984 = vmatpush1.msra.mxu0 0.0
    %1985 = vmatprep.mubr.f32.mxu0 0.0
    %1986 = vmatmul.mubr.f32.gmra.mrb[0].mxu0 %v1916
    %v1987 = vpop.f32.mrb[0].mxu0
    %v1988 = vadd.f32 %v1913, %v1987
    %v1989 = vpop.f32.mrb[0].mxu0
    %1990 = vmatprep.mubr.f32.mxu0 0.0
    %1991 = vmatmul.mubr.f32.gmra.mrb[0].mxu0 %v1919
    %v1992 = vpop.f32.mrb[0].mxu0
    %v1993 = vadd.f32 %v1913, %v1992
    %v1994 = vpop.f32.mrb[0].mxu0
    %1995 = vdwg.mxu0
    %v1996 = vadd.f32 %v1793, %v1988
    %v1997 = vadd.f32 %v1794, %v1993
    %v1998 = vsel %vm150, %v1996, 0.0
    %1999 = vadd.xlane.f32.xlu0 %v1998
    %v2000 = vpop.xlane.xlu0 %1999
    %v2001 = vsel %vm150, %v1997, 0.0
    %2002 = vadd.xlane.f32.xlu0 %v2001
    %v2003 = vpop.xlane.xlu0 %2002
    %v2004 = vmul.f32 %v2000, %v157
    %v2005 = vmul.f32 %v2003, %v157
    %v2006 = vsub.f32 %v1996, %v2004
    %v2007 = vsub.f32 %v1997, %v2005
    %v2008 = vmul.f32 %v2006, %v2006
    %v2009 = vmul.f32 %v2007, %v2007
    %v2010 = vsel %vm150, %v2008, 0.0
    %2011 = vadd.xlane.f32.xlu0 %v2010
    %v2012 = vpop.xlane.xlu0 %2011
    %v2013 = vsel %vm150, %v2009, 0.0
    %2014 = vadd.xlane.f32.xlu0 %v2013
    %v2015 = vpop.xlane.xlu0 %2014
    %v2016 = vmul.f32 %v2012, %v157
    %v2017 = vmul.f32 %v2015, %v157
    %v2018 = vadd.f32 %v2016, 1e-12
    %v2019 = vadd.f32 %v2017, 1e-12
    %v2020 = vrsqrt.pop %v2018
    %v2021 = vrsqrt.pop %v2019
    %v2022 = vmul.f32 %v2006, %v2020
    %v2023 = vmul.f32 %v2007, %v2021
    %v2024 = vlaneseq
    %v2025 = vshrl.u32 %v2024, 7
    %v2026 = vsub.s32 1, %v2025
    %v2027 = vrot.slane %v37, %v2026
    %v2028 = vmul.f32 %v2022, %v2027
    %v2029 = vmul.f32 %v2023, %v2027
    %v2030 = vlaneseq
    %v2031 = vshrl.u32 %v2030, 7
    %v2032 = vsub.s32 2, %v2031
    %v2033 = vrot.slane %v37, %v2032
    %v2034 = vadd.f32 %v2028, %v2033
    %v2035 = vadd.f32 %v2029, %v2033
    %s2036 = scalar_lea.vmem %s5, 32
    %v2037 = vld [vmem:[%s2036] sm:$0xff]
    %v2038 = vld [vmem:[%s2036 + $0x8] sm:$0xff]
    %v2039 = vld [vmem:[%s2036 + $0x10] sm:$0xff]
    %v2040 = vld [vmem:[%s2036 + $0x18] sm:$0xff]
    %v2041 = vlaneseq
    %v2042 = vshrl.u32 %v2041, 7
    %v2043 = vsub.s32 3, %v2042
    %v2044 = vrot.slane %v37, %v2043
    %v2046 = vsel %vm150, %v2034, 0
    %v2049 = vsel %vm150, %v2035, 0
    %2051 = vmatprep.subr.mxu0 0.0
    %2052 = vmatpush1.msra.mxu0 %v2037
    %2053 = vmatprep.subr.mxu0 0.0
    %2054 = vmatpush1.msra.mxu0 %v2038
    %2055 = vmatprep.subr.mxu0 0.0
    %2056 = vmatpush1.msra.mxu0 %v2039
    %2057 = vmatprep.subr.mxu0 0.0
    %2058 = vmatpush1.msra.mxu0 %v2040
    %2059 = vmatprep.subr.mxu0 0.0
    %2060 = vmatpush1.msra.mxu0 0.0
    %2061 = vmatprep.subr.mxu0 0.0
    %2062 = vmatpush1.msra.mxu0 0.0
    %2063 = vmatprep.subr.mxu0 0.0
    %2064 = vmatpush1.msra.mxu0 0.0
    %2065 = vmatprep.subr.mxu0 0.0
    %2066 = vmatpush1.msra.mxu0 0.0
    %2067 = vmatprep.subr.mxu0 0.0
    %2068 = vmatpush1.msra.mxu0 0.0
    %2069 = vmatprep.subr.mxu0 0.0
    %2070 = vmatpush1.msra.mxu0 0.0
    %2071 = vmatprep.subr.mxu0 0.0
    %2072 = vmatpush1.msra.mxu0 0.0
    %2073 = vmatprep.subr.mxu0 0.0
    %2074 = vmatpush1.msra.mxu0 0.0
    %2075 = vmatprep.subr.mxu0 0.0
    %2076 = vmatpush1.msra.mxu0 0.0
    %2077 = vmatprep.subr.mxu0 0.0
    %2078 = vmatpush1.msra.mxu0 0.0
    %2079 = vmatprep.subr.mxu0 0.0
    %2080 = vmatpush1.msra.mxu0 0.0
    %2081 = vmatprep.subr.mxu0 0.0
    %2082 = vmatpush1.msra.mxu0 0.0
    %2083 = vmatprep.subr.mxu0 0.0
    %2084 = vmatpush1.msra.mxu0 0.0
    %2085 = vmatprep.subr.mxu0 0.0
    %2086 = vmatpush1.msra.mxu0 0.0
    %2087 = vmatprep.subr.mxu0 0.0
    %2088 = vmatpush1.msra.mxu0 0.0
    %2089 = vmatprep.subr.mxu0 0.0
    %2090 = vmatpush1.msra.mxu0 0.0
    %2091 = vmatprep.subr.mxu0 0.0
    %2092 = vmatpush1.msra.mxu0 0.0
    %2093 = vmatprep.subr.mxu0 0.0
    %2094 = vmatpush1.msra.mxu0 0.0
    %2095 = vmatprep.subr.mxu0 0.0
    %2096 = vmatpush1.msra.mxu0 0.0
    %2097 = vmatprep.subr.mxu0 0.0
    %2098 = vmatpush1.msra.mxu0 0.0
    %2099 = vmatprep.subr.mxu0 0.0
    %2100 = vmatpush1.msra.mxu0 0.0
    %2101 = vmatprep.subr.mxu0 0.0
    %2102 = vmatpush1.msra.mxu0 0.0
    %2103 = vmatprep.subr.mxu0 0.0
    %2104 = vmatpush1.msra.mxu0 0.0
    %2105 = vmatprep.subr.mxu0 0.0
    %2106 = vmatpush1.msra.mxu0 0.0
    %2107 = vmatprep.subr.mxu0 0.0
    %2108 = vmatpush1.msra.mxu0 0.0
    %2109 = vmatprep.subr.mxu0 0.0
    %2110 = vmatpush1.msra.mxu0 0.0
    %2111 = vmatprep.subr.mxu0 0.0
    %2112 = vmatpush1.msra.mxu0 0.0
    %2113 = vmatprep.subr.mxu0 0.0
    %2114 = vmatpush1.msra.mxu0 0.0
    %2115 = vmatprep.mubr.f32.mxu0 0.0
    %2116 = vmatmul.mubr.f32.gmra.mrb[0].mxu0 %v2046
    %v2117 = vpop.f32.mrb[0].mxu0
    %v2118 = vadd.f32 %v2044, %v2117
    %v2119 = vpop.f32.mrb[0].mxu0
    %2120 = vmatprep.mubr.f32.mxu0 0.0
    %2121 = vmatmul.mubr.f32.gmra.mrb[0].mxu0 %v2049
    %v2122 = vpop.f32.mrb[0].mxu0
    %v2123 = vadd.f32 %v2044, %v2122
    %v2124 = vpop.f32.mrb[0].mxu0
    %2125 = vdwg.mxu0
    %2128 = vrot.lane.b32.xlu0 %v2118, 120
    %v2129 = vpop.permute.xlu0 %2128
    %2130 = vrot.lane.b32.xlu0 %v2123, 120
    %v2131 = vpop.permute.xlu0 %2130
    %2132 = vrot.lane.b32.xlu0 %v2118, 112
    %v2133 = vpop.permute.xlu0 %2132
    %2134 = vrot.lane.b32.xlu0 %v2123, 112
    %v2135 = vpop.permute.xlu0 %2134
    %2136 = vrot.lane.b32.xlu0 %v2118, 104
    %v2137 = vpop.permute.xlu0 %2136
    %2138 = vrot.lane.b32.xlu0 %v2123, 104
    %v2139 = vpop.permute.xlu0 %2138
    %2140 = vrot.lane.b32.xlu0 %v2118, 96
    %v2141 = vpop.permute.xlu0 %2140
    %v2142 = vsel %vm303, %v2118, 0
    %v2144 = vsel %vm303, %v2141, 0
    %2146 = vmatprep.subr.mxu0 0.0
    %2147 = vmatpush1.xpose.msra.mxu0 %v2144
    %2148 = vmatprep.subr.mxu0 0.0
    %2149 = vmatpush1.xpose.msra.mxu0 0.0
    %2150 = vmatprep.subr.mxu0 0.0
    %2151 = vmatpush1.xpose.msra.mxu0 0.0
    %2152 = vmatprep.subr.mxu0 0.0
    %2153 = vmatpush1.xpose.msra.mxu0 0.0
    %2154 = vmatprep.subr.mxu0 0.0
    %2155 = vmatpush1.xpose.msra.mxu0 0.0
    %2156 = vmatprep.subr.mxu0 0.0
    %2157 = vmatpush1.xpose.msra.mxu0 0.0
    %2158 = vmatprep.subr.mxu0 0.0
    %2159 = vmatpush1.xpose.msra.mxu0 0.0
    %2160 = vmatprep.subr.mxu0 0.0
    %2161 = vmatpush1.xpose.msra.mxu0 0.0
    %2162 = vmatprep.subr.mxu0 0.0
    %2163 = vmatpush1.xpose.msra.mxu0 0.0
    %2164 = vmatprep.subr.mxu0 0.0
    %2165 = vmatpush1.xpose.msra.mxu0 0.0
    %2166 = vmatprep.subr.mxu0 0.0
    %2167 = vmatpush1.xpose.msra.mxu0 0.0
    %2168 = vmatprep.subr.mxu0 0.0
    %2169 = vmatpush1.xpose.msra.mxu0 0.0
    %2170 = vmatprep.subr.mxu0 0.0
    %2171 = vmatpush1.xpose.msra.mxu0 0.0
    %2172 = vmatprep.subr.mxu0 0.0
    %2173 = vmatpush1.xpose.msra.mxu0 0.0
    %2174 = vmatprep.subr.mxu0 0.0
    %2175 = vmatpush1.xpose.msra.mxu0 0.0
    %2176 = vmatprep.subr.mxu0 0.0
    %2177 = vmatpush1.xpose.msra.mxu0 0.0
    %2178 = vmatprep.subr.mxu0 0.0
    %2179 = vmatpush1.xpose.msra.mxu0 0.0
    %2180 = vmatprep.subr.mxu0 0.0
    %2181 = vmatpush1.xpose.msra.mxu0 0.0
    %2182 = vmatprep.subr.mxu0 0.0
    %2183 = vmatpush1.xpose.msra.mxu0 0.0
    %2184 = vmatprep.subr.mxu0 0.0
    %2185 = vmatpush1.xpose.msra.mxu0 0.0
    %2186 = vmatprep.subr.mxu0 0.0
    %2187 = vmatpush1.xpose.msra.mxu0 0.0
    %2188 = vmatprep.subr.mxu0 0.0
    %2189 = vmatpush1.xpose.msra.mxu0 0.0
    %2190 = vmatprep.subr.mxu0 0.0
    %2191 = vmatpush1.xpose.msra.mxu0 0.0
    %2192 = vmatprep.subr.mxu0 0.0
    %2193 = vmatpush1.xpose.msra.mxu0 0.0
    %2194 = vmatprep.subr.mxu0 0.0
    %2195 = vmatpush1.xpose.msra.mxu0 0.0
    %2196 = vmatprep.subr.mxu0 0.0
    %2197 = vmatpush1.xpose.msra.mxu0 0.0
    %2198 = vmatprep.subr.mxu0 0.0
    %2199 = vmatpush1.xpose.msra.mxu0 0.0
    %2200 = vmatprep.subr.mxu0 0.0
    %2201 = vmatpush1.xpose.msra.mxu0 0.0
    %2202 = vmatprep.subr.mxu0 0.0
    %2203 = vmatpush1.xpose.msra.mxu0 0.0
    %2204 = vmatprep.subr.mxu0 0.0
    %2205 = vmatpush1.xpose.msra.mxu0 0.0
    %2206 = vmatprep.subr.mxu0 0.0
    %2207 = vmatpush1.xpose.msra.mxu0 0.0
    %2208 = vmatprep.subr.mxu0 0.0
    %2209 = vmatpush1.xpose.msra.mxu0 0.0
    %2210 = vmatprep.mubr.f32.mxu0 0.0
    %2211 = vmatmul.mubr.f32.gmra.mrb[0].mxu0 %v2142
    %v2212 = vpop.f32.mrb[0].mxu0
    %v2213 = vadd.f32 0.0, %v2212
    %v2214 = vpop.f32.mrb[0].mxu0
    %2215 = vdwg.mxu0
    %2216 = vrot.lane.b32.xlu0 %v2123, 96
    %v2217 = vpop.permute.xlu0 %2216
    %v2218 = vsel %vm303, %v2123, 0
    %v2220 = vsel %vm303, %v2217, 0
    %2222 = vmatprep.subr.mxu0 0.0
    %2223 = vmatpush1.xpose.msra.mxu0 %v2220
    %2224 = vmatprep.subr.mxu0 0.0
    %2225 = vmatpush1.xpose.msra.mxu0 0.0
    %2226 = vmatprep.subr.mxu0 0.0
    %2227 = vmatpush1.xpose.msra.mxu0 0.0
    %2228 = vmatprep.subr.mxu0 0.0
    %2229 = vmatpush1.xpose.msra.mxu0 0.0
    %2230 = vmatprep.subr.mxu0 0.0
    %2231 = vmatpush1.xpose.msra.mxu0 0.0
    %2232 = vmatprep.subr.mxu0 0.0
    %2233 = vmatpush1.xpose.msra.mxu0 0.0
    %2234 = vmatprep.subr.mxu0 0.0
    %2235 = vmatpush1.xpose.msra.mxu0 0.0
    %2236 = vmatprep.subr.mxu0 0.0
    %2237 = vmatpush1.xpose.msra.mxu0 0.0
    %2238 = vmatprep.subr.mxu0 0.0
    %2239 = vmatpush1.xpose.msra.mxu0 0.0
    %2240 = vmatprep.subr.mxu0 0.0
    %2241 = vmatpush1.xpose.msra.mxu0 0.0
    %2242 = vmatprep.subr.mxu0 0.0
    %2243 = vmatpush1.xpose.msra.mxu0 0.0
    %2244 = vmatprep.subr.mxu0 0.0
    %2245 = vmatpush1.xpose.msra.mxu0 0.0
    %2246 = vmatprep.subr.mxu0 0.0
    %2247 = vmatpush1.xpose.msra.mxu0 0.0
    %2248 = vmatprep.subr.mxu0 0.0
    %2249 = vmatpush1.xpose.msra.mxu0 0.0
    %2250 = vmatprep.subr.mxu0 0.0
    %2251 = vmatpush1.xpose.msra.mxu0 0.0
    %2252 = vmatprep.subr.mxu0 0.0
    %2253 = vmatpush1.xpose.msra.mxu0 0.0
    %2254 = vmatprep.subr.mxu0 0.0
    %2255 = vmatpush1.xpose.msra.mxu0 0.0
    %2256 = vmatprep.subr.mxu0 0.0
    %2257 = vmatpush1.xpose.msra.mxu0 0.0
    %2258 = vmatprep.subr.mxu0 0.0
    %2259 = vmatpush1.xpose.msra.mxu0 0.0
    %2260 = vmatprep.subr.mxu0 0.0
    %2261 = vmatpush1.xpose.msra.mxu0 0.0
    %2262 = vmatprep.subr.mxu0 0.0
    %2263 = vmatpush1.xpose.msra.mxu0 0.0
    %2264 = vmatprep.subr.mxu0 0.0
    %2265 = vmatpush1.xpose.msra.mxu0 0.0
    %2266 = vmatprep.subr.mxu0 0.0
    %2267 = vmatpush1.xpose.msra.mxu0 0.0
    %2268 = vmatprep.subr.mxu0 0.0
    %2269 = vmatpush1.xpose.msra.mxu0 0.0
    %2270 = vmatprep.subr.mxu0 0.0
    %2271 = vmatpush1.xpose.msra.mxu0 0.0
    %2272 = vmatprep.subr.mxu0 0.0
    %2273 = vmatpush1.xpose.msra.mxu0 0.0
    %2274 = vmatprep.subr.mxu0 0.0
    %2275 = vmatpush1.xpose.msra.mxu0 0.0
    %2276 = vmatprep.subr.mxu0 0.0
    %2277 = vmatpush1.xpose.msra.mxu0 0.0
    %2278 = vmatprep.subr.mxu0 0.0
    %2279 = vmatpush1.xpose.msra.mxu0 0.0
    %2280 = vmatprep.subr.mxu0 0.0
    %2281 = vmatpush1.xpose.msra.mxu0 0.0
    %2282 = vmatprep.subr.mxu0 0.0
    %2283 = vmatpush1.xpose.msra.mxu0 0.0
    %2284 = vmatprep.subr.mxu0 0.0
    %2285 = vmatpush1.xpose.msra.mxu0 0.0
    %2286 = vmatprep.mubr.f32.mxu0 0.0
    %2287 = vmatmul.mubr.f32.gmra.mrb[0].mxu0 %v2218
    %v2288 = vpop.f32.mrb[0].mxu0
    %v2289 = vadd.f32 0.0, %v2288
    %v2290 = vpop.f32.mrb[0].mxu0
    %2291 = vdwg.mxu0
    %2292 = vrot.lane.b32.xlu0 %v2129, 96
    %v2293 = vpop.permute.xlu0 %2292
    %v2294 = vsel %vm303, %v2129, 0
    %v2296 = vsel %vm303, %v2293, 0
    %2298 = vmatprep.subr.mxu0 0.0
    %2299 = vmatpush1.xpose.msra.mxu0 %v2296
    %2300 = vmatprep.subr.mxu0 0.0
    %2301 = vmatpush1.xpose.msra.mxu0 0.0
    %2302 = vmatprep.subr.mxu0 0.0
    %2303 = vmatpush1.xpose.msra.mxu0 0.0
    %2304 = vmatprep.subr.mxu0 0.0
    %2305 = vmatpush1.xpose.msra.mxu0 0.0
    %2306 = vmatprep.subr.mxu0 0.0
    %2307 = vmatpush1.xpose.msra.mxu0 0.0
    %2308 = vmatprep.subr.mxu0 0.0
    %2309 = vmatpush1.xpose.msra.mxu0 0.0
    %2310 = vmatprep.subr.mxu0 0.0
    %2311 = vmatpush1.xpose.msra.mxu0 0.0
    %2312 = vmatprep.subr.mxu0 0.0
    %2313 = vmatpush1.xpose.msra.mxu0 0.0
    %2314 = vmatprep.subr.mxu0 0.0
    %2315 = vmatpush1.xpose.msra.mxu0 0.0
    %2316 = vmatprep.subr.mxu0 0.0
    %2317 = vmatpush1.xpose.msra.mxu0 0.0
    %2318 = vmatprep.subr.mxu0 0.0
    %2319 = vmatpush1.xpose.msra.mxu0 0.0
    %2320 = vmatprep.subr.mxu0 0.0
    %2321 = vmatpush1.xpose.msra.mxu0 0.0
    %2322 = vmatprep.subr.mxu0 0.0
    %2323 = vmatpush1.xpose.msra.mxu0 0.0
    %2324 = vmatprep.subr.mxu0 0.0
    %2325 = vmatpush1.xpose.msra.mxu0 0.0
    %2326 = vmatprep.subr.mxu0 0.0
    %2327 = vmatpush1.xpose.msra.mxu0 0.0
    %2328 = vmatprep.subr.mxu0 0.0
    %2329 = vmatpush1.xpose.msra.mxu0 0.0
    %2330 = vmatprep.subr.mxu0 0.0
    %2331 = vmatpush1.xpose.msra.mxu0 0.0
    %2332 = vmatprep.subr.mxu0 0.0
    %2333 = vmatpush1.xpose.msra.mxu0 0.0
    %2334 = vmatprep.subr.mxu0 0.0
    %2335 = vmatpush1.xpose.msra.mxu0 0.0
    %2336 = vmatprep.subr.mxu0 0.0
    %2337 = vmatpush1.xpose.msra.mxu0 0.0
    %2338 = vmatprep.subr.mxu0 0.0
    %2339 = vmatpush1.xpose.msra.mxu0 0.0
    %2340 = vmatprep.subr.mxu0 0.0
    %2341 = vmatpush1.xpose.msra.mxu0 0.0
    %2342 = vmatprep.subr.mxu0 0.0
    %2343 = vmatpush1.xpose.msra.mxu0 0.0
    %2344 = vmatprep.subr.mxu0 0.0
    %2345 = vmatpush1.xpose.msra.mxu0 0.0
    %2346 = vmatprep.subr.mxu0 0.0
    %2347 = vmatpush1.xpose.msra.mxu0 0.0
    %2348 = vmatprep.subr.mxu0 0.0
    %2349 = vmatpush1.xpose.msra.mxu0 0.0
    %2350 = vmatprep.subr.mxu0 0.0
    %2351 = vmatpush1.xpose.msra.mxu0 0.0
    %2352 = vmatprep.subr.mxu0 0.0
    %2353 = vmatpush1.xpose.msra.mxu0 0.0
    %2354 = vmatprep.subr.mxu0 0.0
    %2355 = vmatpush1.xpose.msra.mxu0 0.0
    %2356 = vmatprep.subr.mxu0 0.0
    %2357 = vmatpush1.xpose.msra.mxu0 0.0
    %2358 = vmatprep.subr.mxu0 0.0
    %2359 = vmatpush1.xpose.msra.mxu0 0.0
    %2360 = vmatprep.subr.mxu0 0.0
    %2361 = vmatpush1.xpose.msra.mxu0 0.0
    %2362 = vmatprep.mubr.f32.mxu0 0.0
    %2363 = vmatmul.mubr.f32.gmra.mrb[0].mxu0 %v2294
    %v2364 = vpop.f32.mrb[0].mxu0
    %v2365 = vadd.f32 0.0, %v2364
    %v2366 = vpop.f32.mrb[0].mxu0
    %2367 = vdwg.mxu0
    %2368 = vrot.lane.b32.xlu0 %v2131, 96
    %v2369 = vpop.permute.xlu0 %2368
    %v2370 = vsel %vm303, %v2131, 0
    %v2372 = vsel %vm303, %v2369, 0
    %2374 = vmatprep.subr.mxu0 0.0
    %2375 = vmatpush1.xpose.msra.mxu0 %v2372
    %2376 = vmatprep.subr.mxu0 0.0
    %2377 = vmatpush1.xpose.msra.mxu0 0.0
    %2378 = vmatprep.subr.mxu0 0.0
    %2379 = vmatpush1.xpose.msra.mxu0 0.0
    %2380 = vmatprep.subr.mxu0 0.0
    %2381 = vmatpush1.xpose.msra.mxu0 0.0
    %2382 = vmatprep.subr.mxu0 0.0
    %2383 = vmatpush1.xpose.msra.mxu0 0.0
    %2384 = vmatprep.subr.mxu0 0.0
    %2385 = vmatpush1.xpose.msra.mxu0 0.0
    %2386 = vmatprep.subr.mxu0 0.0
    %2387 = vmatpush1.xpose.msra.mxu0 0.0
    %2388 = vmatprep.subr.mxu0 0.0
    %2389 = vmatpush1.xpose.msra.mxu0 0.0
    %2390 = vmatprep.subr.mxu0 0.0
    %2391 = vmatpush1.xpose.msra.mxu0 0.0
    %2392 = vmatprep.subr.mxu0 0.0
    %2393 = vmatpush1.xpose.msra.mxu0 0.0
    %2394 = vmatprep.subr.mxu0 0.0
    %2395 = vmatpush1.xpose.msra.mxu0 0.0
    %2396 = vmatprep.subr.mxu0 0.0
    %2397 = vmatpush1.xpose.msra.mxu0 0.0
    %2398 = vmatprep.subr.mxu0 0.0
    %2399 = vmatpush1.xpose.msra.mxu0 0.0
    %2400 = vmatprep.subr.mxu0 0.0
    %2401 = vmatpush1.xpose.msra.mxu0 0.0
    %2402 = vmatprep.subr.mxu0 0.0
    %2403 = vmatpush1.xpose.msra.mxu0 0.0
    %2404 = vmatprep.subr.mxu0 0.0
    %2405 = vmatpush1.xpose.msra.mxu0 0.0
    %2406 = vmatprep.subr.mxu0 0.0
    %2407 = vmatpush1.xpose.msra.mxu0 0.0
    %2408 = vmatprep.subr.mxu0 0.0
    %2409 = vmatpush1.xpose.msra.mxu0 0.0
    %2410 = vmatprep.subr.mxu0 0.0
    %2411 = vmatpush1.xpose.msra.mxu0 0.0
    %2412 = vmatprep.subr.mxu0 0.0
    %2413 = vmatpush1.xpose.msra.mxu0 0.0
    %2414 = vmatprep.subr.mxu0 0.0
    %2415 = vmatpush1.xpose.msra.mxu0 0.0
    %2416 = vmatprep.subr.mxu0 0.0
    %2417 = vmatpush1.xpose.msra.mxu0 0.0
    %2418 = vmatprep.subr.mxu0 0.0
    %2419 = vmatpush1.xpose.msra.mxu0 0.0
    %2420 = vmatprep.subr.mxu0 0.0
    %2421 = vmatpush1.xpose.msra.mxu0 0.0
    %2422 = vmatprep.subr.mxu0 0.0
    %2423 = vmatpush1.xpose.msra.mxu0 0.0
    %2424 = vmatprep.subr.mxu0 0.0
    %2425 = vmatpush1.xpose.msra.mxu0 0.0
    %2426 = vmatprep.subr.mxu0 0.0
    %2427 = vmatpush1.xpose.msra.mxu0 0.0
    %2428 = vmatprep.subr.mxu0 0.0
    %2429 = vmatpush1.xpose.msra.mxu0 0.0
    %2430 = vmatprep.subr.mxu0 0.0
    %2431 = vmatpush1.xpose.msra.mxu0 0.0
    %2432 = vmatprep.subr.mxu0 0.0
    %2433 = vmatpush1.xpose.msra.mxu0 0.0
    %2434 = vmatprep.subr.mxu0 0.0
    %2435 = vmatpush1.xpose.msra.mxu0 0.0
    %2436 = vmatprep.subr.mxu0 0.0
    %2437 = vmatpush1.xpose.msra.mxu0 0.0
    %2438 = vmatprep.mubr.f32.mxu0 0.0
    %2439 = vmatmul.mubr.f32.gmra.mrb[0].mxu0 %v2370
    %v2440 = vpop.f32.mrb[0].mxu0
    %v2441 = vadd.f32 0.0, %v2440
    %v2442 = vpop.f32.mrb[0].mxu0
    %2443 = vdwg.mxu0
    %2444 = vrot.lane.b32.xlu0 %v2133, 96
    %v2445 = vpop.permute.xlu0 %2444
    %v2446 = vsel %vm303, %v2133, 0
    %v2448 = vsel %vm303, %v2445, 0
    %2450 = vmatprep.subr.mxu0 0.0
    %2451 = vmatpush1.xpose.msra.mxu0 %v2448
    %2452 = vmatprep.subr.mxu0 0.0
    %2453 = vmatpush1.xpose.msra.mxu0 0.0
    %2454 = vmatprep.subr.mxu0 0.0
    %2455 = vmatpush1.xpose.msra.mxu0 0.0
    %2456 = vmatprep.subr.mxu0 0.0
    %2457 = vmatpush1.xpose.msra.mxu0 0.0
    %2458 = vmatprep.subr.mxu0 0.0
    %2459 = vmatpush1.xpose.msra.mxu0 0.0
    %2460 = vmatprep.subr.mxu0 0.0
    %2461 = vmatpush1.xpose.msra.mxu0 0.0
    %2462 = vmatprep.subr.mxu0 0.0
    %2463 = vmatpush1.xpose.msra.mxu0 0.0
    %2464 = vmatprep.subr.mxu0 0.0
    %2465 = vmatpush1.xpose.msra.mxu0 0.0
    %2466 = vmatprep.subr.mxu0 0.0
    %2467 = vmatpush1.xpose.msra.mxu0 0.0
    %2468 = vmatprep.subr.mxu0 0.0
    %2469 = vmatpush1.xpose.msra.mxu0 0.0
    %2470 = vmatprep.subr.mxu0 0.0
    %2471 = vmatpush1.xpose.msra.mxu0 0.0
    %2472 = vmatprep.subr.mxu0 0.0
    %2473 = vmatpush1.xpose.msra.mxu0 0.0
    %2474 = vmatprep.subr.mxu0 0.0
    %2475 = vmatpush1.xpose.msra.mxu0 0.0
    %2476 = vmatprep.subr.mxu0 0.0
    %2477 = vmatpush1.xpose.msra.mxu0 0.0
    %2478 = vmatprep.subr.mxu0 0.0
    %2479 = vmatpush1.xpose.msra.mxu0 0.0
    %2480 = vmatprep.subr.mxu0 0.0
    %2481 = vmatpush1.xpose.msra.mxu0 0.0
    %2482 = vmatprep.subr.mxu0 0.0
    %2483 = vmatpush1.xpose.msra.mxu0 0.0
    %2484 = vmatprep.subr.mxu0 0.0
    %2485 = vmatpush1.xpose.msra.mxu0 0.0
    %2486 = vmatprep.subr.mxu0 0.0
    %2487 = vmatpush1.xpose.msra.mxu0 0.0
    %2488 = vmatprep.subr.mxu0 0.0
    %2489 = vmatpush1.xpose.msra.mxu0 0.0
    %2490 = vmatprep.subr.mxu0 0.0
    %2491 = vmatpush1.xpose.msra.mxu0 0.0
    %2492 = vmatprep.subr.mxu0 0.0
    %2493 = vmatpush1.xpose.msra.mxu0 0.0
    %2494 = vmatprep.subr.mxu0 0.0
    %2495 = vmatpush1.xpose.msra.mxu0 0.0
    %2496 = vmatprep.subr.mxu0 0.0
    %2497 = vmatpush1.xpose.msra.mxu0 0.0
    %2498 = vmatprep.subr.mxu0 0.0
    %2499 = vmatpush1.xpose.msra.mxu0 0.0
    %2500 = vmatprep.subr.mxu0 0.0
    %2501 = vmatpush1.xpose.msra.mxu0 0.0
    %2502 = vmatprep.subr.mxu0 0.0
    %2503 = vmatpush1.xpose.msra.mxu0 0.0
    %2504 = vmatprep.subr.mxu0 0.0
    %2505 = vmatpush1.xpose.msra.mxu0 0.0
    %2506 = vmatprep.subr.mxu0 0.0
    %2507 = vmatpush1.xpose.msra.mxu0 0.0
    %2508 = vmatprep.subr.mxu0 0.0
    %2509 = vmatpush1.xpose.msra.mxu0 0.0
    %2510 = vmatprep.subr.mxu0 0.0
    %2511 = vmatpush1.xpose.msra.mxu0 0.0
    %2512 = vmatprep.subr.mxu0 0.0
    %2513 = vmatpush1.xpose.msra.mxu0 0.0
    %2514 = vmatprep.mubr.f32.mxu0 0.0
    %2515 = vmatmul.mubr.f32.gmra.mrb[0].mxu0 %v2446
    %v2516 = vpop.f32.mrb[0].mxu0
    %v2517 = vadd.f32 0.0, %v2516
    %v2518 = vpop.f32.mrb[0].mxu0
    %2519 = vdwg.mxu0
    %2520 = vrot.lane.b32.xlu0 %v2135, 96
    %v2521 = vpop.permute.xlu0 %2520
    %v2522 = vsel %vm303, %v2135, 0
    %v2524 = vsel %vm303, %v2521, 0
    %2526 = vmatprep.subr.mxu0 0.0
    %2527 = vmatpush1.xpose.msra.mxu0 %v2524
    %2528 = vmatprep.subr.mxu0 0.0
    %2529 = vmatpush1.xpose.msra.mxu0 0.0
    %2530 = vmatprep.subr.mxu0 0.0
    %2531 = vmatpush1.xpose.msra.mxu0 0.0
    %2532 = vmatprep.subr.mxu0 0.0
    %2533 = vmatpush1.xpose.msra.mxu0 0.0
    %2534 = vmatprep.subr.mxu0 0.0
    %2535 = vmatpush1.xpose.msra.mxu0 0.0
    %2536 = vmatprep.subr.mxu0 0.0
    %2537 = vmatpush1.xpose.msra.mxu0 0.0
    %2538 = vmatprep.subr.mxu0 0.0
    %2539 = vmatpush1.xpose.msra.mxu0 0.0
    %2540 = vmatprep.subr.mxu0 0.0
    %2541 = vmatpush1.xpose.msra.mxu0 0.0
    %2542 = vmatprep.subr.mxu0 0.0
    %2543 = vmatpush1.xpose.msra.mxu0 0.0
    %2544 = vmatprep.subr.mxu0 0.0
    %2545 = vmatpush1.xpose.msra.mxu0 0.0
    %2546 = vmatprep.subr.mxu0 0.0
    %2547 = vmatpush1.xpose.msra.mxu0 0.0
    %2548 = vmatprep.subr.mxu0 0.0
    %2549 = vmatpush1.xpose.msra.mxu0 0.0
    %2550 = vmatprep.subr.mxu0 0.0
    %2551 = vmatpush1.xpose.msra.mxu0 0.0
    %2552 = vmatprep.subr.mxu0 0.0
    %2553 = vmatpush1.xpose.msra.mxu0 0.0
    %2554 = vmatprep.subr.mxu0 0.0
    %2555 = vmatpush1.xpose.msra.mxu0 0.0
    %2556 = vmatprep.subr.mxu0 0.0
    %2557 = vmatpush1.xpose.msra.mxu0 0.0
    %2558 = vmatprep.subr.mxu0 0.0
    %2559 = vmatpush1.xpose.msra.mxu0 0.0
    %2560 = vmatprep.subr.mxu0 0.0
    %2561 = vmatpush1.xpose.msra.mxu0 0.0
    %2562 = vmatprep.subr.mxu0 0.0
    %2563 = vmatpush1.xpose.msra.mxu0 0.0
    %2564 = vmatprep.subr.mxu0 0.0
    %2565 = vmatpush1.xpose.msra.mxu0 0.0
    %2566 = vmatprep.subr.mxu0 0.0
    %2567 = vmatpush1.xpose.msra.mxu0 0.0
    %2568 = vmatprep.subr.mxu0 0.0
    %2569 = vmatpush1.xpose.msra.mxu0 0.0
    %2570 = vmatprep.subr.mxu0 0.0
    %2571 = vmatpush1.xpose.msra.mxu0 0.0
    %2572 = vmatprep.subr.mxu0 0.0
    %2573 = vmatpush1.xpose.msra.mxu0 0.0
    %2574 = vmatprep.subr.mxu0 0.0
    %2575 = vmatpush1.xpose.msra.mxu0 0.0
    %2576 = vmatprep.subr.mxu0 0.0
    %2577 = vmatpush1.xpose.msra.mxu0 0.0
    %2578 = vmatprep.subr.mxu0 0.0
    %2579 = vmatpush1.xpose.msra.mxu0 0.0
    %2580 = vmatprep.subr.mxu0 0.0
    %2581 = vmatpush1.xpose.msra.mxu0 0.0
    %2582 = vmatprep.subr.mxu0 0.0
    %2583 = vmatpush1.xpose.msra.mxu0 0.0
    %2584 = vmatprep.subr.mxu0 0.0
    %2585 = vmatpush1.xpose.msra.mxu0 0.0
    %2586 = vmatprep.subr.mxu0 0.0
    %2587 = vmatpush1.xpose.msra.mxu0 0.0
    %2588 = vmatprep.subr.mxu0 0.0
    %2589 = vmatpush1.xpose.msra.mxu0 0.0
    %2590 = vmatprep.mubr.f32.mxu0 0.0
    %2591 = vmatmul.mubr.f32.gmra.mrb[0].mxu0 %v2522
    %v2592 = vpop.f32.mrb[0].mxu0
    %v2593 = vadd.f32 0.0, %v2592
    %v2594 = vpop.f32.mrb[0].mxu0
    %2595 = vdwg.mxu0
    %2596 = vrot.lane.b32.xlu0 %v2137, 96
    %v2597 = vpop.permute.xlu0 %2596
    %v2598 = vsel %vm303, %v2137, 0
    %v2600 = vsel %vm303, %v2597, 0
    %2602 = vmatprep.subr.mxu0 0.0
    %2603 = vmatpush1.xpose.msra.mxu0 %v2600
    %2604 = vmatprep.subr.mxu0 0.0
    %2605 = vmatpush1.xpose.msra.mxu0 0.0
    %2606 = vmatprep.subr.mxu0 0.0
    %2607 = vmatpush1.xpose.msra.mxu0 0.0
    %2608 = vmatprep.subr.mxu0 0.0
    %2609 = vmatpush1.xpose.msra.mxu0 0.0
    %2610 = vmatprep.subr.mxu0 0.0
    %2611 = vmatpush1.xpose.msra.mxu0 0.0
    %2612 = vmatprep.subr.mxu0 0.0
    %2613 = vmatpush1.xpose.msra.mxu0 0.0
    %2614 = vmatprep.subr.mxu0 0.0
    %2615 = vmatpush1.xpose.msra.mxu0 0.0
    %2616 = vmatprep.subr.mxu0 0.0
    %2617 = vmatpush1.xpose.msra.mxu0 0.0
    %2618 = vmatprep.subr.mxu0 0.0
    %2619 = vmatpush1.xpose.msra.mxu0 0.0
    %2620 = vmatprep.subr.mxu0 0.0
    %2621 = vmatpush1.xpose.msra.mxu0 0.0
    %2622 = vmatprep.subr.mxu0 0.0
    %2623 = vmatpush1.xpose.msra.mxu0 0.0
    %2624 = vmatprep.subr.mxu0 0.0
    %2625 = vmatpush1.xpose.msra.mxu0 0.0
    %2626 = vmatprep.subr.mxu0 0.0
    %2627 = vmatpush1.xpose.msra.mxu0 0.0
    %2628 = vmatprep.subr.mxu0 0.0
    %2629 = vmatpush1.xpose.msra.mxu0 0.0
    %2630 = vmatprep.subr.mxu0 0.0
    %2631 = vmatpush1.xpose.msra.mxu0 0.0
    %2632 = vmatprep.subr.mxu0 0.0
    %2633 = vmatpush1.xpose.msra.mxu0 0.0
    %2634 = vmatprep.subr.mxu0 0.0
    %2635 = vmatpush1.xpose.msra.mxu0 0.0
    %2636 = vmatprep.subr.mxu0 0.0
    %2637 = vmatpush1.xpose.msra.mxu0 0.0
    %2638 = vmatprep.subr.mxu0 0.0
    %2639 = vmatpush1.xpose.msra.mxu0 0.0
    %2640 = vmatprep.subr.mxu0 0.0
    %2641 = vmatpush1.xpose.msra.mxu0 0.0
    %2642 = vmatprep.subr.mxu0 0.0
    %2643 = vmatpush1.xpose.msra.mxu0 0.0
    %2644 = vmatprep.subr.mxu0 0.0
    %2645 = vmatpush1.xpose.msra.mxu0 0.0
    %2646 = vmatprep.subr.mxu0 0.0
    %2647 = vmatpush1.xpose.msra.mxu0 0.0
    %2648 = vmatprep.subr.mxu0 0.0
    %2649 = vmatpush1.xpose.msra.mxu0 0.0
    %2650 = vmatprep.subr.mxu0 0.0
    %2651 = vmatpush1.xpose.msra.mxu0 0.0
    %2652 = vmatprep.subr.mxu0 0.0
    %2653 = vmatpush1.xpose.msra.mxu0 0.0
    %2654 = vmatprep.subr.mxu0 0.0
    %2655 = vmatpush1.xpose.msra.mxu0 0.0
    %2656 = vmatprep.subr.mxu0 0.0
    %2657 = vmatpush1.xpose.msra.mxu0 0.0
    %2658 = vmatprep.subr.mxu0 0.0
    %2659 = vmatpush1.xpose.msra.mxu0 0.0
    %2660 = vmatprep.subr.mxu0 0.0
    %2661 = vmatpush1.xpose.msra.mxu0 0.0
    %2662 = vmatprep.subr.mxu0 0.0
    %2663 = vmatpush1.xpose.msra.mxu0 0.0
    %2664 = vmatprep.subr.mxu0 0.0
    %2665 = vmatpush1.xpose.msra.mxu0 0.0
    %2666 = vmatprep.mubr.f32.mxu0 0.0
    %2667 = vmatmul.mubr.f32.gmra.mrb[0].mxu0 %v2598
    %v2668 = vpop.f32.mrb[0].mxu0
    %v2669 = vadd.f32 0.0, %v2668
    %v2670 = vpop.f32.mrb[0].mxu0
    %2671 = vdwg.mxu0
    %2672 = vrot.lane.b32.xlu0 %v2139, 96
    %v2673 = vpop.permute.xlu0 %2672
    %v2674 = vsel %vm303, %v2139, 0
    %v2676 = vsel %vm303, %v2673, 0
    %2678 = vmatprep.subr.mxu0 0.0
    %2679 = vmatpush1.xpose.msra.mxu0 %v2676
    %2680 = vmatprep.subr.mxu0 0.0
    %2681 = vmatpush1.xpose.msra.mxu0 0.0
    %2682 = vmatprep.subr.mxu0 0.0
    %2683 = vmatpush1.xpose.msra.mxu0 0.0
    %2684 = vmatprep.subr.mxu0 0.0
    %2685 = vmatpush1.xpose.msra.mxu0 0.0
    %2686 = vmatprep.subr.mxu0 0.0
    %2687 = vmatpush1.xpose.msra.mxu0 0.0
    %2688 = vmatprep.subr.mxu0 0.0
    %2689 = vmatpush1.xpose.msra.mxu0 0.0
    %2690 = vmatprep.subr.mxu0 0.0
    %2691 = vmatpush1.xpose.msra.mxu0 0.0
    %2692 = vmatprep.subr.mxu0 0.0
    %2693 = vmatpush1.xpose.msra.mxu0 0.0
    %2694 = vmatprep.subr.mxu0 0.0
    %2695 = vmatpush1.xpose.msra.mxu0 0.0
    %2696 = vmatprep.subr.mxu0 0.0
    %2697 = vmatpush1.xpose.msra.mxu0 0.0
    %2698 = vmatprep.subr.mxu0 0.0
    %2699 = vmatpush1.xpose.msra.mxu0 0.0
    %2700 = vmatprep.subr.mxu0 0.0
    %2701 = vmatpush1.xpose.msra.mxu0 0.0
    %2702 = vmatprep.subr.mxu0 0.0
    %2703 = vmatpush1.xpose.msra.mxu0 0.0
    %2704 = vmatprep.subr.mxu0 0.0
    %2705 = vmatpush1.xpose.msra.mxu0 0.0
    %2706 = vmatprep.subr.mxu0 0.0
    %2707 = vmatpush1.xpose.msra.mxu0 0.0
    %2708 = vmatprep.subr.mxu0 0.0
    %2709 = vmatpush1.xpose.msra.mxu0 0.0
    %2710 = vmatprep.subr.mxu0 0.0
    %2711 = vmatpush1.xpose.msra.mxu0 0.0
    %2712 = vmatprep.subr.mxu0 0.0
    %2713 = vmatpush1.xpose.msra.mxu0 0.0
    %2714 = vmatprep.subr.mxu0 0.0
    %2715 = vmatpush1.xpose.msra.mxu0 0.0
    %2716 = vmatprep.subr.mxu0 0.0
    %2717 = vmatpush1.xpose.msra.mxu0 0.0
    %2718 = vmatprep.subr.mxu0 0.0
    %2719 = vmatpush1.xpose.msra.mxu0 0.0
    %2720 = vmatprep.subr.mxu0 0.0
    %2721 = vmatpush1.xpose.msra.mxu0 0.0
    %2722 = vmatprep.subr.mxu0 0.0
    %2723 = vmatpush1.xpose.msra.mxu0 0.0
    %2724 = vmatprep.subr.mxu0 0.0
    %2725 = vmatpush1.xpose.msra.mxu0 0.0
    %2726 = vmatprep.subr.mxu0 0.0
    %2727 = vmatpush1.xpose.msra.mxu0 0.0
    %2728 = vmatprep.subr.mxu0 0.0
    %2729 = vmatpush1.xpose.msra.mxu0 0.0
    %2730 = vmatprep.subr.mxu0 0.0
    %2731 = vmatpush1.xpose.msra.mxu0 0.0
    %2732 = vmatprep.subr.mxu0 0.0
    %2733 = vmatpush1.xpose.msra.mxu0 0.0
    %2734 = vmatprep.subr.mxu0 0.0
    %2735 = vmatpush1.xpose.msra.mxu0 0.0
    %2736 = vmatprep.subr.mxu0 0.0
    %2737 = vmatpush1.xpose.msra.mxu0 0.0
    %2738 = vmatprep.subr.mxu0 0.0
    %2739 = vmatpush1.xpose.msra.mxu0 0.0
    %2740 = vmatprep.subr.mxu0 0.0
    %2741 = vmatpush1.xpose.msra.mxu0 0.0
    %2742 = vmatprep.mubr.f32.mxu0 0.0
    %2743 = vmatmul.mubr.f32.gmra.mrb[0].mxu0 %v2674
    %v2744 = vpop.f32.mrb[0].mxu0
    %v2745 = vadd.f32 0.0, %v2744
    %v2746 = vpop.f32.mrb[0].mxu0
    %2747 = vdwg.mxu0
    %v2748 = vmul.f32 %v2213, 0.35355338
    %v2749 = vmul.f32 %v2289, 0.35355338
    %v2750 = vmul.f32 %v2365, 0.35355338
    %v2751 = vmul.f32 %v2441, 0.35355338
    %v2752 = vmul.f32 %v2517, 0.35355338
    %v2753 = vmul.f32 %v2593, 0.35355338
    %v2754 = vmul.f32 %v2669, 0.35355338
    %v2755 = vmul.f32 %v2745, 0.35355338
    %v2756 = vadd.f32 %v2748, %v923
    %v2757 = vadd.f32 %v2749, %v927
    %v2758 = vadd.f32 %v2750, %v923
    %v2759 = vadd.f32 %v2751, %v927
    %v2760 = vadd.f32 %v2752, %v923
    %v2761 = vadd.f32 %v2753, %v927
    %v2762 = vadd.f32 %v2754, %v923
    %v2763 = vadd.f32 %v2755, %v927
    %v2764 = vsel %vm303, %v2756, -inf
    %2765 = vmax.xlane.f32.xlu0 %v2764
    %v2766 = vpop.xlane.xlu0 %2765
    %v2767 = vsel %vm303, %v2757, -inf
    %2768 = vmax.xlane.f32.xlu0 %v2767
    %v2769 = vpop.xlane.xlu0 %2768
    %v2770 = vsel %vm303, %v2758, -inf
    %2771 = vmax.xlane.f32.xlu0 %v2770
    %v2772 = vpop.xlane.xlu0 %2771
    %v2773 = vsel %vm303, %v2759, -inf
    %2774 = vmax.xlane.f32.xlu0 %v2773
    %v2775 = vpop.xlane.xlu0 %2774
    %v2776 = vsel %vm303, %v2760, -inf
    %2777 = vmax.xlane.f32.xlu0 %v2776
    %v2778 = vpop.xlane.xlu0 %2777
    %v2779 = vsel %vm303, %v2761, -inf
    %2780 = vmax.xlane.f32.xlu0 %v2779
    %v2781 = vpop.xlane.xlu0 %2780
    %v2782 = vsel %vm303, %v2762, -inf
    %2783 = vmax.xlane.f32.xlu0 %v2782
    %v2784 = vpop.xlane.xlu0 %2783
    %v2785 = vsel %vm303, %v2763, -inf
    %2786 = vmax.xlane.f32.xlu0 %v2785
    %v2787 = vpop.xlane.xlu0 %2786
    %v2788 = vsub.f32 %v2756, %v2766
    %v2789 = vsub.f32 %v2757, %v2769
    %v2790 = vsub.f32 %v2758, %v2772
    %v2791 = vsub.f32 %v2759, %v2775
    %v2792 = vsub.f32 %v2760, %v2778
    %v2793 = vsub.f32 %v2761, %v2781
    %v2794 = vsub.f32 %v2762, %v2784
    %v2795 = vsub.f32 %v2763, %v2787
    %v2796 = vmul.f32 %v2788, 1.442695
    %v2797 = vpow.pop %v2796
    %v2798 = vmul.f32 %v2789, 1.442695
    %v2799 = vpow.pop %v2798
    %v2800 = vmul.f32 %v2790, 1.442695
    %v2801 = vpow.pop %v2800
    %v2802 = vmul.f32 %v2791, 1.442695
    %v2803 = vpow.pop %v2802
    %v2804 = vmul.f32 %v2792, 1.442695
    %v2805 = vpow.pop %v2804
    %v2806 = vmul.f32 %v2793, 1.442695
    %v2807 = vpow.pop %v2806
    %v2808 = vmul.f32 %v2794, 1.442695
    %v2809 = vpow.pop %v2808
    %v2810 = vmul.f32 %v2795, 1.442695
    %v2811 = vpow.pop %v2810
    %v2812 = vsel %vm303, %v2797, 0.0
    %2813 = vadd.xlane.f32.xlu0 %v2812
    %v2814 = vpop.xlane.xlu0 %2813
    %v2815 = vsel %vm303, %v2799, 0.0
    %2816 = vadd.xlane.f32.xlu0 %v2815
    %v2817 = vpop.xlane.xlu0 %2816
    %v2818 = vsel %vm303, %v2801, 0.0
    %2819 = vadd.xlane.f32.xlu0 %v2818
    %v2820 = vpop.xlane.xlu0 %2819
    %v2821 = vsel %vm303, %v2803, 0.0
    %2822 = vadd.xlane.f32.xlu0 %v2821
    %v2823 = vpop.xlane.xlu0 %2822
    %v2824 = vsel %vm303, %v2805, 0.0
    %2825 = vadd.xlane.f32.xlu0 %v2824
    %v2826 = vpop.xlane.xlu0 %2825
    %v2827 = vsel %vm303, %v2807, 0.0
    %2828 = vadd.xlane.f32.xlu0 %v2827
    %v2829 = vpop.xlane.xlu0 %2828
    %v2830 = vsel %vm303, %v2809, 0.0
    %2831 = vadd.xlane.f32.xlu0 %v2830
    %v2832 = vpop.xlane.xlu0 %2831
    %v2833 = vsel %vm303, %v2811, 0.0
    %2834 = vadd.xlane.f32.xlu0 %v2833
    %v2835 = vpop.xlane.xlu0 %2834
    %v2836 = vrcp.pop %v2814
    %v2837 = vrcp.pop %v2817
    %v2838 = vrcp.pop %v2820
    %v2839 = vrcp.pop %v2823
    %v2840 = vrcp.pop %v2826
    %v2841 = vrcp.pop %v2829
    %v2842 = vrcp.pop %v2832
    %v2843 = vrcp.pop %v2835
    %v2844 = vmul.f32 %v2797, %v2836
    %v2845 = vmul.f32 %v2799, %v2837
    %v2846 = vmul.f32 %v2801, %v2838
    %v2847 = vmul.f32 %v2803, %v2839
    %v2848 = vmul.f32 %v2805, %v2840
    %v2849 = vmul.f32 %v2807, %v2841
    %v2850 = vmul.f32 %v2809, %v2842
    %v2851 = vmul.f32 %v2811, %v2843
    %2852 = vrot.lane.b32.xlu0 %v2118, 64
    %v2853 = vpop.permute.xlu0 %2852
    %v2856 = vsel %vm303, %v2844, 0
    %2858 = vmatprep.subr.mxu0 0.0
    %2859 = vmatpush1.msra.mxu0 %v2853
    %2860 = vmatprep.subr.mxu0 0.0
    %2861 = vmatpush1.msra.mxu0 0.0
    %2862 = vmatprep.subr.mxu0 0.0
    %2863 = vmatpush1.msra.mxu0 0.0
    %2864 = vmatprep.subr.mxu0 0.0
    %2865 = vmatpush1.msra.mxu0 0.0
    %2866 = vmatprep.subr.mxu0 0.0
    %2867 = vmatpush1.msra.mxu0 0.0
    %2868 = vmatprep.subr.mxu0 0.0
    %2869 = vmatpush1.msra.mxu0 0.0
    %2870 = vmatprep.subr.mxu0 0.0
    %2871 = vmatpush1.msra.mxu0 0.0
    %2872 = vmatprep.subr.mxu0 0.0
    %2873 = vmatpush1.msra.mxu0 0.0
    %2874 = vmatprep.subr.mxu0 0.0
    %2875 = vmatpush1.msra.mxu0 0.0
    %2876 = vmatprep.subr.mxu0 0.0
    %2877 = vmatpush1.msra.mxu0 0.0
    %2878 = vmatprep.subr.mxu0 0.0
    %2879 = vmatpush1.msra.mxu0 0.0
    %2880 = vmatprep.subr.mxu0 0.0
    %2881 = vmatpush1.msra.mxu0 0.0
    %2882 = vmatprep.subr.mxu0 0.0
    %2883 = vmatpush1.msra.mxu0 0.0
    %2884 = vmatprep.subr.mxu0 0.0
    %2885 = vmatpush1.msra.mxu0 0.0
    %2886 = vmatprep.subr.mxu0 0.0
    %2887 = vmatpush1.msra.mxu0 0.0
    %2888 = vmatprep.subr.mxu0 0.0
    %2889 = vmatpush1.msra.mxu0 0.0
    %2890 = vmatprep.subr.mxu0 0.0
    %2891 = vmatpush1.msra.mxu0 0.0
    %2892 = vmatprep.subr.mxu0 0.0
    %2893 = vmatpush1.msra.mxu0 0.0
    %2894 = vmatprep.subr.mxu0 0.0
    %2895 = vmatpush1.msra.mxu0 0.0
    %2896 = vmatprep.subr.mxu0 0.0
    %2897 = vmatpush1.msra.mxu0 0.0
    %2898 = vmatprep.subr.mxu0 0.0
    %2899 = vmatpush1.msra.mxu0 0.0
    %2900 = vmatprep.subr.mxu0 0.0
    %2901 = vmatpush1.msra.mxu0 0.0
    %2902 = vmatprep.subr.mxu0 0.0
    %2903 = vmatpush1.msra.mxu0 0.0
    %2904 = vmatprep.subr.mxu0 0.0
    %2905 = vmatpush1.msra.mxu0 0.0
    %2906 = vmatprep.subr.mxu0 0.0
    %2907 = vmatpush1.msra.mxu0 0.0
    %2908 = vmatprep.subr.mxu0 0.0
    %2909 = vmatpush1.msra.mxu0 0.0
    %2910 = vmatprep.subr.mxu0 0.0
    %2911 = vmatpush1.msra.mxu0 0.0
    %2912 = vmatprep.subr.mxu0 0.0
    %2913 = vmatpush1.msra.mxu0 0.0
    %2914 = vmatprep.subr.mxu0 0.0
    %2915 = vmatpush1.msra.mxu0 0.0
    %2916 = vmatprep.subr.mxu0 0.0
    %2917 = vmatpush1.msra.mxu0 0.0
    %2918 = vmatprep.subr.mxu0 0.0
    %2919 = vmatpush1.msra.mxu0 0.0
    %2920 = vmatprep.subr.mxu0 0.0
    %2921 = vmatpush1.msra.mxu0 0.0
    %2922 = vmatprep.mubr.f32.mxu0 0.0
    %2923 = vmatmul.mubr.f32.gmra.mrb[0].mxu0 %v2856
    %v2924 = vpop.f32.mrb[0].mxu0
    %v2925 = vadd.f32 0.0, %v2924
    %v2926 = vpop.f32.mrb[0].mxu0
    %2927 = vdwg.mxu0
    %2928 = vrot.lane.b32.xlu0 %v2123, 64
    %v2929 = vpop.permute.xlu0 %2928
    %v2932 = vsel %vm303, %v2845, 0
    %2934 = vmatprep.subr.mxu0 0.0
    %2935 = vmatpush1.msra.mxu0 %v2929
    %2936 = vmatprep.subr.mxu0 0.0
    %2937 = vmatpush1.msra.mxu0 0.0
    %2938 = vmatprep.subr.mxu0 0.0
    %2939 = vmatpush1.msra.mxu0 0.0
    %2940 = vmatprep.subr.mxu0 0.0
    %2941 = vmatpush1.msra.mxu0 0.0
    %2942 = vmatprep.subr.mxu0 0.0
    %2943 = vmatpush1.msra.mxu0 0.0
    %2944 = vmatprep.subr.mxu0 0.0
    %2945 = vmatpush1.msra.mxu0 0.0
    %2946 = vmatprep.subr.mxu0 0.0
    %2947 = vmatpush1.msra.mxu0 0.0
    %2948 = vmatprep.subr.mxu0 0.0
    %2949 = vmatpush1.msra.mxu0 0.0
    %2950 = vmatprep.subr.mxu0 0.0
    %2951 = vmatpush1.msra.mxu0 0.0
    %2952 = vmatprep.subr.mxu0 0.0
    %2953 = vmatpush1.msra.mxu0 0.0
    %2954 = vmatprep.subr.mxu0 0.0
    %2955 = vmatpush1.msra.mxu0 0.0
    %2956 = vmatprep.subr.mxu0 0.0
    %2957 = vmatpush1.msra.mxu0 0.0
    %2958 = vmatprep.subr.mxu0 0.0
    %2959 = vmatpush1.msra.mxu0 0.0
    %2960 = vmatprep.subr.mxu0 0.0
    %2961 = vmatpush1.msra.mxu0 0.0
    %2962 = vmatprep.subr.mxu0 0.0
    %2963 = vmatpush1.msra.mxu0 0.0
    %2964 = vmatprep.subr.mxu0 0.0
    %2965 = vmatpush1.msra.mxu0 0.0
    %2966 = vmatprep.subr.mxu0 0.0
    %2967 = vmatpush1.msra.mxu0 0.0
    %2968 = vmatprep.subr.mxu0 0.0
    %2969 = vmatpush1.msra.mxu0 0.0
    %2970 = vmatprep.subr.mxu0 0.0
    %2971 = vmatpush1.msra.mxu0 0.0
    %2972 = vmatprep.subr.mxu0 0.0
    %2973 = vmatpush1.msra.mxu0 0.0
    %2974 = vmatprep.subr.mxu0 0.0
    %2975 = vmatpush1.msra.mxu0 0.0
    %2976 = vmatprep.subr.mxu0 0.0
    %2977 = vmatpush1.msra.mxu0 0.0
    %2978 = vmatprep.subr.mxu0 0.0
    %2979 = vmatpush1.msra.mxu0 0.0
    %2980 = vmatprep.subr.mxu0 0.0
    %2981 = vmatpush1.msra.mxu0 0.0
    %2982 = vmatprep.subr.mxu0 0.0
    %2983 = vmatpush1.msra.mxu0 0.0
    %2984 = vmatprep.subr.mxu0 0.0
    %2985 = vmatpush1.msra.mxu0 0.0
    %2986 = vmatprep.subr.mxu0 0.0
    %2987 = vmatpush1.msra.mxu0 0.0
    %2988 = vmatprep.subr.mxu0 0.0
    %2989 = vmatpush1.msra.mxu0 0.0
    %2990 = vmatprep.subr.mxu0 0.0
    %2991 = vmatpush1.msra.mxu0 0.0
    %2992 = vmatprep.subr.mxu0 0.0
    %2993 = vmatpush1.msra.mxu0 0.0
    %2994 = vmatprep.subr.mxu0 0.0
    %2995 = vmatpush1.msra.mxu0 0.0
    %2996 = vmatprep.subr.mxu0 0.0
    %2997 = vmatpush1.msra.mxu0 0.0
    %2998 = vmatprep.mubr.f32.mxu0 0.0
    %2999 = vmatmul.mubr.f32.gmra.mrb[0].mxu0 %v2932
    %v3000 = vpop.f32.mrb[0].mxu0
    %v3001 = vadd.f32 0.0, %v3000
    %v3002 = vpop.f32.mrb[0].mxu0
    %3003 = vdwg.mxu0
    %3004 = vrot.lane.b32.xlu0 %v2129, 64
    %v3005 = vpop.permute.xlu0 %3004
    %v3008 = vsel %vm303, %v2846, 0
    %3010 = vmatprep.subr.mxu0 0.0
    %3011 = vmatpush1.msra.mxu0 %v3005
    %3012 = vmatprep.subr.mxu0 0.0
    %3013 = vmatpush1.msra.mxu0 0.0
    %3014 = vmatprep.subr.mxu0 0.0
    %3015 = vmatpush1.msra.mxu0 0.0
    %3016 = vmatprep.subr.mxu0 0.0
    %3017 = vmatpush1.msra.mxu0 0.0
    %3018 = vmatprep.subr.mxu0 0.0
    %3019 = vmatpush1.msra.mxu0 0.0
    %3020 = vmatprep.subr.mxu0 0.0
    %3021 = vmatpush1.msra.mxu0 0.0
    %3022 = vmatprep.subr.mxu0 0.0
    %3023 = vmatpush1.msra.mxu0 0.0
    %3024 = vmatprep.subr.mxu0 0.0
    %3025 = vmatpush1.msra.mxu0 0.0
    %3026 = vmatprep.subr.mxu0 0.0
    %3027 = vmatpush1.msra.mxu0 0.0
    %3028 = vmatprep.subr.mxu0 0.0
    %3029 = vmatpush1.msra.mxu0 0.0
    %3030 = vmatprep.subr.mxu0 0.0
    %3031 = vmatpush1.msra.mxu0 0.0
    %3032 = vmatprep.subr.mxu0 0.0
    %3033 = vmatpush1.msra.mxu0 0.0
    %3034 = vmatprep.subr.mxu0 0.0
    %3035 = vmatpush1.msra.mxu0 0.0
    %3036 = vmatprep.subr.mxu0 0.0
    %3037 = vmatpush1.msra.mxu0 0.0
    %3038 = vmatprep.subr.mxu0 0.0
    %3039 = vmatpush1.msra.mxu0 0.0
    %3040 = vmatprep.subr.mxu0 0.0
    %3041 = vmatpush1.msra.mxu0 0.0
    %3042 = vmatprep.subr.mxu0 0.0
    %3043 = vmatpush1.msra.mxu0 0.0
    %3044 = vmatprep.subr.mxu0 0.0
    %3045 = vmatpush1.msra.mxu0 0.0
    %3046 = vmatprep.subr.mxu0 0.0
    %3047 = vmatpush1.msra.mxu0 0.0
    %3048 = vmatprep.subr.mxu0 0.0
    %3049 = vmatpush1.msra.mxu0 0.0
    %3050 = vmatprep.subr.mxu0 0.0
    %3051 = vmatpush1.msra.mxu0 0.0
    %3052 = vmatprep.subr.mxu0 0.0
    %3053 = vmatpush1.msra.mxu0 0.0
    %3054 = vmatprep.subr.mxu0 0.0
    %3055 = vmatpush1.msra.mxu0 0.0
    %3056 = vmatprep.subr.mxu0 0.0
    %3057 = vmatpush1.msra.mxu0 0.0
    %3058 = vmatprep.subr.mxu0 0.0
    %3059 = vmatpush1.msra.mxu0 0.0
    %3060 = vmatprep.subr.mxu0 0.0
    %3061 = vmatpush1.msra.mxu0 0.0
    %3062 = vmatprep.subr.mxu0 0.0
    %3063 = vmatpush1.msra.mxu0 0.0
    %3064 = vmatprep.subr.mxu0 0.0
    %3065 = vmatpush1.msra.mxu0 0.0
    %3066 = vmatprep.subr.mxu0 0.0
    %3067 = vmatpush1.msra.mxu0 0.0
    %3068 = vmatprep.subr.mxu0 0.0
    %3069 = vmatpush1.msra.mxu0 0.0
    %3070 = vmatprep.subr.mxu0 0.0
    %3071 = vmatpush1.msra.mxu0 0.0
    %3072 = vmatprep.subr.mxu0 0.0
    %3073 = vmatpush1.msra.mxu0 0.0
    %3074 = vmatprep.mubr.f32.mxu0 0.0
    %3075 = vmatmul.mubr.f32.gmra.mrb[0].mxu0 %v3008
    %v3076 = vpop.f32.mrb[0].mxu0
    %v3077 = vadd.f32 0.0, %v3076
    %v3078 = vpop.f32.mrb[0].mxu0
    %3079 = vdwg.mxu0
    %3080 = vrot.lane.b32.xlu0 %v2131, 64
    %v3081 = vpop.permute.xlu0 %3080
    %v3084 = vsel %vm303, %v2847, 0
    %3086 = vmatprep.subr.mxu0 0.0
    %3087 = vmatpush1.msra.mxu0 %v3081
    %3088 = vmatprep.subr.mxu0 0.0
    %3089 = vmatpush1.msra.mxu0 0.0
    %3090 = vmatprep.subr.mxu0 0.0
    %3091 = vmatpush1.msra.mxu0 0.0
    %3092 = vmatprep.subr.mxu0 0.0
    %3093 = vmatpush1.msra.mxu0 0.0
    %3094 = vmatprep.subr.mxu0 0.0
    %3095 = vmatpush1.msra.mxu0 0.0
    %3096 = vmatprep.subr.mxu0 0.0
    %3097 = vmatpush1.msra.mxu0 0.0
    %3098 = vmatprep.subr.mxu0 0.0
    %3099 = vmatpush1.msra.mxu0 0.0
    %3100 = vmatprep.subr.mxu0 0.0
    %3101 = vmatpush1.msra.mxu0 0.0
    %3102 = vmatprep.subr.mxu0 0.0
    %3103 = vmatpush1.msra.mxu0 0.0
    %3104 = vmatprep.subr.mxu0 0.0
    %3105 = vmatpush1.msra.mxu0 0.0
    %3106 = vmatprep.subr.mxu0 0.0
    %3107 = vmatpush1.msra.mxu0 0.0
    %3108 = vmatprep.subr.mxu0 0.0
    %3109 = vmatpush1.msra.mxu0 0.0
    %3110 = vmatprep.subr.mxu0 0.0
    %3111 = vmatpush1.msra.mxu0 0.0
    %3112 = vmatprep.subr.mxu0 0.0
    %3113 = vmatpush1.msra.mxu0 0.0
    %3114 = vmatprep.subr.mxu0 0.0
    %3115 = vmatpush1.msra.mxu0 0.0
    %3116 = vmatprep.subr.mxu0 0.0
    %3117 = vmatpush1.msra.mxu0 0.0
    %3118 = vmatprep.subr.mxu0 0.0
    %3119 = vmatpush1.msra.mxu0 0.0
    %3120 = vmatprep.subr.mxu0 0.0
    %3121 = vmatpush1.msra.mxu0 0.0
    %3122 = vmatprep.subr.mxu0 0.0
    %3123 = vmatpush1.msra.mxu0 0.0
    %3124 = vmatprep.subr.mxu0 0.0
    %3125 = vmatpush1.msra.mxu0 0.0
    %3126 = vmatprep.subr.mxu0 0.0
    %3127 = vmatpush1.msra.mxu0 0.0
    %3128 = vmatprep.subr.mxu0 0.0
    %3129 = vmatpush1.msra.mxu0 0.0
    %3130 = vmatprep.subr.mxu0 0.0
    %3131 = vmatpush1.msra.mxu0 0.0
    %3132 = vmatprep.subr.mxu0 0.0
    %3133 = vmatpush1.msra.mxu0 0.0
    %3134 = vmatprep.subr.mxu0 0.0
    %3135 = vmatpush1.msra.mxu0 0.0
    %3136 = vmatprep.subr.mxu0 0.0
    %3137 = vmatpush1.msra.mxu0 0.0
    %3138 = vmatprep.subr.mxu0 0.0
    %3139 = vmatpush1.msra.mxu0 0.0
    %3140 = vmatprep.subr.mxu0 0.0
    %3141 = vmatpush1.msra.mxu0 0.0
    %3142 = vmatprep.subr.mxu0 0.0
    %3143 = vmatpush1.msra.mxu0 0.0
    %3144 = vmatprep.subr.mxu0 0.0
    %3145 = vmatpush1.msra.mxu0 0.0
    %3146 = vmatprep.subr.mxu0 0.0
    %3147 = vmatpush1.msra.mxu0 0.0
    %3148 = vmatprep.subr.mxu0 0.0
    %3149 = vmatpush1.msra.mxu0 0.0
    %3150 = vmatprep.mubr.f32.mxu0 0.0
    %3151 = vmatmul.mubr.f32.gmra.mrb[0].mxu0 %v3084
    %v3152 = vpop.f32.mrb[0].mxu0
    %v3153 = vadd.f32 0.0, %v3152
    %v3154 = vpop.f32.mrb[0].mxu0
    %3155 = vdwg.mxu0
    %3156 = vrot.lane.b32.xlu0 %v2133, 64
    %v3157 = vpop.permute.xlu0 %3156
    %v3160 = vsel %vm303, %v2848, 0
    %3162 = vmatprep.subr.mxu0 0.0
    %3163 = vmatpush1.msra.mxu0 %v3157
    %3164 = vmatprep.subr.mxu0 0.0
    %3165 = vmatpush1.msra.mxu0 0.0
    %3166 = vmatprep.subr.mxu0 0.0
    %3167 = vmatpush1.msra.mxu0 0.0
    %3168 = vmatprep.subr.mxu0 0.0
    %3169 = vmatpush1.msra.mxu0 0.0
    %3170 = vmatprep.subr.mxu0 0.0
    %3171 = vmatpush1.msra.mxu0 0.0
    %3172 = vmatprep.subr.mxu0 0.0
    %3173 = vmatpush1.msra.mxu0 0.0
    %3174 = vmatprep.subr.mxu0 0.0
    %3175 = vmatpush1.msra.mxu0 0.0
    %3176 = vmatprep.subr.mxu0 0.0
    %3177 = vmatpush1.msra.mxu0 0.0
    %3178 = vmatprep.subr.mxu0 0.0
    %3179 = vmatpush1.msra.mxu0 0.0
    %3180 = vmatprep.subr.mxu0 0.0
    %3181 = vmatpush1.msra.mxu0 0.0
    %3182 = vmatprep.subr.mxu0 0.0
    %3183 = vmatpush1.msra.mxu0 0.0
    %3184 = vmatprep.subr.mxu0 0.0
    %3185 = vmatpush1.msra.mxu0 0.0
    %3186 = vmatprep.subr.mxu0 0.0
    %3187 = vmatpush1.msra.mxu0 0.0
    %3188 = vmatprep.subr.mxu0 0.0
    %3189 = vmatpush1.msra.mxu0 0.0
    %3190 = vmatprep.subr.mxu0 0.0
    %3191 = vmatpush1.msra.mxu0 0.0
    %3192 = vmatprep.subr.mxu0 0.0
    %3193 = vmatpush1.msra.mxu0 0.0
    %3194 = vmatprep.subr.mxu0 0.0
    %3195 = vmatpush1.msra.mxu0 0.0
    %3196 = vmatprep.subr.mxu0 0.0
    %3197 = vmatpush1.msra.mxu0 0.0
    %3198 = vmatprep.subr.mxu0 0.0
    %3199 = vmatpush1.msra.mxu0 0.0
    %3200 = vmatprep.subr.mxu0 0.0
    %3201 = vmatpush1.msra.mxu0 0.0
    %3202 = vmatprep.subr.mxu0 0.0
    %3203 = vmatpush1.msra.mxu0 0.0
    %3204 = vmatprep.subr.mxu0 0.0
    %3205 = vmatpush1.msra.mxu0 0.0
    %3206 = vmatprep.subr.mxu0 0.0
    %3207 = vmatpush1.msra.mxu0 0.0
    %3208 = vmatprep.subr.mxu0 0.0
    %3209 = vmatpush1.msra.mxu0 0.0
    %3210 = vmatprep.subr.mxu0 0.0
    %3211 = vmatpush1.msra.mxu0 0.0
    %3212 = vmatprep.subr.mxu0 0.0
    %3213 = vmatpush1.msra.mxu0 0.0
    %3214 = vmatprep.subr.mxu0 0.0
    %3215 = vmatpush1.msra.mxu0 0.0
    %3216 = vmatprep.subr.mxu0 0.0
    %3217 = vmatpush1.msra.mxu0 0.0
    %3218 = vmatprep.subr.mxu0 0.0
    %3219 = vmatpush1.msra.mxu0 0.0
    %3220 = vmatprep.subr.mxu0 0.0
    %3221 = vmatpush1.msra.mxu0 0.0
    %3222 = vmatprep.subr.mxu0 0.0
    %3223 = vmatpush1.msra.mxu0 0.0
    %3224 = vmatprep.subr.mxu0 0.0
    %3225 = vmatpush1.msra.mxu0 0.0
    %3226 = vmatprep.mubr.f32.mxu0 0.0
    %3227 = vmatmul.mubr.f32.gmra.mrb[0].mxu0 %v3160
    %v3228 = vpop.f32.mrb[0].mxu0
    %v3229 = vadd.f32 0.0, %v3228
    %v3230 = vpop.f32.mrb[0].mxu0
    %3231 = vdwg.mxu0
    %3232 = vrot.lane.b32.xlu0 %v2135, 64
    %v3233 = vpop.permute.xlu0 %3232
    %v3236 = vsel %vm303, %v2849, 0
    %3238 = vmatprep.subr.mxu0 0.0
    %3239 = vmatpush1.msra.mxu0 %v3233
    %3240 = vmatprep.subr.mxu0 0.0
    %3241 = vmatpush1.msra.mxu0 0.0
    %3242 = vmatprep.subr.mxu0 0.0
    %3243 = vmatpush1.msra.mxu0 0.0
    %3244 = vmatprep.subr.mxu0 0.0
    %3245 = vmatpush1.msra.mxu0 0.0
    %3246 = vmatprep.subr.mxu0 0.0
    %3247 = vmatpush1.msra.mxu0 0.0
    %3248 = vmatprep.subr.mxu0 0.0
    %3249 = vmatpush1.msra.mxu0 0.0
    %3250 = vmatprep.subr.mxu0 0.0
    %3251 = vmatpush1.msra.mxu0 0.0
    %3252 = vmatprep.subr.mxu0 0.0
    %3253 = vmatpush1.msra.mxu0 0.0
    %3254 = vmatprep.subr.mxu0 0.0
    %3255 = vmatpush1.msra.mxu0 0.0
    %3256 = vmatprep.subr.mxu0 0.0
    %3257 = vmatpush1.msra.mxu0 0.0
    %3258 = vmatprep.subr.mxu0 0.0
    %3259 = vmatpush1.msra.mxu0 0.0
    %3260 = vmatprep.subr.mxu0 0.0
    %3261 = vmatpush1.msra.mxu0 0.0
    %3262 = vmatprep.subr.mxu0 0.0
    %3263 = vmatpush1.msra.mxu0 0.0
    %3264 = vmatprep.subr.mxu0 0.0
    %3265 = vmatpush1.msra.mxu0 0.0
    %3266 = vmatprep.subr.mxu0 0.0
    %3267 = vmatpush1.msra.mxu0 0.0
    %3268 = vmatprep.subr.mxu0 0.0
    %3269 = vmatpush1.msra.mxu0 0.0
    %3270 = vmatprep.subr.mxu0 0.0
    %3271 = vmatpush1.msra.mxu0 0.0
    %3272 = vmatprep.subr.mxu0 0.0
    %3273 = vmatpush1.msra.mxu0 0.0
    %3274 = vmatprep.subr.mxu0 0.0
    %3275 = vmatpush1.msra.mxu0 0.0
    %3276 = vmatprep.subr.mxu0 0.0
    %3277 = vmatpush1.msra.mxu0 0.0
    %3278 = vmatprep.subr.mxu0 0.0
    %3279 = vmatpush1.msra.mxu0 0.0
    %3280 = vmatprep.subr.mxu0 0.0
    %3281 = vmatpush1.msra.mxu0 0.0
    %3282 = vmatprep.subr.mxu0 0.0
    %3283 = vmatpush1.msra.mxu0 0.0
    %3284 = vmatprep.subr.mxu0 0.0
    %3285 = vmatpush1.msra.mxu0 0.0
    %3286 = vmatprep.subr.mxu0 0.0
    %3287 = vmatpush1.msra.mxu0 0.0
    %3288 = vmatprep.subr.mxu0 0.0
    %3289 = vmatpush1.msra.mxu0 0.0
    %3290 = vmatprep.subr.mxu0 0.0
    %3291 = vmatpush1.msra.mxu0 0.0
    %3292 = vmatprep.subr.mxu0 0.0
    %3293 = vmatpush1.msra.mxu0 0.0
    %3294 = vmatprep.subr.mxu0 0.0
    %3295 = vmatpush1.msra.mxu0 0.0
    %3296 = vmatprep.subr.mxu0 0.0
    %3297 = vmatpush1.msra.mxu0 0.0
    %3298 = vmatprep.subr.mxu0 0.0
    %3299 = vmatpush1.msra.mxu0 0.0
    %3300 = vmatprep.subr.mxu0 0.0
    %3301 = vmatpush1.msra.mxu0 0.0
    %3302 = vmatprep.mubr.f32.mxu0 0.0
    %3303 = vmatmul.mubr.f32.gmra.mrb[0].mxu0 %v3236
    %v3304 = vpop.f32.mrb[0].mxu0
    %v3305 = vadd.f32 0.0, %v3304
    %v3306 = vpop.f32.mrb[0].mxu0
    %3307 = vdwg.mxu0
    %3308 = vrot.lane.b32.xlu0 %v2137, 64
    %v3309 = vpop.permute.xlu0 %3308
    %v3312 = vsel %vm303, %v2850, 0
    %3314 = vmatprep.subr.mxu0 0.0
    %3315 = vmatpush1.msra.mxu0 %v3309
    %3316 = vmatprep.subr.mxu0 0.0
    %3317 = vmatpush1.msra.mxu0 0.0
    %3318 = vmatprep.subr.mxu0 0.0
    %3319 = vmatpush1.msra.mxu0 0.0
    %3320 = vmatprep.subr.mxu0 0.0
    %3321 = vmatpush1.msra.mxu0 0.0
    %3322 = vmatprep.subr.mxu0 0.0
    %3323 = vmatpush1.msra.mxu0 0.0
    %3324 = vmatprep.subr.mxu0 0.0
    %3325 = vmatpush1.msra.mxu0 0.0
    %3326 = vmatprep.subr.mxu0 0.0
    %3327 = vmatpush1.msra.mxu0 0.0
    %3328 = vmatprep.subr.mxu0 0.0
    %3329 = vmatpush1.msra.mxu0 0.0
    %3330 = vmatprep.subr.mxu0 0.0
    %3331 = vmatpush1.msra.mxu0 0.0
    %3332 = vmatprep.subr.mxu0 0.0
    %3333 = vmatpush1.msra.mxu0 0.0
    %3334 = vmatprep.subr.mxu0 0.0
    %3335 = vmatpush1.msra.mxu0 0.0
    %3336 = vmatprep.subr.mxu0 0.0
    %3337 = vmatpush1.msra.mxu0 0.0
    %3338 = vmatprep.subr.mxu0 0.0
    %3339 = vmatpush1.msra.mxu0 0.0
    %3340 = vmatprep.subr.mxu0 0.0
    %3341 = vmatpush1.msra.mxu0 0.0
    %3342 = vmatprep.subr.mxu0 0.0
    %3343 = vmatpush1.msra.mxu0 0.0
    %3344 = vmatprep.subr.mxu0 0.0
    %3345 = vmatpush1.msra.mxu0 0.0
    %3346 = vmatprep.subr.mxu0 0.0
    %3347 = vmatpush1.msra.mxu0 0.0
    %3348 = vmatprep.subr.mxu0 0.0
    %3349 = vmatpush1.msra.mxu0 0.0
    %3350 = vmatprep.subr.mxu0 0.0
    %3351 = vmatpush1.msra.mxu0 0.0
    %3352 = vmatprep.subr.mxu0 0.0
    %3353 = vmatpush1.msra.mxu0 0.0
    %3354 = vmatprep.subr.mxu0 0.0
    %3355 = vmatpush1.msra.mxu0 0.0
    %3356 = vmatprep.subr.mxu0 0.0
    %3357 = vmatpush1.msra.mxu0 0.0
    %3358 = vmatprep.subr.mxu0 0.0
    %3359 = vmatpush1.msra.mxu0 0.0
    %3360 = vmatprep.subr.mxu0 0.0
    %3361 = vmatpush1.msra.mxu0 0.0
    %3362 = vmatprep.subr.mxu0 0.0
    %3363 = vmatpush1.msra.mxu0 0.0
    %3364 = vmatprep.subr.mxu0 0.0
    %3365 = vmatpush1.msra.mxu0 0.0
    %3366 = vmatprep.subr.mxu0 0.0
    %3367 = vmatpush1.msra.mxu0 0.0
    %3368 = vmatprep.subr.mxu0 0.0
    %3369 = vmatpush1.msra.mxu0 0.0
    %3370 = vmatprep.subr.mxu0 0.0
    %3371 = vmatpush1.msra.mxu0 0.0
    %3372 = vmatprep.subr.mxu0 0.0
    %3373 = vmatpush1.msra.mxu0 0.0
    %3374 = vmatprep.subr.mxu0 0.0
    %3375 = vmatpush1.msra.mxu0 0.0
    %3376 = vmatprep.subr.mxu0 0.0
    %3377 = vmatpush1.msra.mxu0 0.0
    %3378 = vmatprep.mubr.f32.mxu0 0.0
    %3379 = vmatmul.mubr.f32.gmra.mrb[0].mxu0 %v3312
    %v3380 = vpop.f32.mrb[0].mxu0
    %v3381 = vadd.f32 0.0, %v3380
    %v3382 = vpop.f32.mrb[0].mxu0
    %3383 = vdwg.mxu0
    %3384 = vrot.lane.b32.xlu0 %v2139, 64
    %v3385 = vpop.permute.xlu0 %3384
    %v3388 = vsel %vm303, %v2851, 0
    %3390 = vmatprep.subr.mxu0 0.0
    %3391 = vmatpush1.msra.mxu0 %v3385
    %3392 = vmatprep.subr.mxu0 0.0
    %3393 = vmatpush1.msra.mxu0 0.0
    %3394 = vmatprep.subr.mxu0 0.0
    %3395 = vmatpush1.msra.mxu0 0.0
    %3396 = vmatprep.subr.mxu0 0.0
    %3397 = vmatpush1.msra.mxu0 0.0
    %3398 = vmatprep.subr.mxu0 0.0
    %3399 = vmatpush1.msra.mxu0 0.0
    %3400 = vmatprep.subr.mxu0 0.0
    %3401 = vmatpush1.msra.mxu0 0.0
    %3402 = vmatprep.subr.mxu0 0.0
    %3403 = vmatpush1.msra.mxu0 0.0
    %3404 = vmatprep.subr.mxu0 0.0
    %3405 = vmatpush1.msra.mxu0 0.0
    %3406 = vmatprep.subr.mxu0 0.0
    %3407 = vmatpush1.msra.mxu0 0.0
    %3408 = vmatprep.subr.mxu0 0.0
    %3409 = vmatpush1.msra.mxu0 0.0
    %3410 = vmatprep.subr.mxu0 0.0
    %3411 = vmatpush1.msra.mxu0 0.0
    %3412 = vmatprep.subr.mxu0 0.0
    %3413 = vmatpush1.msra.mxu0 0.0
    %3414 = vmatprep.subr.mxu0 0.0
    %3415 = vmatpush1.msra.mxu0 0.0
    %3416 = vmatprep.subr.mxu0 0.0
    %3417 = vmatpush1.msra.mxu0 0.0
    %3418 = vmatprep.subr.mxu0 0.0
    %3419 = vmatpush1.msra.mxu0 0.0
    %3420 = vmatprep.subr.mxu0 0.0
    %3421 = vmatpush1.msra.mxu0 0.0
    %3422 = vmatprep.subr.mxu0 0.0
    %3423 = vmatpush1.msra.mxu0 0.0
    %3424 = vmatprep.subr.mxu0 0.0
    %3425 = vmatpush1.msra.mxu0 0.0
    %3426 = vmatprep.subr.mxu0 0.0
    %3427 = vmatpush1.msra.mxu0 0.0
    %3428 = vmatprep.subr.mxu0 0.0
    %3429 = vmatpush1.msra.mxu0 0.0
    %3430 = vmatprep.subr.mxu0 0.0
    %3431 = vmatpush1.msra.mxu0 0.0
    %3432 = vmatprep.subr.mxu0 0.0
    %3433 = vmatpush1.msra.mxu0 0.0
    %3434 = vmatprep.subr.mxu0 0.0
    %3435 = vmatpush1.msra.mxu0 0.0
    %3436 = vmatprep.subr.mxu0 0.0
    %3437 = vmatpush1.msra.mxu0 0.0
    %3438 = vmatprep.subr.mxu0 0.0
    %3439 = vmatpush1.msra.mxu0 0.0
    %3440 = vmatprep.subr.mxu0 0.0
    %3441 = vmatpush1.msra.mxu0 0.0
    %3442 = vmatprep.subr.mxu0 0.0
    %3443 = vmatpush1.msra.mxu0 0.0
    %3444 = vmatprep.subr.mxu0 0.0
    %3445 = vmatpush1.msra.mxu0 0.0
    %3446 = vmatprep.subr.mxu0 0.0
    %3447 = vmatpush1.msra.mxu0 0.0
    %3448 = vmatprep.subr.mxu0 0.0
    %3449 = vmatpush1.msra.mxu0 0.0
    %3450 = vmatprep.subr.mxu0 0.0
    %3451 = vmatpush1.msra.mxu0 0.0
    %3452 = vmatprep.subr.mxu0 0.0
    %3453 = vmatpush1.msra.mxu0 0.0
    %3454 = vmatprep.mubr.f32.mxu0 0.0
    %3455 = vmatmul.mubr.f32.gmra.mrb[0].mxu0 %v3388
    %v3456 = vpop.f32.mrb[0].mxu0
    %v3457 = vadd.f32 0.0, %v3456
    %v3458 = vpop.f32.mrb[0].mxu0
    %3459 = vdwg.mxu0
    %3462 = vrot.lane.b32.xlu0 %v3077, 8
    %v3463 = vpop.permute.xlu0 %3462
    %3464 = vrot.lane.b32.xlu0 %v3153, 8
    %v3465 = vpop.permute.xlu0 %3464
    %3470 = vrot.lane.b32.xlu0 %v3229, 16
    %v3471 = vpop.permute.xlu0 %3470
    %3472 = vrot.lane.b32.xlu0 %v3305, 16
    %v3473 = vpop.permute.xlu0 %3472
    %3478 = vrot.lane.b32.xlu0 %v3381, 24
    %v3479 = vpop.permute.xlu0 %3478
    %3480 = vrot.lane.b32.xlu0 %v3457, 24
    %v3481 = vpop.permute.xlu0 %3480
    %v3484 = vsel %vm303, %v2925, %v3463
    %v3485 = vsel %vm303, %v3001, %v3465
    %v3486 = vsel %vm1660, %v3484, %v3471
    %v3487 = vsel %vm1660, %v3485, %v3473
    %v3488 = vsel %vm1663, %v3486, %v3479
    %v3489 = vsel %vm1663, %v3487, %v3481
    %s3490 = scalar_lea.vmem %s6, 32
    %v3491 = vld [vmem:[%s3490] sm:$0xff]
    %v3492 = vld [vmem:[%s3490 + $0x8] sm:$0xff]
    %v3493 = vld [vmem:[%s3490 + $0x10] sm:$0xff]
    %v3494 = vld [vmem:[%s3490 + $0x18] sm:$0xff]
    %v3495 = vlaneseq
    %v3496 = vshrl.u32 %v3495, 7
    %v3497 = vsub.s32 4, %v3496
    %v3498 = vrot.slane %v37, %v3497
    %v3500 = vsel %vm150, %v3488, 0
    %v3503 = vsel %vm150, %v3489, 0
    %3505 = vmatprep.subr.mxu0 0.0
    %3506 = vmatpush1.msra.mxu0 %v3491
    %3507 = vmatprep.subr.mxu0 0.0
    %3508 = vmatpush1.msra.mxu0 %v3492
    %3509 = vmatprep.subr.mxu0 0.0
    %3510 = vmatpush1.msra.mxu0 %v3493
    %3511 = vmatprep.subr.mxu0 0.0
    %3512 = vmatpush1.msra.mxu0 %v3494
    %3513 = vmatprep.subr.mxu0 0.0
    %3514 = vmatpush1.msra.mxu0 0.0
    %3515 = vmatprep.subr.mxu0 0.0
    %3516 = vmatpush1.msra.mxu0 0.0
    %3517 = vmatprep.subr.mxu0 0.0
    %3518 = vmatpush1.msra.mxu0 0.0
    %3519 = vmatprep.subr.mxu0 0.0
    %3520 = vmatpush1.msra.mxu0 0.0
    %3521 = vmatprep.subr.mxu0 0.0
    %3522 = vmatpush1.msra.mxu0 0.0
    %3523 = vmatprep.subr.mxu0 0.0
    %3524 = vmatpush1.msra.mxu0 0.0
    %3525 = vmatprep.subr.mxu0 0.0
    %3526 = vmatpush1.msra.mxu0 0.0
    %3527 = vmatprep.subr.mxu0 0.0
    %3528 = vmatpush1.msra.mxu0 0.0
    %3529 = vmatprep.subr.mxu0 0.0
    %3530 = vmatpush1.msra.mxu0 0.0
    %3531 = vmatprep.subr.mxu0 0.0
    %3532 = vmatpush1.msra.mxu0 0.0
    %3533 = vmatprep.subr.mxu0 0.0
    %3534 = vmatpush1.msra.mxu0 0.0
    %3535 = vmatprep.subr.mxu0 0.0
    %3536 = vmatpush1.msra.mxu0 0.0
    %3537 = vmatprep.subr.mxu0 0.0
    %3538 = vmatpush1.msra.mxu0 0.0
    %3539 = vmatprep.subr.mxu0 0.0
    %3540 = vmatpush1.msra.mxu0 0.0
    %3541 = vmatprep.subr.mxu0 0.0
    %3542 = vmatpush1.msra.mxu0 0.0
    %3543 = vmatprep.subr.mxu0 0.0
    %3544 = vmatpush1.msra.mxu0 0.0
    %3545 = vmatprep.subr.mxu0 0.0
    %3546 = vmatpush1.msra.mxu0 0.0
    %3547 = vmatprep.subr.mxu0 0.0
    %3548 = vmatpush1.msra.mxu0 0.0
    %3549 = vmatprep.subr.mxu0 0.0
    %3550 = vmatpush1.msra.mxu0 0.0
    %3551 = vmatprep.subr.mxu0 0.0
    %3552 = vmatpush1.msra.mxu0 0.0
    %3553 = vmatprep.subr.mxu0 0.0
    %3554 = vmatpush1.msra.mxu0 0.0
    %3555 = vmatprep.subr.mxu0 0.0
    %3556 = vmatpush1.msra.mxu0 0.0
    %3557 = vmatprep.subr.mxu0 0.0
    %3558 = vmatpush1.msra.mxu0 0.0
    %3559 = vmatprep.subr.mxu0 0.0
    %3560 = vmatpush1.msra.mxu0 0.0
    %3561 = vmatprep.subr.mxu0 0.0
    %3562 = vmatpush1.msra.mxu0 0.0
    %3563 = vmatprep.subr.mxu0 0.0
    %3564 = vmatpush1.msra.mxu0 0.0
    %3565 = vmatprep.subr.mxu0 0.0
    %3566 = vmatpush1.msra.mxu0 0.0
    %3567 = vmatprep.subr.mxu0 0.0
    %3568 = vmatpush1.msra.mxu0 0.0
    %3569 = vmatprep.mubr.f32.mxu0 0.0
    %3570 = vmatmul.mubr.f32.gmra.mrb[0].mxu0 %v3500
    %v3571 = vpop.f32.mrb[0].mxu0
    %v3572 = vadd.f32 %v3498, %v3571
    %v3573 = vpop.f32.mrb[0].mxu0
    %3574 = vmatprep.mubr.f32.mxu0 0.0
    %3575 = vmatmul.mubr.f32.gmra.mrb[0].mxu0 %v3503
    %v3576 = vpop.f32.mrb[0].mxu0
    %v3577 = vadd.f32 %v3498, %v3576
    %v3578 = vpop.f32.mrb[0].mxu0
    %3579 = vdwg.mxu0
    %v3580 = vadd.f32 %v2034, %v3572
    %v3581 = vadd.f32 %v2035, %v3577
    %v3582 = vsel %vm150, %v3580, 0.0
    %3583 = vadd.xlane.f32.xlu0 %v3582
    %v3584 = vpop.xlane.xlu0 %3583
    %v3585 = vsel %vm150, %v3581, 0.0
    %3586 = vadd.xlane.f32.xlu0 %v3585
    %v3587 = vpop.xlane.xlu0 %3586
    %v3588 = vmul.f32 %v3584, %v157
    %v3589 = vmul.f32 %v3587, %v157
    %v3590 = vsub.f32 %v3580, %v3588
    %v3591 = vsub.f32 %v3581, %v3589
    %v3592 = vmul.f32 %v3590, %v3590
    %v3593 = vmul.f32 %v3591, %v3591
    %v3594 = vsel %vm150, %v3592, 0.0
    %3595 = vadd.xlane.f32.xlu0 %v3594
    %v3596 = vpop.xlane.xlu0 %3595
    %v3597 = vsel %vm150, %v3593, 0.0
    %3598 = vadd.xlane.f32.xlu0 %v3597
    %v3599 = vpop.xlane.xlu0 %3598
    %v3600 = vmul.f32 %v3596, %v157
    %v3601 = vmul.f32 %v3599, %v157
    %v3602 = vadd.f32 %v3600, 1e-12
    %v3603 = vadd.f32 %v3601, 1e-12
    %v3604 = vrsqrt.pop %v3602
    %v3605 = vrsqrt.pop %v3603
    %v3606 = vmul.f32 %v3590, %v3604
    %v3607 = vmul.f32 %v3591, %v3605
    %v3608 = vlaneseq
    %v3609 = vshrl.u32 %v3608, 7
    %v3610 = vsub.s32 5, %v3609
    %v3611 = vrot.slane %v37, %v3610
    %v3612 = vmul.f32 %v3606, %v3611
    %v3613 = vmul.f32 %v3607, %v3611
    %v3614 = vlaneseq
    %v3615 = vshrl.u32 %v3614, 7
    %v3616 = vsub.s32 6, %v3615
    %v3617 = vrot.slane %v37, %v3616
    %v3618 = vadd.f32 %v3612, %v3617
    %v3619 = vadd.f32 %v3613, %v3617
    %s3620 = scalar_lea.vmem %s7, 32
    %v3621 = vld [vmem:[%s3620] sm:$0xff]
    %v3622 = vld [vmem:[%s3620 + $0x8] sm:$0xff]
    %v3623 = vld [vmem:[%s3620 + $0x10] sm:$0xff]
    %v3624 = vld [vmem:[%s3620 + $0x18] sm:$0xff]
    %v3625 = vlaneseq
    %v3626 = vshrl.u32 %v3625, 7
    %v3627 = vsub.s32 7, %v3626
    %v3628 = vrot.slane %v37, %v3627
    %v3630 = vsel %vm150, %v3618, 0
    %v3633 = vsel %vm150, %v3619, 0
    %3635 = vmatprep.subr.mxu0 0.0
    %3636 = vmatpush1.msra.mxu0 %v3621
    %3637 = vmatprep.subr.mxu0 0.0
    %3638 = vmatpush1.msra.mxu0 %v3622
    %3639 = vmatprep.subr.mxu0 0.0
    %3640 = vmatpush1.msra.mxu0 %v3623
    %3641 = vmatprep.subr.mxu0 0.0
    %3642 = vmatpush1.msra.mxu0 %v3624
    %3643 = vmatprep.subr.mxu0 0.0
    %3644 = vmatpush1.msra.mxu0 0.0
    %3645 = vmatprep.subr.mxu0 0.0
    %3646 = vmatpush1.msra.mxu0 0.0
    %3647 = vmatprep.subr.mxu0 0.0
    %3648 = vmatpush1.msra.mxu0 0.0
    %3649 = vmatprep.subr.mxu0 0.0
    %3650 = vmatpush1.msra.mxu0 0.0
    %3651 = vmatprep.subr.mxu0 0.0
    %3652 = vmatpush1.msra.mxu0 0.0
    %3653 = vmatprep.subr.mxu0 0.0
    %3654 = vmatpush1.msra.mxu0 0.0
    %3655 = vmatprep.subr.mxu0 0.0
    %3656 = vmatpush1.msra.mxu0 0.0
    %3657 = vmatprep.subr.mxu0 0.0
    %3658 = vmatpush1.msra.mxu0 0.0
    %3659 = vmatprep.subr.mxu0 0.0
    %3660 = vmatpush1.msra.mxu0 0.0
    %3661 = vmatprep.subr.mxu0 0.0
    %3662 = vmatpush1.msra.mxu0 0.0
    %3663 = vmatprep.subr.mxu0 0.0
    %3664 = vmatpush1.msra.mxu0 0.0
    %3665 = vmatprep.subr.mxu0 0.0
    %3666 = vmatpush1.msra.mxu0 0.0
    %3667 = vmatprep.subr.mxu0 0.0
    %3668 = vmatpush1.msra.mxu0 0.0
    %3669 = vmatprep.subr.mxu0 0.0
    %3670 = vmatpush1.msra.mxu0 0.0
    %3671 = vmatprep.subr.mxu0 0.0
    %3672 = vmatpush1.msra.mxu0 0.0
    %3673 = vmatprep.subr.mxu0 0.0
    %3674 = vmatpush1.msra.mxu0 0.0
    %3675 = vmatprep.subr.mxu0 0.0
    %3676 = vmatpush1.msra.mxu0 0.0
    %3677 = vmatprep.subr.mxu0 0.0
    %3678 = vmatpush1.msra.mxu0 0.0
    %3679 = vmatprep.subr.mxu0 0.0
    %3680 = vmatpush1.msra.mxu0 0.0
    %3681 = vmatprep.subr.mxu0 0.0
    %3682 = vmatpush1.msra.mxu0 0.0
    %3683 = vmatprep.subr.mxu0 0.0
    %3684 = vmatpush1.msra.mxu0 0.0
    %3685 = vmatprep.subr.mxu0 0.0
    %3686 = vmatpush1.msra.mxu0 0.0
    %3687 = vmatprep.subr.mxu0 0.0
    %3688 = vmatpush1.msra.mxu0 0.0
    %3689 = vmatprep.subr.mxu0 0.0
    %3690 = vmatpush1.msra.mxu0 0.0
    %3691 = vmatprep.subr.mxu0 0.0
    %3692 = vmatpush1.msra.mxu0 0.0
    %3693 = vmatprep.subr.mxu0 0.0
    %3694 = vmatpush1.msra.mxu0 0.0
    %3695 = vmatprep.subr.mxu0 0.0
    %3696 = vmatpush1.msra.mxu0 0.0
    %3697 = vmatprep.subr.mxu0 0.0
    %3698 = vmatpush1.msra.mxu0 0.0
    %3699 = vmatprep.mubr.f32.mxu0 0.0
    %3700 = vmatmul.mubr.f32.gmra.mrb[0].mxu0 %v3630
    %v3701 = vpop.f32.mrb[0].mxu0
    %v3702 = vadd.f32 %v3628, %v3701
    %v3703 = vpop.f32.mrb[0].mxu0
    %3704 = vmatprep.mubr.f32.mxu0 0.0
    %3705 = vmatmul.mubr.f32.gmra.mrb[0].mxu0 %v3633
    %v3706 = vpop.f32.mrb[0].mxu0
    %v3707 = vadd.f32 %v3628, %v3706
    %v3708 = vpop.f32.mrb[0].mxu0
    %3709 = vdwg.mxu0
    %v3710 = vmul.f32 %v3702, 0.5
    %v3711 = vmul.f32 %v3707, 0.5
    %v3712 = vmul.f32 %v3702, 0.044715
    %v3713 = vmul.f32 %v3707, 0.044715
    %v3714 = vmul.f32 %v3712, %v3702
    %v3715 = vmul.f32 %v3713, %v3707
    %v3716 = vmul.f32 %v3714, %v3702
    %v3717 = vmul.f32 %v3715, %v3707
    %v3718 = vadd.f32 %v3702, %v3716
    %v3719 = vadd.f32 %v3707, %v3717
    %v3720 = vmul.f32 %v3718, 0.7978846
    %v3721 = vmul.f32 %v3719, 0.7978846
    %v3722 = vtanh.pop %v3720
    %v3723 = vtanh.pop %v3721
    %v3724 = vadd.f32 %v3722, 1.0
    %v3725 = vadd.f32 %v3723, 1.0
    %v3726 = vmul.f32 %v3710, %v3724
    %v3727 = vmul.f32 %v3711, %v3725
    %s3728 = scalar_lea.vmem %s8, 64
    %v3729 = vld [vmem:[%s3728] sm:$0xff]
    %v3730 = vld [vmem:[%s3728 + $0x8] sm:$0xff]
    %v3731 = vld [vmem:[%s3728 + $0x10] sm:$0xff]
    %v3732 = vld [vmem:[%s3728 + $0x18] sm:$0xff]
    %v3733 = vld [vmem:[%s3728 + $0x20] sm:$0xff]
    %v3734 = vld [vmem:[%s3728 + $0x28] sm:$0xff]
    %v3735 = vld [vmem:[%s3728 + $0x30] sm:$0xff]
    %v3736 = vld [vmem:[%s3728 + $0x38] sm:$0xff]
    %v3737 = vlaneseq
    %v3738 = vshrl.u32 %v3737, 7
    %v3739 = vsub.s32 0, %v3738
    %v3740 = vrot.slane %v38, %v3739
    %v3742 = vsel %vm1914, %v3726, 0
    %v3745 = vsel %vm1914, %v3727, 0
    %3747 = vmatprep.subr.mxu0 0.0
    %3748 = vmatpush1.msra.mxu0 %v3729
    %3749 = vmatprep.subr.mxu0 0.0
    %3750 = vmatpush1.msra.mxu0 %v3730
    %3751 = vmatprep.subr.mxu0 0.0
    %3752 = vmatpush1.msra.mxu0 %v3731
    %3753 = vmatprep.subr.mxu0 0.0
    %3754 = vmatpush1.msra.mxu0 %v3732
    %3755 = vmatprep.subr.mxu0 0.0
    %3756 = vmatpush1.msra.mxu0 %v3733
    %3757 = vmatprep.subr.mxu0 0.0
    %3758 = vmatpush1.msra.mxu0 %v3734
    %3759 = vmatprep.subr.mxu0 0.0
    %3760 = vmatpush1.msra.mxu0 %v3735
    %3761 = vmatprep.subr.mxu0 0.0
    %3762 = vmatpush1.msra.mxu0 %v3736
    %3763 = vmatprep.subr.mxu0 0.0
    %3764 = vmatpush1.msra.mxu0 0.0
    %3765 = vmatprep.subr.mxu0 0.0
    %3766 = vmatpush1.msra.mxu0 0.0
    %3767 = vmatprep.subr.mxu0 0.0
    %3768 = vmatpush1.msra.mxu0 0.0
    %3769 = vmatprep.subr.mxu0 0.0
    %3770 = vmatpush1.msra.mxu0 0.0
    %3771 = vmatprep.subr.mxu0 0.0
    %3772 = vmatpush1.msra.mxu0 0.0
    %3773 = vmatprep.subr.mxu0 0.0
    %3774 = vmatpush1.msra.mxu0 0.0
    %3775 = vmatprep.subr.mxu0 0.0
    %3776 = vmatpush1.msra.mxu0 0.0
    %3777 = vmatprep.subr.mxu0 0.0
    %3778 = vmatpush1.msra.mxu0 0.0
    %3779 = vmatprep.subr.mxu0 0.0
    %3780 = vmatpush1.msra.mxu0 0.0
    %3781 = vmatprep.subr.mxu0 0.0
    %3782 = vmatpush1.msra.mxu0 0.0
    %3783 = vmatprep.subr.mxu0 0.0
    %3784 = vmatpush1.msra.mxu0 0.0
    %3785 = vmatprep.subr.mxu0 0.0
    %3786 = vmatpush1.msra.mxu0 0.0
    %3787 = vmatprep.subr.mxu0 0.0
    %3788 = vmatpush1.msra.mxu0 0.0
    %3789 = vmatprep.subr.mxu0 0.0
    %3790 = vmatpush1.msra.mxu0 0.0
    %3791 = vmatprep.subr.mxu0 0.0
    %3792 = vmatpush1.msra.mxu0 0.0
    %3793 = vmatprep.subr.mxu0 0.0
    %3794 = vmatpush1.msra.mxu0 0.0
    %3795 = vmatprep.subr.mxu0 0.0
    %3796 = vmatpush1.msra.mxu0 0.0
    %3797 = vmatprep.subr.mxu0 0.0
    %3798 = vmatpush1.msra.mxu0 0.0
    %3799 = vmatprep.subr.mxu0 0.0
    %3800 = vmatpush1.msra.mxu0 0.0
    %3801 = vmatprep.subr.mxu0 0.0
    %3802 = vmatpush1.msra.mxu0 0.0
    %3803 = vmatprep.subr.mxu0 0.0
    %3804 = vmatpush1.msra.mxu0 0.0
    %3805 = vmatprep.subr.mxu0 0.0
    %3806 = vmatpush1.msra.mxu0 0.0
    %3807 = vmatprep.subr.mxu0 0.0
    %3808 = vmatpush1.msra.mxu0 0.0
    %3809 = vmatprep.subr.mxu0 0.0
    %3810 = vmatpush1.msra.mxu0 0.0
    %3811 = vmatprep.mubr.f32.mxu0 0.0
    %3812 = vmatmul.mubr.f32.gmra.mrb[0].mxu0 %v3742
    %v3813 = vpop.f32.mrb[0].mxu0
    %v3814 = vadd.f32 %v3740, %v3813
    %v3815 = vpop.f32.mrb[0].mxu0
    %3816 = vmatprep.mubr.f32.mxu0 0.0
    %3817 = vmatmul.mubr.f32.gmra.mrb[0].mxu0 %v3745
    %v3818 = vpop.f32.mrb[0].mxu0
    %v3819 = vadd.f32 %v3740, %v3818
    %v3820 = vpop.f32.mrb[0].mxu0
    %3821 = vdwg.mxu0
    %v3822 = vadd.f32 %v3618, %v3814
    %v3823 = vadd.f32 %v3619, %v3819
    %v3824 = vsel %vm150, %v3822, 0.0
    %3825 = vadd.xlane.f32.xlu0 %v3824
    %v3826 = vpop.xlane.xlu0 %3825
    %v3827 = vsel %vm150, %v3823, 0.0
    %3828 = vadd.xlane.f32.xlu0 %v3827
    %v3829 = vpop.xlane.xlu0 %3828
    %v3830 = vmul.f32 %v3826, %v157
    %v3831 = vmul.f32 %v3829, %v157
    %v3832 = vsub.f32 %v3822, %v3830
    %v3833 = vsub.f32 %v3823, %v3831
    %v3834 = vmul.f32 %v3832, %v3832
    %v3835 = vmul.f32 %v3833, %v3833
    %v3836 = vsel %vm150, %v3834, 0.0
    %3837 = vadd.xlane.f32.xlu0 %v3836
    %v3838 = vpop.xlane.xlu0 %3837
    %v3839 = vsel %vm150, %v3835, 0.0
    %3840 = vadd.xlane.f32.xlu0 %v3839
    %v3841 = vpop.xlane.xlu0 %3840
    %v3842 = vmul.f32 %v3838, %v157
    %v3843 = vmul.f32 %v3841, %v157
    %v3844 = vadd.f32 %v3842, 1e-12
    %v3845 = vadd.f32 %v3843, 1e-12
    %v3846 = vrsqrt.pop %v3844
    %v3847 = vrsqrt.pop %v3845
    %v3848 = vmul.f32 %v3832, %v3846
    %v3849 = vmul.f32 %v3833, %v3847
    %v3850 = vlaneseq
    %v3851 = vshrl.u32 %v3850, 7
    %v3852 = vsub.s32 1, %v3851
    %v3853 = vrot.slane %v38, %v3852
    %v3854 = vmul.f32 %v3848, %v3853
    %v3855 = vmul.f32 %v3849, %v3853
    %v3856 = vlaneseq
    %v3857 = vshrl.u32 %v3856, 7
    %v3858 = vsub.s32 2, %v3857
    %v3859 = vrot.slane %v38, %v3858
    %v3860 = vadd.f32 %v3854, %v3859
    %v3861 = vadd.f32 %v3855, %v3859
    %v3862 = vmax.f32 %v3860, 0.0
    %v3863 = vmax.f32 %v3861, 0.0
    %v3864 = vld [vmem:[%s9] sm:$0xff]
    %v3865 = vld [vmem:[%s9 + $0x8] sm:$0xff]
    %v3866 = vld [vmem:[%s9 + $0x10] sm:$0xff]
    %v3867 = vld [vmem:[%s9 + $0x18] sm:$0xff]
    %v3868 = vlaneseq
    %v3869 = vshrl.u32 %v3868, 7
    %v3870 = vsub.s32 2, %v3869
    %v3871 = vrot.slane %v36, %v3870
    %v3874 = vrot.slane %v3863, 7
    %vm3875 = vcmask 1041409
    %v3876 = vsel %vm3875, %v3874, %v3862
    %v3877 = vsel %vm150, %v3876, 0
    %3879 = vmatprep.subr.mxu0 0.0
    %3880 = vmatpush1.msra.mxu0 %v3864
    %3881 = vmatprep.subr.mxu0 0.0
    %3882 = vmatpush1.msra.mxu0 %v3865
    %3883 = vmatprep.subr.mxu0 0.0
    %3884 = vmatpush1.msra.mxu0 %v3866
    %3885 = vmatprep.subr.mxu0 0.0
    %3886 = vmatpush1.msra.mxu0 %v3867
    %3887 = vmatprep.subr.mxu0 0.0
    %3888 = vmatpush1.msra.mxu0 0.0
    %3889 = vmatprep.subr.mxu0 0.0
    %3890 = vmatpush1.msra.mxu0 0.0
    %3891 = vmatprep.subr.mxu0 0.0
    %3892 = vmatpush1.msra.mxu0 0.0
    %3893 = vmatprep.subr.mxu0 0.0
    %3894 = vmatpush1.msra.mxu0 0.0
    %3895 = vmatprep.subr.mxu0 0.0
    %3896 = vmatpush1.msra.mxu0 0.0
    %3897 = vmatprep.subr.mxu0 0.0
    %3898 = vmatpush1.msra.mxu0 0.0
    %3899 = vmatprep.subr.mxu0 0.0
    %3900 = vmatpush1.msra.mxu0 0.0
    %3901 = vmatprep.subr.mxu0 0.0
    %3902 = vmatpush1.msra.mxu0 0.0
    %3903 = vmatprep.subr.mxu0 0.0
    %3904 = vmatpush1.msra.mxu0 0.0
    %3905 = vmatprep.subr.mxu0 0.0
    %3906 = vmatpush1.msra.mxu0 0.0
    %3907 = vmatprep.subr.mxu0 0.0
    %3908 = vmatpush1.msra.mxu0 0.0
    %3909 = vmatprep.subr.mxu0 0.0
    %3910 = vmatpush1.msra.mxu0 0.0
    %3911 = vmatprep.subr.mxu0 0.0
    %3912 = vmatpush1.msra.mxu0 0.0
    %3913 = vmatprep.subr.mxu0 0.0
    %3914 = vmatpush1.msra.mxu0 0.0
    %3915 = vmatprep.subr.mxu0 0.0
    %3916 = vmatpush1.msra.mxu0 0.0
    %3917 = vmatprep.subr.mxu0 0.0
    %3918 = vmatpush1.msra.mxu0 0.0
    %3919 = vmatprep.subr.mxu0 0.0
    %3920 = vmatpush1.msra.mxu0 0.0
    %3921 = vmatprep.subr.mxu0 0.0
    %3922 = vmatpush1.msra.mxu0 0.0
    %3923 = vmatprep.subr.mxu0 0.0
    %3924 = vmatpush1.msra.mxu0 0.0
    %3925 = vmatprep.subr.mxu0 0.0
    %3926 = vmatpush1.msra.mxu0 0.0
    %3927 = vmatprep.subr.mxu0 0.0
    %3928 = vmatpush1.msra.mxu0 0.0
    %3929 = vmatprep.subr.mxu0 0.0
    %3930 = vmatpush1.msra.mxu0 0.0
    %3931 = vmatprep.subr.mxu0 0.0
    %3932 = vmatpush1.msra.mxu0 0.0
    %3933 = vmatprep.subr.mxu0 0.0
    %3934 = vmatpush1.msra.mxu0 0.0
    %3935 = vmatprep.subr.mxu0 0.0
    %3936 = vmatpush1.msra.mxu0 0.0
    %3937 = vmatprep.subr.mxu0 0.0
    %3938 = vmatpush1.msra.mxu0 0.0
    %3939 = vmatprep.subr.mxu0 0.0
    %3940 = vmatpush1.msra.mxu0 0.0
    %3941 = vmatprep.subr.mxu0 0.0
    %3942 = vmatpush1.msra.mxu0 0.0
    %3943 = vmatprep.mubr.f32.mxu0 0.0
    %3944 = vmatmul.mubr.f32.gmra.mrb[0].mxu0 %v3877
    %v3945 = vpop.f32.mrb[0].mxu0
    %v3946 = vadd.f32 %v3871, %v3945
    %v3947 = vpop.f32.mrb[0].mxu0
    %3948 = vdwg.mxu0
    %vm3949 = vcmask 17408
    %3950 = vst.msk [vmem:[#allocation2] sm:$0x3] %vm3949, %v3946
    // Predicated region
    $region42: #{tpu_custom_call.1} parent=1 // pred_check
      _
    $region43: #{tpu_custom_call.1} parent=1 // pred_check_branch
      %3952 = sbr.rel (0) target = $region45
    $region44: #{tpu_custom_call.1} parent=1 // pred_region
      %s3954 = ssub.s32 32, 32
      %3955 = vsyncadd [#allocation3], %s3954
      %s3957 = sshll.u32 [#allocation2], 4
      %s3958 = int_to_ptr.vmem [resolvable:$true] %s3957
      %3960 = dma.vmem_to_hbm [thread:$0]  %s3958, 32, %s10, [#allocation3]
    $region45: #{tpu_custom_call.1} parent=1 // pred_fallthru
      _
    // Predicated region
    $region46: #{tpu_custom_call.1} parent=1 // pred_check
      _
    $region47: #{tpu_custom_call.1} parent=1 // pred_check_branch
      %3962 = sbr.rel (0) target = $region49
    $region48: #{tpu_custom_call.1} parent=1 // pred_region
      %3963 = dma.done [#allocation3], 32
    $region49: #{tpu_custom_call.1} parent=1 // pred_fallthru
      _
    %3964 = vsyncpa [#allocation3], 1

</llo_original>
